<compile_context>
chip_gen: v5e
topology: v5e:2x2
jax: 0.10.0
libtpu: 0.0.40
codegen_flags: <defaults>
</compile_context>

<pallas_src>
import functools

import jax
import jax.numpy as jnp
from jax.experimental import pallas as pl
from jax.experimental.pallas import tpu as pltpu


# ----------------------------------------------------------------------------
# In-kernel helpers (traced inside Pallas kernel bodies)
# ----------------------------------------------------------------------------
def _ln(x, g, b):
    """LayerNorm over the last dim; x f32 (T,D), g/b f32 (1,D)."""
    mu = jnp.mean(x, axis=-1, keepdims=True)
    var = jnp.mean(jnp.square(x - mu), axis=-1, keepdims=True)
    return (x - mu) * jax.lax.rsqrt(var + 1e-5) * g + b


def _attn_core(x, kbias, ln_g, ln_b, w_qkv, w_o, b_o, *, heads, dh, scale):
    """Pre-LN multi-head self-attention for one batch element.

    x: (T, D) f32;  kbias: (1, T) f32 additive key bias (0 / -1e9) or None
    w_qkv: (D, 3D) bf16;  w_o: (D, D) bf16;  b_o: (1, D) f32
    Returns the (T, D) f32 attention output (out-proj + bias, no residual).
    """
    T, D = x.shape
    h_ln = _ln(x, ln_g, ln_b)
    qkv = jnp.dot(h_ln.astype(jnp.bfloat16), w_qkv,
                  preferred_element_type=jnp.float32)            # (T, 3D) f32

    # Fold the softmax scale into q (T*D muls, not H*T*T); single bf16 cast.
    q_all = (qkv[:, 0 * D:1 * D] * scale).astype(jnp.bfloat16)   # (T, D)
    k_all = qkv[:, 1 * D:2 * D].astype(jnp.bfloat16)             # (T, D)
    v_all = qkv[:, 2 * D:3 * D].astype(jnp.bfloat16)             # (T, D)

    acc = None
    for h in range(heads):                                       # short, unrolled
        sl = slice(h * dh, (h + 1) * dh)
        q = q_all[:, sl]                                         # (T, dh)
        k = k_all[:, sl]
        v = v_all[:, sl]

        # q @ k^T without an explicit transpose (contract last dims).
        s = jax.lax.dot_general(
            q, k, (((1,), (1,)), ((), ())),
            preferred_element_type=jnp.float32)                  # (T, T) f32
        if kbias is not None:
            s = s + kbias                                        # masked keys -> -1e9
        s = s - jnp.max(s, axis=-1, keepdims=True)
        p = jnp.exp(s)
        p = p * pl.reciprocal(jnp.sum(p, axis=-1, keepdims=True), approx=True)

        o_h = jnp.dot(p.astype(jnp.bfloat16), v,
                      preferred_element_type=jnp.float32)        # (T, dh)
        # concat-over-heads @ W_o  ==  sum_h  o_h @ W_o[h*dh:(h+1)*dh, :]
        contrib = jnp.dot(o_h.astype(jnp.bfloat16),
                          w_o[h * dh:(h + 1) * dh, :],
                          preferred_element_type=jnp.float32)    # (T, D)
        acc = contrib if acc is None else acc + contrib
    return acc + b_o


# ----------------------------------------------------------------------------
# Pallas kernels
# ----------------------------------------------------------------------------
def _speech_block_kernel(x_ref, m_ref, ln1_g, ln1_b, w_qkv, w_o, b_o,
                         ln2_g, ln2_b, w1, b1, w2, b2, o_ref,
                         *, heads, dh, scale):
    """One full transformer block (attn + FFN) for one batch element."""
    x = x_ref[0]                                   # (T, D) f32
    mask_row = m_ref[0]                            # (1, T) f32 in {0, 1}
    kbias = (mask_row - 1.0) * 1e9                 # 0 (valid) / -1e9 (masked)
    x = x + _attn_core(x, kbias, ln1_g[...], ln1_b[...], w_qkv[...],
                       w_o[...], b_o[...], heads=heads, dh=dh, scale=scale)
    hh = _ln(x, ln2_g[...], ln2_b[...])
    hh = jnp.dot(hh.astype(jnp.bfloat16), w1[...],
                 preferred_element_type=jnp.float32) + b1[...]
    # TODO(synk): tanh-GELU used; PyTorch default GELU is exact erf.
    hh = jax.nn.gelu(hh, approximate=True)
    y = jnp.dot(hh.astype(jnp.bfloat16), w2[...],
                preferred_element_type=jnp.float32) + b2[...]
    o_ref[0] = x + y


def _cond_block_kernel(x_ref, ln_g, ln_b, w_qkv, w_o, b_o, o_ref,
                       *, heads, dh, scale):
    """Pre-LN MHA + residual (no FFN, no mask) for one batch element."""
    x = x_ref[0]                                   # (L, D) f32
    o_ref[0] = x + _attn_core(x, None, ln_g[...], ln_b[...], w_qkv[...],
                              w_o[...], b_o[...], heads=heads, dh=dh,
                              scale=scale)


def _linear_bias_kernel(x_ref, w_ref, b_ref, o_ref):
    o_ref[...] = (
        jnp.dot(x_ref[...], w_ref[...], preferred_element_type=jnp.float32)
        + b_ref[...]
    )


def _clip_head_kernel(enc_ref, m_ref, cond_ref, w_ref, t_ref, o_ref):
    """masked_mean -> to_speech_latent -> L2 normalize both -> dot * exp(T)."""
    enc = enc_ref[...]                              # (B, T, D) f32
    m = m_ref[...]                                  # (B, T)    f32
    num = jnp.sum(enc * m[:, :, None], axis=1)      # (B, D)
    den = jnp.sum(m, axis=1, keepdims=True)         # (B, 1)
    sp = num / den
    sp = jnp.dot(sp.astype(jnp.bfloat16), w_ref[...],
                 preferred_element_type=jnp.float32)            # (B, Dl)
    cond = cond_ref[...]                                        # (B, Dl)
    spn = sp * jax.lax.rsqrt(
        jnp.maximum(jnp.sum(sp * sp, axis=-1, keepdims=True), 1e-24))
    cn = cond * jax.lax.rsqrt(
        jnp.maximum(jnp.sum(cond * cond, axis=-1, keepdims=True), 1e-24))
    temp = jnp.exp(t_ref[...])                                  # (1, 1)
    o_ref[...] = jnp.sum(cn * spn, axis=-1, keepdims=True) * temp


# ----------------------------------------------------------------------------
# pallas_call wrappers
# ----------------------------------------------------------------------------
_VMEM_LIMIT = 32 * 1024 * 1024  # safe on v5e/v6e/v7x


def _const_spec(a):
    """Full-array (weight) block, resident across the batch grid."""
    return pl.BlockSpec(a.shape, lambda b: (0,) * a.ndim)


def speech_block(x, mask3, p, heads):
    """x: (B,T,D) f32, mask3: (B,1,T) f32 -> (B,T,D) f32."""
    B, T, D = x.shape
    dh = D // heads
    kernel = functools.partial(_speech_block_kernel,
                               heads=heads, dh=dh, scale=dh ** -0.5)
    return pl.pallas_call(
        kernel,
        out_shape=jax.ShapeDtypeStruct((B, T, D), jnp.float32),
        grid=(B,),
        in_specs=[
            pl.BlockSpec((1, T, D), lambda b: (b, 0, 0)),
            pl.BlockSpec((1, 1, T), lambda b: (b, 0, 0)),
            _const_spec(p["ln1_g"]), _const_spec(p["ln1_b"]),
            _const_spec(p["w_qkv"]), _const_spec(p["w_o"]),
            _const_spec(p["b_o"]),
            _const_spec(p["ln2_g"]), _const_spec(p["ln2_b"]),
            _const_spec(p["w1"]), _const_spec(p["b1"]),
            _const_spec(p["w2"]), _const_spec(p["b2"]),
        ],
        out_specs=pl.BlockSpec((1, T, D), lambda b: (b, 0, 0)),
        compiler_params=pltpu.CompilerParams(
            dimension_semantics=("parallel",),
            vmem_limit_bytes=_VMEM_LIMIT),
    )(x, mask3, p["ln1_g"], p["ln1_b"], p["w_qkv"], p["w_o"], p["b_o"],
      p["ln2_g"], p["ln2_b"], p["w1"], p["b1"], p["w2"], p["b2"])


def cond_block(x, p, heads):
    """x: (B,L,D) f32 -> (B,L,D) f32 (unmasked pre-LN MHA + residual)."""
    B, L, D = x.shape
    dh = D // heads
    kernel = functools.partial(_cond_block_kernel,
                               heads=heads, dh=dh, scale=dh ** -0.5)
    return pl.pallas_call(
        kernel,
        out_shape=jax.ShapeDtypeStruct((B, L, D), jnp.float32),
        grid=(B,),
        in_specs=[
            pl.BlockSpec((1, L, D), lambda b: (b, 0, 0)),
            _const_spec(p["ln_g"]), _const_spec(p["ln_b"]),
            _const_spec(p["w_qkv"]), _const_spec(p["w_o"]),
            _const_spec(p["b_o"]),
        ],
        out_specs=pl.BlockSpec((1, L, D), lambda b: (b, 0, 0)),
        compiler_params=pltpu.CompilerParams(
            dimension_semantics=("parallel",),
            vmem_limit_bytes=_VMEM_LIMIT),
    )(x, p["ln_g"], p["ln_b"], p["w_qkv"], p["w_o"], p["b_o"])


def pallas_linear(x_bf16, w_bf16, b_f32):
    """x:(M,K) bf16 @ w:(K,N) bf16 + b:(1,N) f32 -> (M,N) f32 (row-tiled)."""
    M, K = x_bf16.shape
    N = w_bf16.shape[1]
    tm = M if M <= 256 else 256
    return pl.pallas_call(
        _linear_bias_kernel,
        out_shape=jax.ShapeDtypeStruct((M, N), jnp.float32),
        grid=(pl.cdiv(M, tm),),
        in_specs=[
            pl.BlockSpec((tm, K), lambda i: (i, 0)),
            pl.BlockSpec((K, N), lambda i: (0, 0)),
            pl.BlockSpec((1, N), lambda i: (0, 0)),
        ],
        out_specs=pl.BlockSpec((tm, N), lambda i: (i, 0)),
        compiler_params=pltpu.CompilerParams(
            dimension_semantics=("parallel",)),
    )(x_bf16, w_bf16, b_f32)


def clip_head(enc, mask, cond_latents, w_latent, temperature):
    """Fused masked_mean + projection + normalize + dot + temperature."""
    B, T, D = enc.shape
    Dl = w_latent.shape[1]
    return pl.pallas_call(
        _clip_head_kernel,
        out_shape=jax.ShapeDtypeStruct((B, 1), jnp.float32),
        grid=(1,),
        in_specs=[
            pl.BlockSpec((B, T, D), lambda i: (0, 0, 0)),
            pl.BlockSpec((B, T), lambda i: (0, 0)),
            pl.BlockSpec((B, Dl), lambda i: (0, 0)),
            pl.BlockSpec((D, Dl), lambda i: (0, 0)),
            pl.BlockSpec((1, 1), lambda i: (0, 0)),
        ],
        out_specs=pl.BlockSpec((B, 1), lambda i: (0, 0)),
    )(enc, mask, cond_latents, w_latent, temperature)


# ----------------------------------------------------------------------------
# Model composition (jitted glue)
# ----------------------------------------------------------------------------
def cond_encoder(params, cond_mel, heads):
    """cond_mel: (B, 80, L_mel) NCL -> (B, dim_latent)."""
    B, C, L = cond_mel.shape
    x = jnp.transpose(cond_mel, (0, 2, 1)).reshape(B * L, C).astype(jnp.bfloat16)
    h = pallas_linear(x, params["init_w"], params["init_b"])     # Conv1d k=1
    h = h.reshape(B, L, -1)
    for blk in params["blocks"]:
        h = cond_block(h, blk, heads)
    # PyTorch returns h[:, :, 0] of a channel-first tensor == first time step.
    return h[:, 0, :]


@functools.partial(jax.jit,
                   static_argnames=("heads", "cond_heads",
                                    "wav_token_compression"))
def voice_cond_clip_forward(params, cond_mel, speech_tokens, wav_lengths, *,
                            heads, cond_heads, wav_token_compression):
    B, T = speech_tokens.shape

    # The PyTorch host-side trim `speech_tokens[:, :wav_lengths.max()//comp]`
    # is folded into a key/row mask so shapes stay static and the whole
    # forward runs as one jit program (no host sync).  Masked positions never
    # influence valid rows (keys masked in attention, rows excluded from the
    # masked mean), so the output is identical.
    max_mel_len = jnp.max(wav_lengths) // wav_token_compression
    pos = jnp.arange(T)
    trim_mask = jnp.broadcast_to(
        (pos[None, :] < max_mel_len).astype(jnp.float32), (B, T))
    # eval-mode voice_mask is all-ones over the (virtually) trimmed region.
    mask3 = trim_mask[:, None, :]                                # (B, 1, T)

    # embedding gather + positional embedding (XLA glue)
    emb = (params["speech_emb"][speech_tokens]
           + params["speech_pos_emb"][pos][None, :, :]).astype(jnp.float32)

    cond_latents = cond_encoder(params["cond"], cond_mel, cond_heads)  # (B, D)

    x = emb
    for layer in params["speech_layers"]:
        x = speech_block(x, mask3, layer, heads)                 # (B, T, D)

    sim = clip_head(x, trim_mask, cond_latents,
                    params["to_speech_latent"], params["temperature"])
    return sim[:, 0]                                             # (B,)


# ----------------------------------------------------------------------------
# Deterministic parameter init (matmul weights pre-cast to bf16 once)
# ----------------------------------------------------------------------------
def init_params(key, *, dim_speech, dim_latent, num_tokens, depth,
                cond_blocks, mel_channels):
    keys = iter(jax.random.split(key, 256))

    def nrm(shape, scale=0.02, dtype=jnp.bfloat16):
        return (scale * jax.random.normal(next(keys), shape,
                                          jnp.float32)).astype(dtype)

    zeros = lambda s: jnp.zeros(s, jnp.float32)
    ones = lambda s: jnp.ones(s, jnp.float32)

    params = {
        "speech_emb": nrm((num_tokens, dim_speech), dtype=jnp.float32),
        "speech_pos_emb": nrm((num_tokens, dim_speech), dtype=jnp.float32),
        "to_speech_latent": nrm((dim_speech, dim_latent)),   # bf16, no bias
        "temperature": jnp.ones((1, 1), jnp.float32),
        "speech_layers": [],
        "cond": {
            "init_w": nrm((mel_channels, dim_latent)),       # Conv1d k=1
            "init_b": zeros((1, dim_latent)),
            "blocks": [],
        },
    }
    for _ in range(depth):
        params["speech_layers"].append({
            "ln1_g": ones((1, dim_speech)), "ln1_b": zeros((1, dim_speech)),
            "w_qkv": nrm((dim_speech, 3 * dim_speech)),
            "w_o": nrm((dim_speech, dim_speech)),
            "b_o": zeros((1, dim_speech)),
            "ln2_g": ones((1, dim_speech)), "ln2_b": zeros((1, dim_speech)),
            "w1": nrm((dim_speech, 4 * dim_speech)),
            "b1": zeros((1, 4 * dim_speech)),
            "w2": nrm((4 * dim_speech, dim_speech)),
            "b2": zeros((1, dim_speech)),
        })
    for _ in range(cond_blocks):
        params["cond"]["blocks"].append({
            "ln_g": ones((1, dim_latent)), "ln_b": zeros((1, dim_latent)),
            "w_qkv": nrm((dim_latent, 3 * dim_latent)),
            "w_o": nrm((dim_latent, dim_latent)),
            "b_o": zeros((1, dim_latent)),
        })
    return params


# ----------------------------------------------------------------------------
if __name__ == "__main__":
    B = 2                # batch
    DIM = 64             # dim_speech == dim_latent
    HEADS = 4            # speech_heads
    COND_HEADS = 4
    DEPTH = 2            # speech_enc_depth
    COND_BLOCKS = 2
    NUM_TOKENS = 256     # num_speech_tokens
    SEQ_LEN = 10         # speech_seq_len (static; trim folded into mask)
    MEL_CH = 80          # ConditioningEncoder spec_dim
    MEL_LEN = 16
    WAV_COMP = 1024      # wav_token_compression

    key = jax.random.PRNGKey(0)
    k_params, k_mel, k_tok = jax.random.split(key, 3)

    params = init_params(
        k_params, dim_speech=DIM, dim_latent=DIM, num_tokens=NUM_TOKENS,
        depth=DEPTH, cond_blocks=COND_BLOCKS, mel_channels=MEL_CH)

    cond_mel = jax.random.normal(k_mel, (B, MEL_CH, MEL_LEN), jnp.float32)
    speech_tokens = jax.random.randint(k_tok, (B, SEQ_LEN), 0, NUM_TOKENS,
                                       dtype=jnp.int32)
    wav_lengths = jnp.array([8 * WAV_COMP, 6 * WAV_COMP], jnp.int32)

    sim = voice_cond_clip_forward(
        params, cond_mel, speech_tokens, wav_lengths,
        heads=HEADS, cond_heads=COND_HEADS, wav_token_compression=WAV_COMP)
    sim = jax.block_until_ready(sim)

    assert sim.shape == (B,), sim.shape
    assert jnp.all(jnp.isfinite(sim))
    print("KERNEL_OK")
</pallas_src>

<mosaic_0001>
module attributes {stable_mosaic.version = 11 : i64} {
  func.func @_cond_block_kernel(%arg0: i32, %arg1: memref<1x16x64xf32, #tpu.memory_space<vmem>>, %arg2: memref<1x64xf32, #tpu.memory_space<vmem>>, %arg3: memref<1x64xf32, #tpu.memory_space<vmem>>, %arg4: memref<64x192xbf16, #tpu.memory_space<vmem>>, %arg5: memref<64x64xbf16, #tpu.memory_space<vmem>>, %arg6: memref<1x64xf32, #tpu.memory_space<vmem>>, %arg7: memref<1x16x64xf32, #tpu.memory_space<vmem>>) attributes {dimension_semantics = [#tpu.dimension_semantics<parallel>], iteration_bounds = array<i64: 2>, scalar_prefetch = 0 : i64, scratch_operands = 0 : i64, tpu.core_type = #tpu.core_type<tc>, window_params = [{transform_indices = @transform_0, window_bounds = array<i64: 1, 16, 64>}, {pipeline_mode = #tpu.pipeline_mode<synchronous>, transform_indices = @transform_1, window_bounds = array<i64: 1, 64>}, {pipeline_mode = #tpu.pipeline_mode<synchronous>, transform_indices = @transform_2, window_bounds = array<i64: 1, 64>}, {pipeline_mode = #tpu.pipeline_mode<synchronous>, transform_indices = @transform_3, window_bounds = array<i64: 64, 192>}, {pipeline_mode = #tpu.pipeline_mode<synchronous>, transform_indices = @transform_4, window_bounds = array<i64: 64, 64>}, {pipeline_mode = #tpu.pipeline_mode<synchronous>, transform_indices = @transform_5, window_bounds = array<i64: 1, 64>}, {transform_indices = @transform_6, window_bounds = array<i64: 1, 16, 64>}]} {
    %c0 = arith.constant 0 : index
    %c0_0 = arith.constant 0 : index
    %c0_1 = arith.constant 0 : index
    %0 = vector.load %arg1[%c0, %c0_0, %c0_1] : memref<1x16x64xf32, #tpu.memory_space<vmem>>, vector<1x16x64xf32>
    %1 = vector.shape_cast %0 : vector<1x16x64xf32> to vector<16x64xf32>
    %c0_2 = arith.constant 0 : index
    %c0_3 = arith.constant 0 : index
    %2 = vector.load %arg2[%c0_2, %c0_3] : memref<1x64xf32, #tpu.memory_space<vmem>>, vector<1x64xf32>
    %c0_4 = arith.constant 0 : index
    %c0_5 = arith.constant 0 : index
    %3 = vector.load %arg3[%c0_4, %c0_5] : memref<1x64xf32, #tpu.memory_space<vmem>>, vector<1x64xf32>
    %c0_6 = arith.constant 0 : index
    %c0_7 = arith.constant 0 : index
    %4 = vector.load %arg4[%c0_6, %c0_7] : memref<64x192xbf16, #tpu.memory_space<vmem>>, vector<64x192xbf16>
    %c0_8 = arith.constant 0 : index
    %c0_9 = arith.constant 0 : index
    %5 = vector.load %arg5[%c0_8, %c0_9] : memref<64x64xbf16, #tpu.memory_space<vmem>>, vector<64x64xbf16>
    %c0_10 = arith.constant 0 : index
    %c0_11 = arith.constant 0 : index
    %6 = vector.load %arg6[%c0_10, %c0_11] : memref<1x64xf32, #tpu.memory_space<vmem>>, vector<1x64xf32>
    %cst = arith.constant dense<0.000000e+00> : vector<16xf32>
    %7 = vector.multi_reduction <add>, %1, %cst [1] : vector<16x64xf32> to vector<16xf32>
    %8 = vector.shape_cast %7 : vector<16xf32> to vector<16x1xf32>
    %cst_12 = arith.constant 6.400000e+01 : f32
    %9 = vector.broadcast %cst_12 : f32 to vector<16x1xf32>
    %10 = arith.divf %8, %9 : vector<16x1xf32>
    %11 = vector.broadcast %10 : vector<16x1xf32> to vector<16x64xf32>
    %12 = arith.subf %1, %11 : vector<16x64xf32>
    %13 = arith.mulf %12, %12 : vector<16x64xf32>
    %cst_13 = arith.constant dense<0.000000e+00> : vector<16xf32>
    %14 = vector.multi_reduction <add>, %13, %cst_13 [1] : vector<16x64xf32> to vector<16xf32>
    %15 = vector.shape_cast %14 : vector<16xf32> to vector<16x1xf32>
    %cst_14 = arith.constant 6.400000e+01 : f32
    %16 = vector.broadcast %cst_14 : f32 to vector<16x1xf32>
    %17 = arith.divf %15, %16 : vector<16x1xf32>
    %18 = vector.broadcast %10 : vector<16x1xf32> to vector<16x64xf32>
    %19 = arith.subf %1, %18 : vector<16x64xf32>
    %cst_15 = arith.constant 9.99999974E-6 : f32
    %20 = vector.broadcast %cst_15 : f32 to vector<16x1xf32>
    %21 = arith.addf %17, %20 : vector<16x1xf32>
    %22 = math.rsqrt %21 : vector<16x1xf32>
    %23 = vector.broadcast %22 : vector<16x1xf32> to vector<16x64xf32>
    %24 = arith.mulf %19, %23 : vector<16x64xf32>
    %25 = vector.broadcast %2 : vector<1x64xf32> to vector<16x64xf32>
    %26 = arith.mulf %24, %25 : vector<16x64xf32>
    %27 = vector.broadcast %3 : vector<1x64xf32> to vector<16x64xf32>
    %28 = arith.addf %26, %27 : vector<16x64xf32>
    %29 = arith.truncf %28 : vector<16x64xf32> to vector<16x64xbf16>
    %cst_16 = arith.constant dense<0.000000e+00> : vector<16x192xf32>
    %30 = tpu.matmul %29, %4, %cst_16 {dimension_numbers = #tpu.dot_dimension_numbers<[1], [0], [0], [1], [0, 0, 1, 1], [], []>} : vector<16x64xbf16>, vector<64x192xbf16>, vector<16x192xf32> -> vector<16x192xf32>
    %31 = vector.extract_strided_slice %30 {offsets = [0, 0], sizes = [16, 64], strides = [1, 1]} : vector<16x192xf32> to vector<16x64xf32>
    %cst_17 = arith.constant 2.500000e-01 : f32
    %32 = vector.broadcast %cst_17 : f32 to vector<16x64xf32>
    %33 = arith.mulf %31, %32 : vector<16x64xf32>
    %34 = arith.truncf %33 : vector<16x64xf32> to vector<16x64xbf16>
    %35 = vector.extract_strided_slice %30 {offsets = [0, 64], sizes = [16, 64], strides = [1, 1]} : vector<16x192xf32> to vector<16x64xf32>
    %36 = arith.truncf %35 : vector<16x64xf32> to vector<16x64xbf16>
    %37 = vector.extract_strided_slice %30 {offsets = [0, 128], sizes = [16, 64], strides = [1, 1]} : vector<16x192xf32> to vector<16x64xf32>
    %38 = arith.truncf %37 : vector<16x64xf32> to vector<16x64xbf16>
    %39 = vector.extract_strided_slice %34 {offsets = [0, 0], sizes = [16, 16], strides = [1, 1]} : vector<16x64xbf16> to vector<16x16xbf16>
    %40 = vector.extract_strided_slice %36 {offsets = [0, 0], sizes = [16, 16], strides = [1, 1]} : vector<16x64xbf16> to vector<16x16xbf16>
    %41 = vector.extract_strided_slice %38 {offsets = [0, 0], sizes = [16, 16], strides = [1, 1]} : vector<16x64xbf16> to vector<16x16xbf16>
    %cst_18 = arith.constant dense<0.000000e+00> : vector<16x16xf32>
    %42 = tpu.matmul %39, %40, %cst_18 {dimension_numbers = #tpu.dot_dimension_numbers<[1], [1], [0], [0], [0, 0, 1, 0], [], []>} : vector<16x16xbf16>, vector<16x16xbf16>, vector<16x16xf32> -> vector<16x16xf32>
    %cst_19 = arith.constant dense<0xFF800000> : vector<16xf32>
    %43 = vector.multi_reduction <maximumf>, %42, %cst_19 [1] : vector<16x16xf32> to vector<16xf32>
    %44 = vector.shape_cast %43 : vector<16xf32> to vector<16x1xf32>
    %45 = vector.broadcast %44 : vector<16x1xf32> to vector<16x16xf32>
    %46 = arith.subf %42, %45 : vector<16x16xf32>
    %47 = math.exp %46 : vector<16x16xf32>
    %cst_20 = arith.constant dense<0.000000e+00> : vector<16xf32>
    %48 = vector.multi_reduction <add>, %47, %cst_20 [1] : vector<16x16xf32> to vector<16xf32>
    %49 = vector.shape_cast %48 : vector<16xf32> to vector<16x1xf32>
    %50 = tpu.reciprocal %49 {approx = true} : vector<16x1xf32> -> vector<16x1xf32>
    %51 = vector.broadcast %50 : vector<16x1xf32> to vector<16x16xf32>
    %52 = arith.mulf %47, %51 : vector<16x16xf32>
    %53 = arith.truncf %52 : vector<16x16xf32> to vector<16x16xbf16>
    %cst_21 = arith.constant dense<0.000000e+00> : vector<16x16xf32>
    %54 = tpu.matmul %53, %41, %cst_21 {dimension_numbers = #tpu.dot_dimension_numbers<[1], [0], [0], [1], [0, 0, 1, 1], [], []>} : vector<16x16xbf16>, vector<16x16xbf16>, vector<16x16xf32> -> vector<16x16xf32>
    %55 = arith.truncf %54 : vector<16x16xf32> to vector<16x16xbf16>
    %56 = vector.extract_strided_slice %5 {offsets = [0, 0], sizes = [16, 64], strides = [1, 1]} : vector<64x64xbf16> to vector<16x64xbf16>
    %cst_22 = arith.constant dense<0.000000e+00> : vector<16x64xf32>
    %57 = tpu.matmul %55, %56, %cst_22 {dimension_numbers = #tpu.dot_dimension_numbers<[1], [0], [0], [1], [0, 0, 1, 1], [], []>} : vector<16x16xbf16>, vector<16x64xbf16>, vector<16x64xf32> -> vector<16x64xf32>
    %58 = vector.extract_strided_slice %34 {offsets = [0, 16], sizes = [16, 16], strides = [1, 1]} : vector<16x64xbf16> to vector<16x16xbf16>
    %59 = vector.extract_strided_slice %36 {offsets = [0, 16], sizes = [16, 16], strides = [1, 1]} : vector<16x64xbf16> to vector<16x16xbf16>
    %60 = vector.extract_strided_slice %38 {offsets = [0, 16], sizes = [16, 16], strides = [1, 1]} : vector<16x64xbf16> to vector<16x16xbf16>
    %cst_23 = arith.constant dense<0.000000e+00> : vector<16x16xf32>
    %61 = tpu.matmul %58, %59, %cst_23 {dimension_numbers = #tpu.dot_dimension_numbers<[1], [1], [0], [0], [0, 0, 1, 0], [], []>} : vector<16x16xbf16>, vector<16x16xbf16>, vector<16x16xf32> -> vector<16x16xf32>
    %cst_24 = arith.constant dense<0xFF800000> : vector<16xf32>
    %62 = vector.multi_reduction <maximumf>, %61, %cst_24 [1] : vector<16x16xf32> to vector<16xf32>
    %63 = vector.shape_cast %62 : vector<16xf32> to vector<16x1xf32>
    %64 = vector.broadcast %63 : vector<16x1xf32> to vector<16x16xf32>
    %65 = arith.subf %61, %64 : vector<16x16xf32>
    %66 = math.exp %65 : vector<16x16xf32>
    %cst_25 = arith.constant dense<0.000000e+00> : vector<16xf32>
    %67 = vector.multi_reduction <add>, %66, %cst_25 [1] : vector<16x16xf32> to vector<16xf32>
    %68 = vector.shape_cast %67 : vector<16xf32> to vector<16x1xf32>
    %69 = tpu.reciprocal %68 {approx = true} : vector<16x1xf32> -> vector<16x1xf32>
    %70 = vector.broadcast %69 : vector<16x1xf32> to vector<16x16xf32>
    %71 = arith.mulf %66, %70 : vector<16x16xf32>
    %72 = arith.truncf %71 : vector<16x16xf32> to vector<16x16xbf16>
    %cst_26 = arith.constant dense<0.000000e+00> : vector<16x16xf32>
    %73 = tpu.matmul %72, %60, %cst_26 {dimension_numbers = #tpu.dot_dimension_numbers<[1], [0], [0], [1], [0, 0, 1, 1], [], []>} : vector<16x16xbf16>, vector<16x16xbf16>, vector<16x16xf32> -> vector<16x16xf32>
    %74 = arith.truncf %73 : vector<16x16xf32> to vector<16x16xbf16>
    %75 = vector.extract_strided_slice %5 {offsets = [16, 0], sizes = [16, 64], strides = [1, 1]} : vector<64x64xbf16> to vector<16x64xbf16>
    %cst_27 = arith.constant dense<0.000000e+00> : vector<16x64xf32>
    %76 = tpu.matmul %74, %75, %cst_27 {dimension_numbers = #tpu.dot_dimension_numbers<[1], [0], [0], [1], [0, 0, 1, 1], [], []>} : vector<16x16xbf16>, vector<16x64xbf16>, vector<16x64xf32> -> vector<16x64xf32>
    %77 = arith.addf %57, %76 : vector<16x64xf32>
    %78 = vector.extract_strided_slice %34 {offsets = [0, 32], sizes = [16, 16], strides = [1, 1]} : vector<16x64xbf16> to vector<16x16xbf16>
    %79 = vector.extract_strided_slice %36 {offsets = [0, 32], sizes = [16, 16], strides = [1, 1]} : vector<16x64xbf16> to vector<16x16xbf16>
    %80 = vector.extract_strided_slice %38 {offsets = [0, 32], sizes = [16, 16], strides = [1, 1]} : vector<16x64xbf16> to vector<16x16xbf16>
    %cst_28 = arith.constant dense<0.000000e+00> : vector<16x16xf32>
    %81 = tpu.matmul %78, %79, %cst_28 {dimension_numbers = #tpu.dot_dimension_numbers<[1], [1], [0], [0], [0, 0, 1, 0], [], []>} : vector<16x16xbf16>, vector<16x16xbf16>, vector<16x16xf32> -> vector<16x16xf32>
    %cst_29 = arith.constant dense<0xFF800000> : vector<16xf32>
    %82 = vector.multi_reduction <maximumf>, %81, %cst_29 [1] : vector<16x16xf32> to vector<16xf32>
    %83 = vector.shape_cast %82 : vector<16xf32> to vector<16x1xf32>
    %84 = vector.broadcast %83 : vector<16x1xf32> to vector<16x16xf32>
    %85 = arith.subf %81, %84 : vector<16x16xf32>
    %86 = math.exp %85 : vector<16x16xf32>
    %cst_30 = arith.constant dense<0.000000e+00> : vector<16xf32>
    %87 = vector.multi_reduction <add>, %86, %cst_30 [1] : vector<16x16xf32> to vector<16xf32>
    %88 = vector.shape_cast %87 : vector<16xf32> to vector<16x1xf32>
    %89 = tpu.reciprocal %88 {approx = true} : vector<16x1xf32> -> vector<16x1xf32>
    %90 = vector.broadcast %89 : vector<16x1xf32> to vector<16x16xf32>
    %91 = arith.mulf %86, %90 : vector<16x16xf32>
    %92 = arith.truncf %91 : vector<16x16xf32> to vector<16x16xbf16>
    %cst_31 = arith.constant dense<0.000000e+00> : vector<16x16xf32>
    %93 = tpu.matmul %92, %80, %cst_31 {dimension_numbers = #tpu.dot_dimension_numbers<[1], [0], [0], [1], [0, 0, 1, 1], [], []>} : vector<16x16xbf16>, vector<16x16xbf16>, vector<16x16xf32> -> vector<16x16xf32>
    %94 = arith.truncf %93 : vector<16x16xf32> to vector<16x16xbf16>
    %95 = vector.extract_strided_slice %5 {offsets = [32, 0], sizes = [16, 64], strides = [1, 1]} : vector<64x64xbf16> to vector<16x64xbf16>
    %cst_32 = arith.constant dense<0.000000e+00> : vector<16x64xf32>
    %96 = tpu.matmul %94, %95, %cst_32 {dimension_numbers = #tpu.dot_dimension_numbers<[1], [0], [0], [1], [0, 0, 1, 1], [], []>} : vector<16x16xbf16>, vector<16x64xbf16>, vector<16x64xf32> -> vector<16x64xf32>
    %97 = arith.addf %77, %96 : vector<16x64xf32>
    %98 = vector.extract_strided_slice %34 {offsets = [0, 48], sizes = [16, 16], strides = [1, 1]} : vector<16x64xbf16> to vector<16x16xbf16>
    %99 = vector.extract_strided_slice %36 {offsets = [0, 48], sizes = [16, 16], strides = [1, 1]} : vector<16x64xbf16> to vector<16x16xbf16>
    %100 = vector.extract_strided_slice %38 {offsets = [0, 48], sizes = [16, 16], strides = [1, 1]} : vector<16x64xbf16> to vector<16x16xbf16>
    %cst_33 = arith.constant dense<0.000000e+00> : vector<16x16xf32>
    %101 = tpu.matmul %98, %99, %cst_33 {dimension_numbers = #tpu.dot_dimension_numbers<[1], [1], [0], [0], [0, 0, 1, 0], [], []>} : vector<16x16xbf16>, vector<16x16xbf16>, vector<16x16xf32> -> vector<16x16xf32>
    %cst_34 = arith.constant dense<0xFF800000> : vector<16xf32>
    %102 = vector.multi_reduction <maximumf>, %101, %cst_34 [1] : vector<16x16xf32> to vector<16xf32>
    %103 = vector.shape_cast %102 : vector<16xf32> to vector<16x1xf32>
    %104 = vector.broadcast %103 : vector<16x1xf32> to vector<16x16xf32>
    %105 = arith.subf %101, %104 : vector<16x16xf32>
    %106 = math.exp %105 : vector<16x16xf32>
    %cst_35 = arith.constant dense<0.000000e+00> : vector<16xf32>
    %107 = vector.multi_reduction <add>, %106, %cst_35 [1] : vector<16x16xf32> to vector<16xf32>
    %108 = vector.shape_cast %107 : vector<16xf32> to vector<16x1xf32>
    %109 = tpu.reciprocal %108 {approx = true} : vector<16x1xf32> -> vector<16x1xf32>
    %110 = vector.broadcast %109 : vector<16x1xf32> to vector<16x16xf32>
    %111 = arith.mulf %106, %110 : vector<16x16xf32>
    %112 = arith.truncf %111 : vector<16x16xf32> to vector<16x16xbf16>
    %cst_36 = arith.constant dense<0.000000e+00> : vector<16x16xf32>
    %113 = tpu.matmul %112, %100, %cst_36 {dimension_numbers = #tpu.dot_dimension_numbers<[1], [0], [0], [1], [0, 0, 1, 1], [], []>} : vector<16x16xbf16>, vector<16x16xbf16>, vector<16x16xf32> -> vector<16x16xf32>
    %114 = arith.truncf %113 : vector<16x16xf32> to vector<16x16xbf16>
    %115 = vector.extract_strided_slice %5 {offsets = [48, 0], sizes = [16, 64], strides = [1, 1]} : vector<64x64xbf16> to vector<16x64xbf16>
    %cst_37 = arith.constant dense<0.000000e+00> : vector<16x64xf32>
    %116 = tpu.matmul %114, %115, %cst_37 {dimension_numbers = #tpu.dot_dimension_numbers<[1], [0], [0], [1], [0, 0, 1, 1], [], []>} : vector<16x16xbf16>, vector<16x64xbf16>, vector<16x64xf32> -> vector<16x64xf32>
    %117 = arith.addf %97, %116 : vector<16x64xf32>
    %118 = vector.broadcast %6 : vector<1x64xf32> to vector<16x64xf32>
    %119 = arith.addf %117, %118 : vector<16x64xf32>
    %120 = arith.addf %1, %119 : vector<16x64xf32>
    %c0_38 = arith.constant 0 : index
    %c0_39 = arith.constant 0 : index
    %c0_40 = arith.constant 0 : index
    %121 = vector.load %arg7[%c0_38, %c0_39, %c0_40] : memref<1x16x64xf32, #tpu.memory_space<vmem>>, vector<1x16x64xf32>
    %122 = vector.shape_cast %121 : vector<1x16x64xf32> to vector<16x64xf32>
    %123 = vector.shape_cast %120 : vector<16x64xf32> to vector<1x16x64xf32>
    tpu.vector_store %arg7[%c0_38, %c0_39, %c0_40], %123 {strides = array<i32>} : memref<1x16x64xf32, #tpu.memory_space<vmem>>, vector<1x16x64xf32>,
    return
  }
  func.func @transform_0(%arg0: i32) -> (i32, i32, i32) {
    %c0_i32 = arith.constant 0 : i32
    %c0_i32_0 = arith.constant 0 : i32
    %c0_i32_1 = arith.constant 0 : i32
    return %arg0, %c0_i32, %c0_i32_0 : i32, i32, i32
  }
  func.func @transform_1(%arg0: i32) -> (i32, i32) {
    %c0_i32 = arith.constant 0 : i32
    %c0_i32_0 = arith.constant 0 : i32
    %c0_i32_1 = arith.constant 0 : i32
    return %c0_i32, %c0_i32_0 : i32, i32
  }
  func.func @transform_2(%arg0: i32) -> (i32, i32) {
    %c0_i32 = arith.constant 0 : i32
    %c0_i32_0 = arith.constant 0 : i32
    %c0_i32_1 = arith.constant 0 : i32
    return %c0_i32, %c0_i32_0 : i32, i32
  }
  func.func @transform_3(%arg0: i32) -> (i32, i32) {
    %c0_i32 = arith.constant 0 : i32
    %c0_i32_0 = arith.constant 0 : i32
    %c0_i32_1 = arith.constant 0 : i32
    return %c0_i32, %c0_i32_0 : i32, i32
  }
  func.func @transform_4(%arg0: i32) -> (i32, i32) {
    %c0_i32 = arith.constant 0 : i32
    %c0_i32_0 = arith.constant 0 : i32
    %c0_i32_1 = arith.constant 0 : i32
    return %c0_i32, %c0_i32_0 : i32, i32
  }
  func.func @transform_5(%arg0: i32) -> (i32, i32) {
    %c0_i32 = arith.constant 0 : i32
    %c0_i32_0 = arith.constant 0 : i32
    %c0_i32_1 = arith.constant 0 : i32
    return %c0_i32, %c0_i32_0 : i32, i32
  }
  func.func @transform_6(%arg0: i32) -> (i32, i32, i32) {
    %c0_i32 = arith.constant 0 : i32
    %c0_i32_0 = arith.constant 0 : i32
    %c0_i32_1 = arith.constant 0 : i32
    return %arg0, %c0_i32, %c0_i32_0 : i32, i32, i32
  }
}

module attributes {stable_mosaic.version = 11 : i64} {
  func.func @_speech_block_kernel(%arg0: i32, %arg1: memref<1x10x64xf32, #tpu.memory_space<vmem>>, %arg2: memref<1x1x10xf32, #tpu.memory_space<vmem>>, %arg3: memref<1x64xf32, #tpu.memory_space<vmem>>, %arg4: memref<1x64xf32, #tpu.memory_space<vmem>>, %arg5: memref<64x192xbf16, #tpu.memory_space<vmem>>, %arg6: memref<64x64xbf16, #tpu.memory_space<vmem>>, %arg7: memref<1x64xf32, #tpu.memory_space<vmem>>, %arg8: memref<1x64xf32, #tpu.memory_space<vmem>>, %arg9: memref<1x64xf32, #tpu.memory_space<vmem>>, %arg10: memref<64x256xbf16, #tpu.memory_space<vmem>>, %arg11: memref<1x256xf32, #tpu.memory_space<vmem>>, %arg12: memref<256x64xbf16, #tpu.memory_space<vmem>>, %arg13: memref<1x64xf32, #tpu.memory_space<vmem>>, %arg14: memref<1x10x64xf32, #tpu.memory_space<vmem>>) attributes {dimension_semantics = [#tpu.dimension_semantics<parallel>], iteration_bounds = array<i64: 2>, scalar_prefetch = 0 : i64, scratch_operands = 0 : i64, tpu.core_type = #tpu.core_type<tc>, window_params = [{transform_indices = @transform_0, window_bounds = array<i64: 1, 10, 64>}, {transform_indices = @transform_1, window_bounds = array<i64: 1, 1, 10>}, {pipeline_mode = #tpu.pipeline_mode<synchronous>, transform_indices = @transform_2, window_bounds = array<i64: 1, 64>}, {pipeline_mode = #tpu.pipeline_mode<synchronous>, transform_indices = @transform_3, window_bounds = array<i64: 1, 64>}, {pipeline_mode = #tpu.pipeline_mode<synchronous>, transform_indices = @transform_4, window_bounds = array<i64: 64, 192>}, {pipeline_mode = #tpu.pipeline_mode<synchronous>, transform_indices = @transform_5, window_bounds = array<i64: 64, 64>}, {pipeline_mode = #tpu.pipeline_mode<synchronous>, transform_indices = @transform_6, window_bounds = array<i64: 1, 64>}, {pipeline_mode = #tpu.pipeline_mode<synchronous>, transform_indices = @transform_7, window_bounds = array<i64: 1, 64>}, {pipeline_mode = #tpu.pipeline_mode<synchronous>, transform_indices = @transform_8, window_bounds = array<i64: 1, 64>}, {pipeline_mode = #tpu.pipeline_mode<synchronous>, transform_indices = @transform_9, window_bounds = array<i64: 64, 256>}, {pipeline_mode = #tpu.pipeline_mode<synchronous>, transform_indices = @transform_10, window_bounds = array<i64: 1, 256>}, {pipeline_mode = #tpu.pipeline_mode<synchronous>, transform_indices = @transform_11, window_bounds = array<i64: 256, 64>}, {pipeline_mode = #tpu.pipeline_mode<synchronous>, transform_indices = @transform_12, window_bounds = array<i64: 1, 64>}, {transform_indices = @transform_13, window_bounds = array<i64: 1, 10, 64>}]} {
    %c0 = arith.constant 0 : index
    %c0_0 = arith.constant 0 : index
    %c0_1 = arith.constant 0 : index
    %0 = vector.load %arg1[%c0, %c0_0, %c0_1] : memref<1x10x64xf32, #tpu.memory_space<vmem>>, vector<1x10x64xf32>
    %1 = vector.shape_cast %0 : vector<1x10x64xf32> to vector<10x64xf32>
    %c0_2 = arith.constant 0 : index
    %c0_3 = arith.constant 0 : index
    %c0_4 = arith.constant 0 : index
    %2 = vector.load %arg2[%c0_2, %c0_3, %c0_4] : memref<1x1x10xf32, #tpu.memory_space<vmem>>, vector<1x1x10xf32>
    %3 = vector.shape_cast %2 : vector<1x1x10xf32> to vector<1x10xf32>
    %cst = arith.constant 1.000000e+00 : f32
    %4 = vector.broadcast %cst : f32 to vector<1x10xf32>
    %5 = arith.subf %3, %4 : vector<1x10xf32>
    %cst_5 = arith.constant 1.000000e+09 : f32
    %6 = vector.broadcast %cst_5 : f32 to vector<1x10xf32>
    %7 = arith.mulf %5, %6 : vector<1x10xf32>
    %c0_6 = arith.constant 0 : index
    %c0_7 = arith.constant 0 : index
    %8 = vector.load %arg3[%c0_6, %c0_7] : memref<1x64xf32, #tpu.memory_space<vmem>>, vector<1x64xf32>
    %c0_8 = arith.constant 0 : index
    %c0_9 = arith.constant 0 : index
    %9 = vector.load %arg4[%c0_8, %c0_9] : memref<1x64xf32, #tpu.memory_space<vmem>>, vector<1x64xf32>
    %c0_10 = arith.constant 0 : index
    %c0_11 = arith.constant 0 : index
    %10 = vector.load %arg5[%c0_10, %c0_11] : memref<64x192xbf16, #tpu.memory_space<vmem>>, vector<64x192xbf16>
    %c0_12 = arith.constant 0 : index
    %c0_13 = arith.constant 0 : index
    %11 = vector.load %arg6[%c0_12, %c0_13] : memref<64x64xbf16, #tpu.memory_space<vmem>>, vector<64x64xbf16>
    %c0_14 = arith.constant 0 : index
    %c0_15 = arith.constant 0 : index
    %12 = vector.load %arg7[%c0_14, %c0_15] : memref<1x64xf32, #tpu.memory_space<vmem>>, vector<1x64xf32>
    %cst_16 = arith.constant dense<0.000000e+00> : vector<10xf32>
    %13 = vector.multi_reduction <add>, %1, %cst_16 [1] : vector<10x64xf32> to vector<10xf32>
    %14 = vector.shape_cast %13 : vector<10xf32> to vector<10x1xf32>
    %cst_17 = arith.constant 6.400000e+01 : f32
    %15 = vector.broadcast %cst_17 : f32 to vector<10x1xf32>
    %16 = arith.divf %14, %15 : vector<10x1xf32>
    %17 = vector.broadcast %16 : vector<10x1xf32> to vector<10x64xf32>
    %18 = arith.subf %1, %17 : vector<10x64xf32>
    %19 = arith.mulf %18, %18 : vector<10x64xf32>
    %cst_18 = arith.constant dense<0.000000e+00> : vector<10xf32>
    %20 = vector.multi_reduction <add>, %19, %cst_18 [1] : vector<10x64xf32> to vector<10xf32>
    %21 = vector.shape_cast %20 : vector<10xf32> to vector<10x1xf32>
    %cst_19 = arith.constant 6.400000e+01 : f32
    %22 = vector.broadcast %cst_19 : f32 to vector<10x1xf32>
    %23 = arith.divf %21, %22 : vector<10x1xf32>
    %24 = vector.broadcast %16 : vector<10x1xf32> to vector<10x64xf32>
    %25 = arith.subf %1, %24 : vector<10x64xf32>
    %cst_20 = arith.constant 9.99999974E-6 : f32
    %26 = vector.broadcast %cst_20 : f32 to vector<10x1xf32>
    %27 = arith.addf %23, %26 : vector<10x1xf32>
    %28 = math.rsqrt %27 : vector<10x1xf32>
    %29 = vector.broadcast %28 : vector<10x1xf32> to vector<10x64xf32>
    %30 = arith.mulf %25, %29 : vector<10x64xf32>
    %31 = vector.broadcast %8 : vector<1x64xf32> to vector<10x64xf32>
    %32 = arith.mulf %30, %31 : vector<10x64xf32>
    %33 = vector.broadcast %9 : vector<1x64xf32> to vector<10x64xf32>
    %34 = arith.addf %32, %33 : vector<10x64xf32>
    %35 = arith.truncf %34 : vector<10x64xf32> to vector<10x64xbf16>
    %cst_21 = arith.constant dense<0.000000e+00> : vector<10x192xf32>
    %36 = tpu.matmul %35, %10, %cst_21 {dimension_numbers = #tpu.dot_dimension_numbers<[1], [0], [0], [1], [0, 0, 1, 1], [], []>} : vector<10x64xbf16>, vector<64x192xbf16>, vector<10x192xf32> -> vector<10x192xf32>
    %37 = vector.extract_strided_slice %36 {offsets = [0, 0], sizes = [10, 64], strides = [1, 1]} : vector<10x192xf32> to vector<10x64xf32>
    %cst_22 = arith.constant 2.500000e-01 : f32
    %38 = vector.broadcast %cst_22 : f32 to vector<10x64xf32>
    %39 = arith.mulf %37, %38 : vector<10x64xf32>
    %40 = arith.truncf %39 : vector<10x64xf32> to vector<10x64xbf16>
    %41 = vector.extract_strided_slice %36 {offsets = [0, 64], sizes = [10, 64], strides = [1, 1]} : vector<10x192xf32> to vector<10x64xf32>
    %42 = arith.truncf %41 : vector<10x64xf32> to vector<10x64xbf16>
    %43 = vector.extract_strided_slice %36 {offsets = [0, 128], sizes = [10, 64], strides = [1, 1]} : vector<10x192xf32> to vector<10x64xf32>
    %44 = arith.truncf %43 : vector<10x64xf32> to vector<10x64xbf16>
    %45 = vector.extract_strided_slice %40 {offsets = [0, 0], sizes = [10, 16], strides = [1, 1]} : vector<10x64xbf16> to vector<10x16xbf16>
    %46 = vector.extract_strided_slice %42 {offsets = [0, 0], sizes = [10, 16], strides = [1, 1]} : vector<10x64xbf16> to vector<10x16xbf16>
    %47 = vector.extract_strided_slice %44 {offsets = [0, 0], sizes = [10, 16], strides = [1, 1]} : vector<10x64xbf16> to vector<10x16xbf16>
    %cst_23 = arith.constant dense<0.000000e+00> : vector<10x10xf32>
    %48 = tpu.matmul %45, %46, %cst_23 {dimension_numbers = #tpu.dot_dimension_numbers<[1], [1], [0], [0], [0, 0, 1, 0], [], []>} : vector<10x16xbf16>, vector<10x16xbf16>, vector<10x10xf32> -> vector<10x10xf32>
    %49 = vector.broadcast %7 : vector<1x10xf32> to vector<10x10xf32>
    %50 = arith.addf %48, %49 : vector<10x10xf32>
    %cst_24 = arith.constant dense<0xFF800000> : vector<10xf32>
    %51 = vector.multi_reduction <maximumf>, %50, %cst_24 [1] : vector<10x10xf32> to vector<10xf32>
    %52 = vector.shape_cast %51 : vector<10xf32> to vector<10x1xf32>
    %53 = vector.broadcast %52 : vector<10x1xf32> to vector<10x10xf32>
    %54 = arith.subf %50, %53 : vector<10x10xf32>
    %55 = math.exp %54 : vector<10x10xf32>
    %cst_25 = arith.constant dense<0.000000e+00> : vector<10xf32>
    %56 = vector.multi_reduction <add>, %55, %cst_25 [1] : vector<10x10xf32> to vector<10xf32>
    %57 = vector.shape_cast %56 : vector<10xf32> to vector<10x1xf32>
    %58 = tpu.reciprocal %57 {approx = true} : vector<10x1xf32> -> vector<10x1xf32>
    %59 = vector.broadcast %58 : vector<10x1xf32> to vector<10x10xf32>
    %60 = arith.mulf %55, %59 : vector<10x10xf32>
    %61 = arith.truncf %60 : vector<10x10xf32> to vector<10x10xbf16>
    %cst_26 = arith.constant dense<0.000000e+00> : vector<10x16xf32>
    %62 = tpu.matmul %61, %47, %cst_26 {dimension_numbers = #tpu.dot_dimension_numbers<[1], [0], [0], [1], [0, 0, 1, 1], [], []>} : vector<10x10xbf16>, vector<10x16xbf16>, vector<10x16xf32> -> vector<10x16xf32>
    %63 = arith.truncf %62 : vector<10x16xf32> to vector<10x16xbf16>
    %64 = vector.extract_strided_slice %11 {offsets = [0, 0], sizes = [16, 64], strides = [1, 1]} : vector<64x64xbf16> to vector<16x64xbf16>
    %cst_27 = arith.constant dense<0.000000e+00> : vector<10x64xf32>
    %65 = tpu.matmul %63, %64, %cst_27 {dimension_numbers = #tpu.dot_dimension_numbers<[1], [0], [0], [1], [0, 0, 1, 1], [], []>} : vector<10x16xbf16>, vector<16x64xbf16>, vector<10x64xf32> -> vector<10x64xf32>
    %66 = vector.extract_strided_slice %40 {offsets = [0, 16], sizes = [10, 16], strides = [1, 1]} : vector<10x64xbf16> to vector<10x16xbf16>
    %67 = vector.extract_strided_slice %42 {offsets = [0, 16], sizes = [10, 16], strides = [1, 1]} : vector<10x64xbf16> to vector<10x16xbf16>
    %68 = vector.extract_strided_slice %44 {offsets = [0, 16], sizes = [10, 16], strides = [1, 1]} : vector<10x64xbf16> to vector<10x16xbf16>
    %cst_28 = arith.constant dense<0.000000e+00> : vector<10x10xf32>
    %69 = tpu.matmul %66, %67, %cst_28 {dimension_numbers = #tpu.dot_dimension_numbers<[1], [1], [0], [0], [0, 0, 1, 0], [], []>} : vector<10x16xbf16>, vector<10x16xbf16>, vector<10x10xf32> -> vector<10x10xf32>
    %70 = vector.broadcast %7 : vector<1x10xf32> to vector<10x10xf32>
    %71 = arith.addf %69, %70 : vector<10x10xf32>
    %cst_29 = arith.constant dense<0xFF800000> : vector<10xf32>
    %72 = vector.multi_reduction <maximumf>, %71, %cst_29 [1] : vector<10x10xf32> to vector<10xf32>
    %73 = vector.shape_cast %72 : vector<10xf32> to vector<10x1xf32>
    %74 = vector.broadcast %73 : vector<10x1xf32> to vector<10x10xf32>
    %75 = arith.subf %71, %74 : vector<10x10xf32>
    %76 = math.exp %75 : vector<10x10xf32>
    %cst_30 = arith.constant dense<0.000000e+00> : vector<10xf32>
    %77 = vector.multi_reduction <add>, %76, %cst_30 [1] : vector<10x10xf32> to vector<10xf32>
    %78 = vector.shape_cast %77 : vector<10xf32> to vector<10x1xf32>
    %79 = tpu.reciprocal %78 {approx = true} : vector<10x1xf32> -> vector<10x1xf32>
    %80 = vector.broadcast %79 : vector<10x1xf32> to vector<10x10xf32>
    %81 = arith.mulf %76, %80 : vector<10x10xf32>
    %82 = arith.truncf %81 : vector<10x10xf32> to vector<10x10xbf16>
    %cst_31 = arith.constant dense<0.000000e+00> : vector<10x16xf32>
    %83 = tpu.matmul %82, %68, %cst_31 {dimension_numbers = #tpu.dot_dimension_numbers<[1], [0], [0], [1], [0, 0, 1, 1], [], []>} : vector<10x10xbf16>, vector<10x16xbf16>, vector<10x16xf32> -> vector<10x16xf32>
    %84 = arith.truncf %83 : vector<10x16xf32> to vector<10x16xbf16>
    %85 = vector.extract_strided_slice %11 {offsets = [16, 0], sizes = [16, 64], strides = [1, 1]} : vector<64x64xbf16> to vector<16x64xbf16>
    %cst_32 = arith.constant dense<0.000000e+00> : vector<10x64xf32>
    %86 = tpu.matmul %84, %85, %cst_32 {dimension_numbers = #tpu.dot_dimension_numbers<[1], [0], [0], [1], [0, 0, 1, 1], [], []>} : vector<10x16xbf16>, vector<16x64xbf16>, vector<10x64xf32> -> vector<10x64xf32>
    %87 = arith.addf %65, %86 : vector<10x64xf32>
    %88 = vector.extract_strided_slice %40 {offsets = [0, 32], sizes = [10, 16], strides = [1, 1]} : vector<10x64xbf16> to vector<10x16xbf16>
    %89 = vector.extract_strided_slice %42 {offsets = [0, 32], sizes = [10, 16], strides = [1, 1]} : vector<10x64xbf16> to vector<10x16xbf16>
    %90 = vector.extract_strided_slice %44 {offsets = [0, 32], sizes = [10, 16], strides = [1, 1]} : vector<10x64xbf16> to vector<10x16xbf16>
    %cst_33 = arith.constant dense<0.000000e+00> : vector<10x10xf32>
    %91 = tpu.matmul %88, %89, %cst_33 {dimension_numbers = #tpu.dot_dimension_numbers<[1], [1], [0], [0], [0, 0, 1, 0], [], []>} : vector<10x16xbf16>, vector<10x16xbf16>, vector<10x10xf32> -> vector<10x10xf32>
    %92 = vector.broadcast %7 : vector<1x10xf32> to vector<10x10xf32>
    %93 = arith.addf %91, %92 : vector<10x10xf32>
    %cst_34 = arith.constant dense<0xFF800000> : vector<10xf32>
    %94 = vector.multi_reduction <maximumf>, %93, %cst_34 [1] : vector<10x10xf32> to vector<10xf32>
    %95 = vector.shape_cast %94 : vector<10xf32> to vector<10x1xf32>
    %96 = vector.broadcast %95 : vector<10x1xf32> to vector<10x10xf32>
    %97 = arith.subf %93, %96 : vector<10x10xf32>
    %98 = math.exp %97 : vector<10x10xf32>
    %cst_35 = arith.constant dense<0.000000e+00> : vector<10xf32>
    %99 = vector.multi_reduction <add>, %98, %cst_35 [1] : vector<10x10xf32> to vector<10xf32>
    %100 = vector.shape_cast %99 : vector<10xf32> to vector<10x1xf32>
    %101 = tpu.reciprocal %100 {approx = true} : vector<10x1xf32> -> vector<10x1xf32>
    %102 = vector.broadcast %101 : vector<10x1xf32> to vector<10x10xf32>
    %103 = arith.mulf %98, %102 : vector<10x10xf32>
    %104 = arith.truncf %103 : vector<10x10xf32> to vector<10x10xbf16>
    %cst_36 = arith.constant dense<0.000000e+00> : vector<10x16xf32>
    %105 = tpu.matmul %104, %90, %cst_36 {dimension_numbers = #tpu.dot_dimension_numbers<[1], [0], [0], [1], [0, 0, 1, 1], [], []>} : vector<10x10xbf16>, vector<10x16xbf16>, vector<10x16xf32> -> vector<10x16xf32>
    %106 = arith.truncf %105 : vector<10x16xf32> to vector<10x16xbf16>
    %107 = vector.extract_strided_slice %11 {offsets = [32, 0], sizes = [16, 64], strides = [1, 1]} : vector<64x64xbf16> to vector<16x64xbf16>
    %cst_37 = arith.constant dense<0.000000e+00> : vector<10x64xf32>
    %108 = tpu.matmul %106, %107, %cst_37 {dimension_numbers = #tpu.dot_dimension_numbers<[1], [0], [0], [1], [0, 0, 1, 1], [], []>} : vector<10x16xbf16>, vector<16x64xbf16>, vector<10x64xf32> -> vector<10x64xf32>
    %109 = arith.addf %87, %108 : vector<10x64xf32>
    %110 = vector.extract_strided_slice %40 {offsets = [0, 48], sizes = [10, 16], strides = [1, 1]} : vector<10x64xbf16> to vector<10x16xbf16>
    %111 = vector.extract_strided_slice %42 {offsets = [0, 48], sizes = [10, 16], strides = [1, 1]} : vector<10x64xbf16> to vector<10x16xbf16>
    %112 = vector.extract_strided_slice %44 {offsets = [0, 48], sizes = [10, 16], strides = [1, 1]} : vector<10x64xbf16> to vector<10x16xbf16>
    %cst_38 = arith.constant dense<0.000000e+00> : vector<10x10xf32>
    %113 = tpu.matmul %110, %111, %cst_38 {dimension_numbers = #tpu.dot_dimension_numbers<[1], [1], [0], [0], [0, 0, 1, 0], [], []>} : vector<10x16xbf16>, vector<10x16xbf16>, vector<10x10xf32> -> vector<10x10xf32>
    %114 = vector.broadcast %7 : vector<1x10xf32> to vector<10x10xf32>
    %115 = arith.addf %113, %114 : vector<10x10xf32>
    %cst_39 = arith.constant dense<0xFF800000> : vector<10xf32>
    %116 = vector.multi_reduction <maximumf>, %115, %cst_39 [1] : vector<10x10xf32> to vector<10xf32>
    %117 = vector.shape_cast %116 : vector<10xf32> to vector<10x1xf32>
    %118 = vector.broadcast %117 : vector<10x1xf32> to vector<10x10xf32>
    %119 = arith.subf %115, %118 : vector<10x10xf32>
    %120 = math.exp %119 : vector<10x10xf32>
    %cst_40 = arith.constant dense<0.000000e+00> : vector<10xf32>
    %121 = vector.multi_reduction <add>, %120, %cst_40 [1] : vector<10x10xf32> to vector<10xf32>
    %122 = vector.shape_cast %121 : vector<10xf32> to vector<10x1xf32>
    %123 = tpu.reciprocal %122 {approx = true} : vector<10x1xf32> -> vector<10x1xf32>
    %124 = vector.broadcast %123 : vector<10x1xf32> to vector<10x10xf32>
    %125 = arith.mulf %120, %124 : vector<10x10xf32>
    %126 = arith.truncf %125 : vector<10x10xf32> to vector<10x10xbf16>
    %cst_41 = arith.constant dense<0.000000e+00> : vector<10x16xf32>
    %127 = tpu.matmul %126, %112, %cst_41 {dimension_numbers = #tpu.dot_dimension_numbers<[1], [0], [0], [1], [0, 0, 1, 1], [], []>} : vector<10x10xbf16>, vector<10x16xbf16>, vector<10x16xf32> -> vector<10x16xf32>
    %128 = arith.truncf %127 : vector<10x16xf32> to vector<10x16xbf16>
    %129 = vector.extract_strided_slice %11 {offsets = [48, 0], sizes = [16, 64], strides = [1, 1]} : vector<64x64xbf16> to vector<16x64xbf16>
    %cst_42 = arith.constant dense<0.000000e+00> : vector<10x64xf32>
    %130 = tpu.matmul %128, %129, %cst_42 {dimension_numbers = #tpu.dot_dimension_numbers<[1], [0], [0], [1], [0, 0, 1, 1], [], []>} : vector<10x16xbf16>, vector<16x64xbf16>, vector<10x64xf32> -> vector<10x64xf32>
    %131 = arith.addf %109, %130 : vector<10x64xf32>
    %132 = vector.broadcast %12 : vector<1x64xf32> to vector<10x64xf32>
    %133 = arith.addf %131, %132 : vector<10x64xf32>
    %134 = arith.addf %1, %133 : vector<10x64xf32>
    %c0_43 = arith.constant 0 : index
    %c0_44 = arith.constant 0 : index
    %135 = vector.load %arg8[%c0_43, %c0_44] : memref<1x64xf32, #tpu.memory_space<vmem>>, vector<1x64xf32>
    %c0_45 = arith.constant 0 : index
    %c0_46 = arith.constant 0 : index
    %136 = vector.load %arg9[%c0_45, %c0_46] : memref<1x64xf32, #tpu.memory_space<vmem>>, vector<1x64xf32>
    %cst_47 = arith.constant dense<0.000000e+00> : vector<10xf32>
    %137 = vector.multi_reduction <add>, %134, %cst_47 [1] : vector<10x64xf32> to vector<10xf32>
    %138 = vector.shape_cast %137 : vector<10xf32> to vector<10x1xf32>
    %cst_48 = arith.constant 6.400000e+01 : f32
    %139 = vector.broadcast %cst_48 : f32 to vector<10x1xf32>
    %140 = arith.divf %138, %139 : vector<10x1xf32>
    %141 = vector.broadcast %140 : vector<10x1xf32> to vector<10x64xf32>
    %142 = arith.subf %134, %141 : vector<10x64xf32>
    %143 = arith.mulf %142, %142 : vector<10x64xf32>
    %cst_49 = arith.constant dense<0.000000e+00> : vector<10xf32>
    %144 = vector.multi_reduction <add>, %143, %cst_49 [1] : vector<10x64xf32> to vector<10xf32>
    %145 = vector.shape_cast %144 : vector<10xf32> to vector<10x1xf32>
    %cst_50 = arith.constant 6.400000e+01 : f32
    %146 = vector.broadcast %cst_50 : f32 to vector<10x1xf32>
    %147 = arith.divf %145, %146 : vector<10x1xf32>
    %148 = vector.broadcast %140 : vector<10x1xf32> to vector<10x64xf32>
    %149 = arith.subf %134, %148 : vector<10x64xf32>
    %cst_51 = arith.constant 9.99999974E-6 : f32
    %150 = vector.broadcast %cst_51 : f32 to vector<10x1xf32>
    %151 = arith.addf %147, %150 : vector<10x1xf32>
    %152 = math.rsqrt %151 : vector<10x1xf32>
    %153 = vector.broadcast %152 : vector<10x1xf32> to vector<10x64xf32>
    %154 = arith.mulf %149, %153 : vector<10x64xf32>
    %155 = vector.broadcast %135 : vector<1x64xf32> to vector<10x64xf32>
    %156 = arith.mulf %154, %155 : vector<10x64xf32>
    %157 = vector.broadcast %136 : vector<1x64xf32> to vector<10x64xf32>
    %158 = arith.addf %156, %157 : vector<10x64xf32>
    %159 = arith.truncf %158 : vector<10x64xf32> to vector<10x64xbf16>
    %c0_52 = arith.constant 0 : index
    %c0_53 = arith.constant 0 : index
    %160 = vector.load %arg10[%c0_52, %c0_53] : memref<64x256xbf16, #tpu.memory_space<vmem>>, vector<64x256xbf16>
    %cst_54 = arith.constant dense<0.000000e+00> : vector<10x256xf32>
    %161 = tpu.matmul %159, %160, %cst_54 {dimension_numbers = #tpu.dot_dimension_numbers<[1], [0], [0], [1], [0, 0, 1, 1], [], []>} : vector<10x64xbf16>, vector<64x256xbf16>, vector<10x256xf32> -> vector<10x256xf32>
    %c0_55 = arith.constant 0 : index
    %c0_56 = arith.constant 0 : index
    %162 = vector.load %arg11[%c0_55, %c0_56] : memref<1x256xf32, #tpu.memory_space<vmem>>, vector<1x256xf32>
    %163 = vector.broadcast %162 : vector<1x256xf32> to vector<10x256xf32>
    %164 = arith.addf %161, %163 : vector<10x256xf32>
    %165 = arith.mulf %164, %164 : vector<10x256xf32>
    %166 = arith.mulf %164, %165 : vector<10x256xf32>
    %cst_57 = arith.constant 4.471500e-02 : f32
    %167 = vector.broadcast %cst_57 : f32 to vector<10x256xf32>
    %168 = arith.mulf %167, %166 : vector<10x256xf32>
    %169 = arith.addf %164, %168 : vector<10x256xf32>
    %cst_58 = arith.constant 0.797884583 : f32
    %170 = vector.broadcast %cst_58 : f32 to vector<10x256xf32>
    %171 = arith.mulf %170, %169 : vector<10x256xf32>
    %172 = math.tanh %171 : vector<10x256xf32>
    %cst_59 = arith.constant 1.000000e+00 : f32
    %173 = vector.broadcast %cst_59 : f32 to vector<10x256xf32>
    %174 = arith.addf %173, %172 : vector<10x256xf32>
    %cst_60 = arith.constant 5.000000e-01 : f32
    %175 = vector.broadcast %cst_60 : f32 to vector<10x256xf32>
    %176 = arith.mulf %175, %174 : vector<10x256xf32>
    %177 = arith.mulf %164, %176 : vector<10x256xf32>
    %178 = arith.truncf %177 : vector<10x256xf32> to vector<10x256xbf16>
    %c0_61 = arith.constant 0 : index
    %c0_62 = arith.constant 0 : index
    %179 = vector.load %arg12[%c0_61, %c0_62] : memref<256x64xbf16, #tpu.memory_space<vmem>>, vector<256x64xbf16>
    %cst_63 = arith.constant dense<0.000000e+00> : vector<10x64xf32>
    %180 = tpu.matmul %178, %179, %cst_63 {dimension_numbers = #tpu.dot_dimension_numbers<[1], [0], [0], [1], [0, 0, 1, 1], [], []>} : vector<10x256xbf16>, vector<256x64xbf16>, vector<10x64xf32> -> vector<10x64xf32>
    %c0_64 = arith.constant 0 : index
    %c0_65 = arith.constant 0 : index
    %181 = vector.load %arg13[%c0_64, %c0_65] : memref<1x64xf32, #tpu.memory_space<vmem>>, vector<1x64xf32>
    %182 = vector.broadcast %181 : vector<1x64xf32> to vector<10x64xf32>
    %183 = arith.addf %180, %182 : vector<10x64xf32>
    %184 = arith.addf %134, %183 : vector<10x64xf32>
    %c0_66 = arith.constant 0 : index
    %c0_67 = arith.constant 0 : index
    %c0_68 = arith.constant 0 : index
    %185 = vector.load %arg14[%c0_66, %c0_67, %c0_68] : memref<1x10x64xf32, #tpu.memory_space<vmem>>, vector<1x10x64xf32>
    %186 = vector.shape_cast %185 : vector<1x10x64xf32> to vector<10x64xf32>
    %187 = vector.shape_cast %184 : vector<10x64xf32> to vector<1x10x64xf32>
    tpu.vector_store %arg14[%c0_66, %c0_67, %c0_68], %187 {strides = array<i32>} : memref<1x10x64xf32, #tpu.memory_space<vmem>>, vector<1x10x64xf32>,
    return
  }
  func.func @transform_0(%arg0: i32) -> (i32, i32, i32) {
    %c0_i32 = arith.constant 0 : i32
    %c0_i32_0 = arith.constant 0 : i32
    %c0_i32_1 = arith.constant 0 : i32
    return %arg0, %c0_i32, %c0_i32_0 : i32, i32, i32
  }
  func.func @transform_1(%arg0: i32) -> (i32, i32, i32) {
    %c0_i32 = arith.constant 0 : i32
    %c0_i32_0 = arith.constant 0 : i32
    %c0_i32_1 = arith.constant 0 : i32
    return %arg0, %c0_i32, %c0_i32_0 : i32, i32, i32
  }
  func.func @transform_2(%arg0: i32) -> (i32, i32) {
    %c0_i32 = arith.constant 0 : i32
    %c0_i32_0 = arith.constant 0 : i32
    %c0_i32_1 = arith.constant 0 : i32
    return %c0_i32, %c0_i32_0 : i32, i32
  }
  func.func @transform_3(%arg0: i32) -> (i32, i32) {
    %c0_i32 = arith.constant 0 : i32
    %c0_i32_0 = arith.constant 0 : i32
    %c0_i32_1 = arith.constant 0 : i32
    return %c0_i32, %c0_i32_0 : i32, i32
  }
  func.func @transform_4(%arg0: i32) -> (i32, i32) {
    %c0_i32 = arith.constant 0 : i32
    %c0_i32_0 = arith.constant 0 : i32
    %c0_i32_1 = arith.constant 0 : i32
    return %c0_i32, %c0_i32_0 : i32, i32
  }
  func.func @transform_5(%arg0: i32) -> (i32, i32) {
    %c0_i32 = arith.constant 0 : i32
    %c0_i32_0 = arith.constant 0 : i32
    %c0_i32_1 = arith.constant 0 : i32
    return %c0_i32, %c0_i32_0 : i32, i32
  }
  func.func @transform_6(%arg0: i32) -> (i32, i32) {
    %c0_i32 = arith.constant 0 : i32
    %c0_i32_0 = arith.constant 0 : i32
    %c0_i32_1 = arith.constant 0 : i32
    return %c0_i32, %c0_i32_0 : i32, i32
  }
  func.func @transform_7(%arg0: i32) -> (i32, i32) {
    %c0_i32 = arith.constant 0 : i32
    %c0_i32_0 = arith.constant 0 : i32
    %c0_i32_1 = arith.constant 0 : i32
    return %c0_i32, %c0_i32_0 : i32, i32
  }
  func.func @transform_8(%arg0: i32) -> (i32, i32) {
    %c0_i32 = arith.constant 0 : i32
    %c0_i32_0 = arith.constant 0 : i32
    %c0_i32_1 = arith.constant 0 : i32
    return %c0_i32, %c0_i32_0 : i32, i32
  }
  func.func @transform_9(%arg0: i32) -> (i32, i32) {
    %c0_i32 = arith.constant 0 : i32
    %c0_i32_0 = arith.constant 0 : i32
    %c0_i32_1 = arith.constant 0 : i32
    return %c0_i32, %c0_i32_0 : i32, i32
  }
  func.func @transform_10(%arg0: i32) -> (i32, i32) {
    %c0_i32 = arith.constant 0 : i32
    %c0_i32_0 = arith.constant 0 : i32
    %c0_i32_1 = arith.constant 0 : i32
    return %c0_i32, %c0_i32_0 : i32, i32
  }
  func.func @transform_11(%arg0: i32) -> (i32, i32) {
    %c0_i32 = arith.constant 0 : i32
    %c0_i32_0 = arith.constant 0 : i32
    %c0_i32_1 = arith.constant 0 : i32
    return %c0_i32, %c0_i32_0 : i32, i32
  }
  func.func @transform_12(%arg0: i32) -> (i32, i32) {
    %c0_i32 = arith.constant 0 : i32
    %c0_i32_0 = arith.constant 0 : i32
    %c0_i32_1 = arith.constant 0 : i32
    return %c0_i32, %c0_i32_0 : i32, i32
  }
  func.func @transform_13(%arg0: i32) -> (i32, i32, i32) {
    %c0_i32 = arith.constant 0 : i32
    %c0_i32_0 = arith.constant 0 : i32
    %c0_i32_1 = arith.constant 0 : i32
    return %arg0, %c0_i32, %c0_i32_0 : i32, i32, i32
  }
}

module attributes {stable_mosaic.version = 11 : i64} {
  func.func @_linear_bias_kernel(%arg0: i32, %arg1: memref<32x80xbf16, #tpu.memory_space<vmem>>, %arg2: memref<80x64xbf16, #tpu.memory_space<vmem>>, %arg3: memref<1x64xf32, #tpu.memory_space<vmem>>, %arg4: memref<32x64xf32, #tpu.memory_space<vmem>>) attributes {dimension_semantics = [#tpu.dimension_semantics<parallel>], iteration_bounds = array<i64: 1>, scalar_prefetch = 0 : i64, scratch_operands = 0 : i64, tpu.core_type = #tpu.core_type<tc>, window_params = [{transform_indices = @transform_0, window_bounds = array<i64: 32, 80>}, {pipeline_mode = #tpu.pipeline_mode<synchronous>, transform_indices = @transform_1, window_bounds = array<i64: 80, 64>}, {pipeline_mode = #tpu.pipeline_mode<synchronous>, transform_indices = @transform_2, window_bounds = array<i64: 1, 64>}, {transform_indices = @transform_3, window_bounds = array<i64: 32, 64>}]} {
    %c0 = arith.constant 0 : index
    %c0_0 = arith.constant 0 : index
    %0 = vector.load %arg1[%c0, %c0_0] : memref<32x80xbf16, #tpu.memory_space<vmem>>, vector<32x80xbf16>
    %c0_1 = arith.constant 0 : index
    %c0_2 = arith.constant 0 : index
    %1 = vector.load %arg2[%c0_1, %c0_2] : memref<80x64xbf16, #tpu.memory_space<vmem>>, vector<80x64xbf16>
    %cst = arith.constant dense<0.000000e+00> : vector<32x64xf32>
    %2 = tpu.matmul %0, %1, %cst {dimension_numbers = #tpu.dot_dimension_numbers<[1], [0], [0], [1], [0, 0, 1, 1], [], []>} : vector<32x80xbf16>, vector<80x64xbf16>, vector<32x64xf32> -> vector<32x64xf32>
    %c0_3 = arith.constant 0 : index
    %c0_4 = arith.constant 0 : index
    %3 = vector.load %arg3[%c0_3, %c0_4] : memref<1x64xf32, #tpu.memory_space<vmem>>, vector<1x64xf32>
    %4 = vector.broadcast %3 : vector<1x64xf32> to vector<32x64xf32>
    %5 = arith.addf %2, %4 : vector<32x64xf32>
    %c0_5 = arith.constant 0 : index
    %c0_6 = arith.constant 0 : index
    %6 = vector.load %arg4[%c0_5, %c0_6] : memref<32x64xf32, #tpu.memory_space<vmem>>, vector<32x64xf32>
    tpu.vector_store %arg4[%c0_5, %c0_6], %5 {strides = array<i32>} : memref<32x64xf32, #tpu.memory_space<vmem>>, vector<32x64xf32>,
    return
  }
  func.func @transform_0(%arg0: i32) -> (i32, i32) {
    %c0_i32 = arith.constant 0 : i32
    %c0_i32_0 = arith.constant 0 : i32
    return %arg0, %c0_i32 : i32, i32
  }
  func.func @transform_1(%arg0: i32) -> (i32, i32) {
    %c0_i32 = arith.constant 0 : i32
    %c0_i32_0 = arith.constant 0 : i32
    %c0_i32_1 = arith.constant 0 : i32
    return %c0_i32, %c0_i32_0 : i32, i32
  }
  func.func @transform_2(%arg0: i32) -> (i32, i32) {
    %c0_i32 = arith.constant 0 : i32
    %c0_i32_0 = arith.constant 0 : i32
    %c0_i32_1 = arith.constant 0 : i32
    return %c0_i32, %c0_i32_0 : i32, i32
  }
  func.func @transform_3(%arg0: i32) -> (i32, i32) {
    %c0_i32 = arith.constant 0 : i32
    %c0_i32_0 = arith.constant 0 : i32
    return %arg0, %c0_i32 : i32, i32
  }
}

module attributes {stable_mosaic.version = 11 : i64} {
  func.func @_clip_head_kernel(%arg0: i32, %arg1: memref<2x10x64xf32, #tpu.memory_space<vmem>>, %arg2: memref<2x10xf32, #tpu.memory_space<vmem>>, %arg3: memref<2x64xf32, #tpu.memory_space<vmem>>, %arg4: memref<64x64xbf16, #tpu.memory_space<vmem>>, %arg5: memref<1x1xf32, #tpu.memory_space<vmem>>, %arg6: memref<2x1xf32, #tpu.memory_space<vmem>>) attributes {dimension_semantics = [#tpu.dimension_semantics<arbitrary>], iteration_bounds = array<i64: 1>, scalar_prefetch = 0 : i64, scratch_operands = 0 : i64, tpu.core_type = #tpu.core_type<tc>, window_params = [{pipeline_mode = #tpu.pipeline_mode<synchronous>, transform_indices = @transform_0, window_bounds = array<i64: 2, 10, 64>}, {pipeline_mode = #tpu.pipeline_mode<synchronous>, transform_indices = @transform_1, window_bounds = array<i64: 2, 10>}, {pipeline_mode = #tpu.pipeline_mode<synchronous>, transform_indices = @transform_2, window_bounds = array<i64: 2, 64>}, {pipeline_mode = #tpu.pipeline_mode<synchronous>, transform_indices = @transform_3, window_bounds = array<i64: 64, 64>}, {pipeline_mode = #tpu.pipeline_mode<synchronous>, transform_indices = @transform_4, window_bounds = array<i64: 1, 1>}, {pipeline_mode = #tpu.pipeline_mode<synchronous>, transform_indices = @transform_5, window_bounds = array<i64: 2, 1>}]} {
    %c0 = arith.constant 0 : index
    %c0_0 = arith.constant 0 : index
    %c0_1 = arith.constant 0 : index
    %0 = vector.load %arg1[%c0, %c0_0, %c0_1] : memref<2x10x64xf32, #tpu.memory_space<vmem>>, vector<2x10x64xf32>
    %c0_2 = arith.constant 0 : index
    %c0_3 = arith.constant 0 : index
    %1 = vector.load %arg2[%c0_2, %c0_3] : memref<2x10xf32, #tpu.memory_space<vmem>>, vector<2x10xf32>
    %2 = vector.shape_cast %1 : vector<2x10xf32> to vector<2x10x1xf32>
    %3 = vector.broadcast %2 : vector<2x10x1xf32> to vector<2x10x64xf32>
    %4 = arith.mulf %0, %3 : vector<2x10x64xf32>
    %cst = arith.constant dense<0.000000e+00> : vector<2x64xf32>
    %5 = vector.multi_reduction <add>, %4, %cst [1] : vector<2x10x64xf32> to vector<2x64xf32>
    %cst_4 = arith.constant dense<0.000000e+00> : vector<2xf32>
    %6 = vector.multi_reduction <add>, %1, %cst_4 [1] : vector<2x10xf32> to vector<2xf32>
    %7 = vector.shape_cast %6 : vector<2xf32> to vector<2x1xf32>
    %8 = vector.broadcast %7 : vector<2x1xf32> to vector<2x64xf32>
    %9 = arith.divf %5, %8 : vector<2x64xf32>
    %10 = arith.truncf %9 : vector<2x64xf32> to vector<2x64xbf16>
    %c0_5 = arith.constant 0 : index
    %c0_6 = arith.constant 0 : index
    %11 = vector.load %arg4[%c0_5, %c0_6] : memref<64x64xbf16, #tpu.memory_space<vmem>>, vector<64x64xbf16>
    %cst_7 = arith.constant dense<0.000000e+00> : vector<2x64xf32>
    %12 = tpu.matmul %10, %11, %cst_7 {dimension_numbers = #tpu.dot_dimension_numbers<[1], [0], [0], [1], [0, 0, 1, 1], [], []>} : vector<2x64xbf16>, vector<64x64xbf16>, vector<2x64xf32> -> vector<2x64xf32>
    %c0_8 = arith.constant 0 : index
    %c0_9 = arith.constant 0 : index
    %13 = vector.load %arg3[%c0_8, %c0_9] : memref<2x64xf32, #tpu.memory_space<vmem>>, vector<2x64xf32>
    %14 = arith.mulf %12, %12 : vector<2x64xf32>
    %cst_10 = arith.constant dense<0.000000e+00> : vector<2xf32>
    %15 = vector.multi_reduction <add>, %14, %cst_10 [1] : vector<2x64xf32> to vector<2xf32>
    %16 = vector.shape_cast %15 : vector<2xf32> to vector<2x1xf32>
    %cst_11 = arith.constant 1.000000e-24 : f32
    %17 = vector.broadcast %cst_11 : f32 to vector<2x1xf32>
    %18 = arith.maximumf %16, %17 : vector<2x1xf32>
    %19 = math.rsqrt %18 : vector<2x1xf32>
    %20 = vector.broadcast %19 : vector<2x1xf32> to vector<2x64xf32>
    %21 = arith.mulf %12, %20 : vector<2x64xf32>
    %22 = arith.mulf %13, %13 : vector<2x64xf32>
    %cst_12 = arith.constant dense<0.000000e+00> : vector<2xf32>
    %23 = vector.multi_reduction <add>, %22, %cst_12 [1] : vector<2x64xf32> to vector<2xf32>
    %24 = vector.shape_cast %23 : vector<2xf32> to vector<2x1xf32>
    %cst_13 = arith.constant 1.000000e-24 : f32
    %25 = vector.broadcast %cst_13 : f32 to vector<2x1xf32>
    %26 = arith.maximumf %24, %25 : vector<2x1xf32>
    %27 = math.rsqrt %26 : vector<2x1xf32>
    %28 = vector.broadcast %27 : vector<2x1xf32> to vector<2x64xf32>
    %29 = arith.mulf %13, %28 : vector<2x64xf32>
    %c0_14 = arith.constant 0 : index
    %c0_15 = arith.constant 0 : index
    %30 = vector.load %arg5[%c0_14, %c0_15] : memref<1x1xf32, #tpu.memory_space<vmem>>, vector<1x1xf32>
    %31 = math.exp %30 : vector<1x1xf32>
    %32 = arith.mulf %29, %21 : vector<2x64xf32>
    %cst_16 = arith.constant dense<0.000000e+00> : vector<2xf32>
    %33 = vector.multi_reduction <add>, %32, %cst_16 [1] : vector<2x64xf32> to vector<2xf32>
    %34 = vector.shape_cast %33 : vector<2xf32> to vector<2x1xf32>
    %35 = vector.broadcast %31 : vector<1x1xf32> to vector<2x1xf32>
    %36 = arith.mulf %34, %35 : vector<2x1xf32>
    %c0_17 = arith.constant 0 : index
    %c0_18 = arith.constant 0 : index
    %37 = vector.load %arg6[%c0_17, %c0_18] : memref<2x1xf32, #tpu.memory_space<vmem>>, vector<2x1xf32>
    tpu.vector_store %arg6[%c0_17, %c0_18], %36 {strides = array<i32>} : memref<2x1xf32, #tpu.memory_space<vmem>>, vector<2x1xf32>,
    return
  }
  func.func @transform_0(%arg0: i32) -> (i32, i32, i32) {
    %c0_i32 = arith.constant 0 : i32
    %c0_i32_0 = arith.constant 0 : i32
    %c0_i32_1 = arith.constant 0 : i32
    %c0_i32_2 = arith.constant 0 : i32
    return %c0_i32, %c0_i32_0, %c0_i32_1 : i32, i32, i32
  }
  func.func @transform_1(%arg0: i32) -> (i32, i32) {
    %c0_i32 = arith.constant 0 : i32
    %c0_i32_0 = arith.constant 0 : i32
    %c0_i32_1 = arith.constant 0 : i32
    return %c0_i32, %c0_i32_0 : i32, i32
  }
  func.func @transform_2(%arg0: i32) -> (i32, i32) {
    %c0_i32 = arith.constant 0 : i32
    %c0_i32_0 = arith.constant 0 : i32
    %c0_i32_1 = arith.constant 0 : i32
    return %c0_i32, %c0_i32_0 : i32, i32
  }
  func.func @transform_3(%arg0: i32) -> (i32, i32) {
    %c0_i32 = arith.constant 0 : i32
    %c0_i32_0 = arith.constant 0 : i32
    %c0_i32_1 = arith.constant 0 : i32
    return %c0_i32, %c0_i32_0 : i32, i32
  }
  func.func @transform_4(%arg0: i32) -> (i32, i32) {
    %c0_i32 = arith.constant 0 : i32
    %c0_i32_0 = arith.constant 0 : i32
    %c0_i32_1 = arith.constant 0 : i32
    return %c0_i32, %c0_i32_0 : i32, i32
  }
  func.func @transform_5(%arg0: i32) -> (i32, i32) {
    %c0_i32 = arith.constant 0 : i32
    %c0_i32_0 = arith.constant 0 : i32
    %c0_i32_1 = arith.constant 0 : i32
    return %c0_i32, %c0_i32_0 : i32, i32
  }
}

</mosaic_0001>

<llo_original>
// kernel: voice_cond_clip_forward.11
$region0: #{voice_cond_clip_forward.11}
  #allocation0 [shape = 'u32[]', space=smem, size = 0x4, offset = 0x4, fixed_abs, tag = 'smem constant byte address 0x4 - core index']
  #allocation1 [shape = 'u32[72,128]{1,0:T(1,128)}', space=vmem, size = 0x9000, scoped, tag = 'internal scratch']
  #allocation2 [shape = 'f32[1,1]{1,0:T(1,128)S(1)}', space=vmem, size = 0x200, scoped, tag = 'scoped memory for voice_cond_clip_forward.11']
  %s0 = inlined_call_operand.vmem [shape: f32[2,10,64], index: 0, kind: input, shape index: {}]
  %s1 = inlined_call_operand.vmem [shape: f32[2,10], index: 1, kind: input, shape index: {}]
  %s2 = inlined_call_operand.vmem [shape: f32[2,64], index: 2, kind: input, shape index: {}]
  %s3 = inlined_call_operand.vmem [shape: bf16[64,64], index: 3, kind: input, shape index: {}]
  %s4 = inlined_call_operand.<no memory space> [shape: f32[1,1], index: 4, kind: input, shape index: {}]
  %s5 = inlined_call_operand.vmem [shape: f32[2,1], index: 5, kind: output, shape index: {}]
  %s6 = sld [smem:[#allocation0]]
  $region30: #{voice_cond_clip_forward.11} parent=0
    _
  %s8 = ssub.s32 1, %s6
  %s9 = scalar_select 0, %s8, %s6
  %v10 = vstv %s4
  %11 = vst [vmem:[#allocation2] sm:$0x1] %v10
  // Predicated region
  $region2: #{voice_cond_clip_forward.11} parent=0 // pred_check
    _
  $region3: #{voice_cond_clip_forward.11} parent=0 // pred_check_branch
    %13 = sbr.rel (0) target = $region5
  $region4: #{voice_cond_clip_forward.11} parent=0 // pred_region
    _
  $region5: #{voice_cond_clip_forward.11} parent=0 // pred_fallthru
    _
  // Predicated region
  $region6: #{voice_cond_clip_forward.11} parent=0 // pred_check
    _
  $region7: #{voice_cond_clip_forward.11} parent=0 // pred_check_branch
    %15 = sbr.rel (0) target = $region9
  $region8: #{voice_cond_clip_forward.11} parent=0 // pred_region
    _
  $region9: #{voice_cond_clip_forward.11} parent=0 // pred_fallthru
    _
  // Predicated region
  $region10: #{voice_cond_clip_forward.11} parent=0 // pred_check
    _
  $region11: #{voice_cond_clip_forward.11} parent=0 // pred_check_branch
    %17 = sbr.rel (0) target = $region13
  $region12: #{voice_cond_clip_forward.11} parent=0 // pred_region
    _
  $region13: #{voice_cond_clip_forward.11} parent=0 // pred_fallthru
    _
  // Predicated region
  $region14: #{voice_cond_clip_forward.11} parent=0 // pred_check
    _
  $region15: #{voice_cond_clip_forward.11} parent=0 // pred_check_branch
    %19 = sbr.rel (0) target = $region17
  $region16: #{voice_cond_clip_forward.11} parent=0 // pred_region
    _
  $region17: #{voice_cond_clip_forward.11} parent=0 // pred_fallthru
    _
  // Predicated region
  $region18: #{voice_cond_clip_forward.11} parent=0 // pred_check
    _
  $region19: #{voice_cond_clip_forward.11} parent=0 // pred_check_branch
    %21 = sbr.rel (0) target = $region21
  $region20: #{voice_cond_clip_forward.11} parent=0 // pred_region
    _
  $region21: #{voice_cond_clip_forward.11} parent=0 // pred_fallthru
    _
  %v23 = vld [vmem:[%s0] sm:$0xff]
  %v24 = vld [vmem:[%s0 + $0x8] sm:$0x3]
  %v25 = vld [vmem:[%s0 + $0x10] sm:$0xff]
  %v26 = vld [vmem:[%s0 + $0x18] sm:$0x3]
  %v27 = vld [vmem:[%s1] sm:$0x3]
  %v28 = vperm.slane %v27, 0
  %v29 = vlaneseq
  %v30 = vshrl.u32 %v29, 7
  %32 = vset.pattern.permute.xlu0 %v30
  %33 = vperm.xlu0 %32, %v28
  %v34 = vpop.permute.xlu0 %33
  %v35 = vlaneseq
  %v36 = vshrl.u32 %v35, 7
  %v37 = vadd.s32 %v36, 8
  %38 = vset.pattern.permute.xlu0 %v37
  %39 = vperm.xlu0 %38, %v28
  %v40 = vpop.permute.xlu0 %39
  %v41 = vperm.slane %v27, 1
  %v42 = vlaneseq
  %v43 = vshrl.u32 %v42, 7
  %45 = vset.pattern.permute.xlu0 %v43
  %46 = vperm.xlu0 %45, %v41
  %v47 = vpop.permute.xlu0 %46
  %v48 = vlaneseq
  %v49 = vshrl.u32 %v48, 7
  %v50 = vadd.s32 %v49, 8
  %51 = vset.pattern.permute.xlu0 %v50
  %52 = vperm.xlu0 %51, %v41
  %v53 = vpop.permute.xlu0 %52
  %v54 = vmul.f32 %v23, %v34
  %v55 = vmul.f32 %v24, %v40
  %v56 = vmul.f32 %v25, %v47
  %v57 = vmul.f32 %v26, %v53
  %vm58 = vcmask 523264
  %v59 = vsel %vm58, %v54, 0.0
  %vm60 = vcmask 517120
  %v61 = vsel %vm60, %v55, 0.0
  %v62 = vadd.f32 %v59, %v61
  %v63 = vrot.slane %v62, 4
  %v64 = vadd.f32 %v62, %v63
  %v65 = vrot.slane %v64, 2
  %v66 = vadd.f32 %v64, %v65
  %v67 = vrot.slane %v66, 1
  %v68 = vadd.f32 %v66, %v67
  %v69 = vsel %vm58, %v56, 0.0
  %v70 = vsel %vm60, %v57, 0.0
  %v71 = vadd.f32 %v69, %v70
  %v72 = vrot.slane %v71, 4
  %v73 = vadd.f32 %v71, %v72
  %v74 = vrot.slane %v73, 2
  %v75 = vadd.f32 %v73, %v74
  %v76 = vrot.slane %v75, 1
  %v77 = vadd.f32 %v75, %v76
  %vm78 = vcmask 74752
  %v79 = vsel %vm78, %v27, 0.0
  %80 = vadd.xlane.f32.xlu0 %v79
  %v81 = vpop.xlane.xlu0 %80
  %v83 = vrot.slane %v81, 1
  %v86 = vrcp.pop %v81
  %v87 = vmul.f32 %v81, %v86
  %v88 = vsub.f32 1.0, %v87
  %v89 = vmul.f32 %v86, %v88
  %v90 = vadd.f32 %v86, %v89
  %vm91 = vweird.f32 %v81
  %vm92 = vweird.f32 %v86
  %vm93 = vmor %vm91, %vm92
  %v94 = vsel %vm93, %v86, %v90
  %v95 = vand.u32 2147483647, %v81
  %vm96 = vcmp.eq.f32.partialorder %v95, 8.507059e+37
  %v97 = vand.u32 %v81, 2147483648
  %v98 = vor.u32 1.1754944e-38, %v97
  %v99 = vsel %vm96, %v98, %v94
  %v100 = vmul.f32 %v68, %v99
  %v101 = vrcp.pop %v83
  %v102 = vmul.f32 %v83, %v101
  %v103 = vsub.f32 1.0, %v102
  %v104 = vmul.f32 %v101, %v103
  %v105 = vadd.f32 %v101, %v104
  %vm106 = vweird.f32 %v83
  %vm107 = vweird.f32 %v101
  %vm108 = vmor %vm106, %vm107
  %v109 = vsel %vm108, %v101, %v105
  %v110 = vand.u32 2147483647, %v83
  %vm111 = vcmp.eq.f32.partialorder %v110, 8.507059e+37
  %v112 = vand.u32 %v83, 2147483648
  %v113 = vor.u32 1.1754944e-38, %v112
  %v114 = vsel %vm111, %v113, %v109
  %v115 = vmul.f32 %v77, %v114
  %v116 = vpack.c.bf16 %v100, %v100
  %v117 = vpack.c.bf16 %v115, %v115
  %v118 = vld [vmem:[%s3] sm:$0xf]
  %v119 = vld [vmem:[%s3 + $0x4] sm:$0xf]
  %v120 = vld [vmem:[%s3 + $0x8] sm:$0xf]
  %v121 = vld [vmem:[%s3 + $0xc] sm:$0xf]
  %v122 = vld [vmem:[%s3 + $0x10] sm:$0xf]
  %v123 = vld [vmem:[%s3 + $0x14] sm:$0xf]
  %v124 = vld [vmem:[%s3 + $0x18] sm:$0xf]
  %v125 = vld [vmem:[%s3 + $0x1c] sm:$0xf]
  %v128 = vunpack.c.l.b16 %v116
  %v129 = vunpack.c.l.b16 %v117
  %v130 = vrot.slane %v129, 7
  %vm131 = vcmask 1041409
  %v132 = vsel %vm131, %v130, %v128
  %v133 = vpack.c.b16 %v132, %v132
  %v142 = vunpack.c.l.b16 %v118
  %v143 = vunpack.c.l.b16 %v119
  %v144 = vunpack.c.l.b16 %v120
  %v145 = vunpack.c.l.b16 %v121
  %v146 = vunpack.c.l.b16 %v122
  %v147 = vunpack.c.l.b16 %v123
  %v148 = vunpack.c.l.b16 %v124
  %v149 = vunpack.c.l.b16 %v125
  %v150 = vpack.c.b16 %v143, %v142
  %v151 = vpack.c.b16 %v145, %v144
  %v152 = vpack.c.b16 %v147, %v146
  %v153 = vpack.c.b16 %v149, %v148
  %v159 = vsel %vm58, %v133, 0
  %161 = vmatpush.bf16.msra.mxu0 0
  %162 = vmatpush.bf16.msra.mxu0 0
  %163 = vmatpush.bf16.msra.mxu0 0
  %164 = vmatpush.bf16.msra.mxu0 0
  %165 = vmatpush.bf16.msra.mxu0 %v153
  %166 = vmatpush.bf16.msra.mxu0 %v152
  %167 = vmatpush.bf16.msra.mxu0 %v151
  %168 = vmatpush.bf16.msra.mxu0 %v150
  %169 = vmatmul.bf16.gmra.mxu0 %v159
  %v170 = vpop.f32.mrf.mxu0
  %v171 = vadd.f32 0.0, %v170
  %v172 = vpop.f32.mrf.mxu0
  %173 = vdwg.mxu0
  %v174 = vld [vmem:[%s2] sm:$0x3]
  %v175 = vmul.f32 %v171, %v171
  %v176 = vsel %vm60, %v175, 0.0
  %177 = vadd.xlane.f32.xlu0 %v176
  %v178 = vpop.xlane.xlu0 %177
  %v179 = vmax.f32 %v178, 1e-24
  %v180 = vrsqrt.pop %v179
  %v181 = vmul.f32 %v180, %v179
  %v182 = vmul.f32 %v181, %v180
  %v183 = vmul.f32 0.5, %v182
  %v184 = vsub.f32 1.5, %v183
  %v185 = vmul.f32 %v180, %v184
  %vm186 = vweird.f32 %v179
  %vm187 = vweird.f32 %v180
  %vm188 = vmor %vm186, %vm187
  %v189 = vsel %vm188, %v180, %v185
  %v190 = vmul.f32 %v171, %v189
  %v191 = vmul.f32 %v174, %v174
  %v192 = vsel %vm60, %v191, 0.0
  %193 = vadd.xlane.f32.xlu0 %v192
  %v194 = vpop.xlane.xlu0 %193
  %v195 = vmax.f32 %v194, 1e-24
  %v196 = vrsqrt.pop %v195
  %v197 = vmul.f32 %v196, %v195
  %v198 = vmul.f32 %v197, %v196
  %v199 = vmul.f32 0.5, %v198
  %v200 = vsub.f32 1.5, %v199
  %v201 = vmul.f32 %v196, %v200
  %vm202 = vweird.f32 %v195
  %vm203 = vweird.f32 %v196
  %vm204 = vmor %vm202, %vm203
  %v205 = vsel %vm204, %v196, %v201
  %v206 = vmul.f32 %v174, %v205
  %v207 = vld [vmem:[#allocation2] sm:$0x1]
  %v208 = vmul.f32 %v207, 1.442695
  %v209 = vpow.pop %v208
  %v210 = vmul.f32 %v206, %v190
  %v211 = vsel %vm60, %v210, 0.0
  %212 = vadd.xlane.f32.xlu0 %v211
  %v213 = vpop.xlane.xlu0 %212
  %v215 = vperm.slane %v209, 0
  %v217 = vmul.f32 %v213, %v215
  %vm218 = vcmask 1024
  %219 = vst.msk [vmem:[%s5] sm:$0x3] %vm218, %v217
  // Predicated region
  $region22: #{voice_cond_clip_forward.11} parent=0 // pred_check
    _
  $region23: #{voice_cond_clip_forward.11} parent=0 // pred_check_branch
    %221 = sbr.rel (0) target = $region25
  $region24: #{voice_cond_clip_forward.11} parent=0 // pred_region
    _
  $region25: #{voice_cond_clip_forward.11} parent=0 // pred_fallthru
    _
  // Predicated region
  $region26: #{voice_cond_clip_forward.11} parent=0 // pred_check
    _
  $region27: #{voice_cond_clip_forward.11} parent=0 // pred_check_branch
    %223 = sbr.rel (0) target = $region29
  $region28: #{voice_cond_clip_forward.11} parent=0 // pred_region
    _
  $region29: #{voice_cond_clip_forward.11} parent=0 // pred_fallthru
    _

// kernel: voice_cond_clip_forward.6
$region0: #{voice_cond_clip_forward.6}
  #allocation0 [shape = 'u32[]', space=smem, size = 0x4, offset = 0x4, fixed_abs, tag = 'smem constant byte address 0x4 - core index']
  #allocation1 [shape = 'u32[72,128]{1,0:T(1,128)}', space=vmem, size = 0x9000, scoped, tag = 'internal scratch']
  %s0 = inlined_call_operand.vmem [shape: bf16[32,80], index: 0, kind: input, shape index: {}]
  %s1 = inlined_call_operand.vmem [shape: bf16[80,64], index: 1, kind: input, shape index: {}]
  %s2 = inlined_call_operand.vmem [shape: f32[1,64], index: 2, kind: input, shape index: {}]
  %s3 = inlined_call_operand.vmem [shape: f32[32,64], index: 3, kind: output, shape index: {}]
  %s4 = sld [smem:[#allocation0]]
  $region22: #{voice_cond_clip_forward.6} parent=0
    _
  %s6 = ssub.s32 1, %s4
  %s7 = scalar_select 0, %s6, %s4
  // Predicated region
  $region2: #{voice_cond_clip_forward.6} parent=0 // pred_check
    _
  $region3: #{voice_cond_clip_forward.6} parent=0 // pred_check_branch
    %9 = sbr.rel (0) target = $region5
  $region4: #{voice_cond_clip_forward.6} parent=0 // pred_region
    _
  $region5: #{voice_cond_clip_forward.6} parent=0 // pred_fallthru
    _
  // Predicated region
  $region6: #{voice_cond_clip_forward.6} parent=0 // pred_check
    _
  $region7: #{voice_cond_clip_forward.6} parent=0 // pred_check_branch
    %11 = sbr.rel (0) target = $region9
  $region8: #{voice_cond_clip_forward.6} parent=0 // pred_region
    _
  $region9: #{voice_cond_clip_forward.6} parent=0 // pred_fallthru
    _
  // Predicated region
  $region10: #{voice_cond_clip_forward.6} parent=0 // pred_check
    _
  $region11: #{voice_cond_clip_forward.6} parent=0 // pred_check_branch
    %13 = sbr.rel (0) target = $region13
  $region12: #{voice_cond_clip_forward.6} parent=0 // pred_region
    _
  $region13: #{voice_cond_clip_forward.6} parent=0 // pred_fallthru
    _
  %v15 = vld [vmem:[%s0] sm:$0xf]
  %v16 = vld [vmem:[%s0 + $0x4] sm:$0xf]
  %v17 = vld [vmem:[%s0 + $0x8] sm:$0xf]
  %v18 = vld [vmem:[%s0 + $0xc] sm:$0xf]
  %v19 = vld [vmem:[%s1] sm:$0xf]
  %v20 = vld [vmem:[%s1 + $0x4] sm:$0xf]
  %v21 = vld [vmem:[%s1 + $0x8] sm:$0xf]
  %v22 = vld [vmem:[%s1 + $0xc] sm:$0xf]
  %v23 = vld [vmem:[%s1 + $0x10] sm:$0xf]
  %v24 = vld [vmem:[%s1 + $0x14] sm:$0xf]
  %v25 = vld [vmem:[%s1 + $0x18] sm:$0xf]
  %v26 = vld [vmem:[%s1 + $0x1c] sm:$0xf]
  %v27 = vld [vmem:[%s1 + $0x20] sm:$0xf]
  %v28 = vld [vmem:[%s1 + $0x24] sm:$0xf]
  %v29 = vld [vmem:[%s2] sm:$0x1]
  %v31 = vperm.slane %v29, 0
  %v37 = vunpack.c.l.b16 %v15
  %v38 = vunpack.c.l.b16 %v16
  %v39 = vunpack.c.l.b16 %v17
  %v40 = vunpack.c.l.b16 %v18
  %v41 = vpack.c.b16 %v38, %v37
  %v42 = vpack.c.b16 %v40, %v39
  %v53 = vunpack.c.l.b16 %v19
  %v54 = vunpack.c.l.b16 %v20
  %v55 = vunpack.c.l.b16 %v21
  %v56 = vunpack.c.l.b16 %v22
  %v57 = vunpack.c.l.b16 %v23
  %v58 = vunpack.c.l.b16 %v24
  %v59 = vunpack.c.l.b16 %v25
  %v60 = vunpack.c.l.b16 %v26
  %v61 = vunpack.c.l.b16 %v27
  %v62 = vunpack.c.l.b16 %v28
  %v63 = vpack.c.b16 %v54, %v53
  %v64 = vpack.c.b16 %v56, %v55
  %v65 = vpack.c.b16 %v58, %v57
  %v66 = vpack.c.b16 %v60, %v59
  %v67 = vpack.c.b16 %v62, %v61
  %vm73 = vcmask 654336
  %v75 = vsel %vm73, %v41, 0
  %v78 = vsel %vm73, %v42, 0
  %80 = vmatpush.bf16.msra.mxu0 0
  %81 = vmatpush.bf16.msra.mxu0 0
  %82 = vmatpush.bf16.msra.mxu0 0
  %83 = vmatpush.bf16.msra.mxu0 %v67
  %84 = vmatpush.bf16.msra.mxu0 %v66
  %85 = vmatpush.bf16.msra.mxu0 %v65
  %86 = vmatpush.bf16.msra.mxu0 %v64
  %87 = vmatpush.bf16.msra.mxu0 %v63
  %88 = vmatmul.bf16.gmra.mxu0 %v75
  %v89 = vpop.f32.mrf.mxu0
  %v90 = vadd.f32 %v31, %v89
  %v91 = vpop.f32.mrf.mxu0
  %v92 = vadd.f32 %v31, %v91
  %93 = vmatmul.bf16.gmra.mxu0 %v78
  %v94 = vpop.f32.mrf.mxu0
  %v95 = vadd.f32 %v31, %v94
  %v96 = vpop.f32.mrf.mxu0
  %v97 = vadd.f32 %v31, %v96
  %98 = vdwg.mxu0
  %vm99 = vcmask 523264
  %100 = vst.msk [vmem:[%s3] sm:$0xff] %vm99, %v90
  %101 = vst.msk [vmem:[%s3 + $0x8] sm:$0xff] %vm99, %v92
  %102 = vst.msk [vmem:[%s3 + $0x10] sm:$0xff] %vm99, %v95
  %103 = vst.msk [vmem:[%s3 + $0x18] sm:$0xff] %vm99, %v97
  // Predicated region
  $region14: #{voice_cond_clip_forward.6} parent=0 // pred_check
    _
  $region15: #{voice_cond_clip_forward.6} parent=0 // pred_check_branch
    %105 = sbr.rel (0) target = $region17
  $region16: #{voice_cond_clip_forward.6} parent=0 // pred_region
    _
  $region17: #{voice_cond_clip_forward.6} parent=0 // pred_fallthru
    _
  // Predicated region
  $region18: #{voice_cond_clip_forward.6} parent=0 // pred_check
    _
  $region19: #{voice_cond_clip_forward.6} parent=0 // pred_check_branch
    %107 = sbr.rel (0) target = $region21
  $region20: #{voice_cond_clip_forward.6} parent=0 // pred_region
    _
  $region21: #{voice_cond_clip_forward.6} parent=0 // pred_fallthru
    _

// kernel: voice_cond_clip_forward.7
$region0: #{voice_cond_clip_forward.7}
  #allocation0 [shape = 'u32[]', space=smem, size = 0x4, offset = 0x4, fixed_abs, tag = 'smem constant byte address 0x4 - core index']
  #allocation1 [shape = 'u32[72,128]{1,0:T(1,128)}', space=vmem, size = 0x9000, scoped, tag = 'internal scratch']
  %s0 = inlined_call_operand.vmem [shape: f32[2,16,64], index: 0, kind: input, shape index: {}]
  %s1 = inlined_call_operand.vmem [shape: f32[1,64], index: 1, kind: input, shape index: {}]
  %s2 = inlined_call_operand.vmem [shape: f32[1,64], index: 2, kind: input, shape index: {}]
  %s3 = inlined_call_operand.vmem [shape: bf16[64,192], index: 3, kind: input, shape index: {}]
  %s4 = inlined_call_operand.vmem [shape: bf16[64,64], index: 4, kind: input, shape index: {}]
  %s5 = inlined_call_operand.vmem [shape: f32[1,64], index: 5, kind: input, shape index: {}]
  %s6 = inlined_call_operand.vmem [shape: f32[2,16,64], index: 6, kind: output, shape index: {}]
  %s7 = sld [smem:[#allocation0]]
  $region57: #{voice_cond_clip_forward.7} parent=0
    _
  %s9 = ssub.s32 1, %s7
  %s10 = scalar_select 0, %s9, %s7
  loop: start=0, step=1, limit=4
  $region2: #{voice_cond_clip_forward.7} parent=0 // loop_pre_header
    _
  $region3: #{voice_cond_clip_forward.7} parent=0 // loop_header
    %s12 = sphi 0, %s16
    %p13 = scmp.ge.s32.totalorder %s12, 4
    %s22 = sphi 0, %s24
    %s25 = sphi 0, %s22
    %s26 = sphi 0, %s25
    %s42 = sphi 0, %s26
    %s46 = sphi 0, %s46
    %s48 = sphi 0, %s46
    %s49 = sphi 0, %s48
    %s63 = sphi 0, %s49
    %s67 = sphi 0, %s67
    %s69 = sphi 0, %s67
    %s70 = sphi 0, %s69
    %s84 = sphi 0, %s70
    %s88 = sphi 0, %s88
    %s90 = sphi 0, %s88
    %s91 = sphi 0, %s90
    %s105 = sphi 0, %s91
    %s109 = sphi 0, %s109
    %s111 = sphi 0, %s109
    %s112 = sphi 0, %s111
    %s126 = sphi 0, %s112
    %s130 = sphi 0, %s130
    %s132 = sphi 0, %s130
    %s133 = sphi 0, %s132
    %s147 = sphi 0, %s133
    %s153 = sphi 0, %s155
    %s156 = sphi 0, %s153
    %s157 = sphi 0, %s156
    %s173 = sphi 0, %s157
  $region4: #{voice_cond_clip_forward.7} parent=0 // loop_header_branch
    %15 = sbr.rel (%p13) target = $region8
  $region5: #{voice_cond_clip_forward.7} parent=0 // loop_body
    %s17 = ssub.s32 %s12, 1
    %s18 = ssub.s32 %s12, 2
    %s19 = sadd.s32 %s12, 1
    %s20 = ssub.s32 %s12, %s19
    %p21 = scmp.eq.s32.totalorder %s20, 0
    %s23 = sadd.s32 %s22, 1
    %s24 = scalar_select %p21, %s22, %s23
    %p27 = pneg %p21
    %p28 = scmp.eq.s32.totalorder %s12, 1
    %p29 = por %p27, %p28
    %p30 = scmp.ne.s32.totalorder %s22, %s25
    %p31 = scmp.eq.s32.totalorder %s12, 0
    %p32 = por %p30, %p31
    %p33 = scmp.ne.s32.totalorder %s22, %s25
    %p34 = scmp.eq.s32.totalorder %s17, 1
    %p35 = por %p33, %p34
    %p36 = scmp.ne.s32.totalorder %s25, %s26
    %p37 = scmp.eq.s32.totalorder %s17, 0
    %p38 = por %p36, %p37
    %p39 = scmp.ne.s32.totalorder %s25, %s26
    %p40 = scmp.eq.s32.totalorder %s18, 1
    %p41 = por %p39, %p40
    %p43 = scmp.ne.s32.totalorder %s26, %s42
    %p44 = scmp.eq.s32.totalorder %s18, 0
    %p45 = por %p43, %p44
    %s47 = sadd.s32 %s46, 1
    %p50 = scmp.eq.s32.totalorder %s12, 1
    %p51 = scmp.ne.s32.totalorder %s46, %s48
    %p52 = scmp.eq.s32.totalorder %s12, 0
    %p53 = por %p51, %p52
    %p54 = scmp.ne.s32.totalorder %s46, %s48
    %p55 = scmp.eq.s32.totalorder %s17, 1
    %p56 = por %p54, %p55
    %p57 = scmp.ne.s32.totalorder %s48, %s49
    %p58 = scmp.eq.s32.totalorder %s17, 0
    %p59 = por %p57, %p58
    %p60 = scmp.ne.s32.totalorder %s48, %s49
    %p61 = scmp.eq.s32.totalorder %s18, 1
    %p62 = por %p60, %p61
    %p64 = scmp.ne.s32.totalorder %s49, %s63
    %p65 = scmp.eq.s32.totalorder %s18, 0
    %p66 = por %p64, %p65
    %s68 = sadd.s32 %s67, 1
    %p71 = scmp.eq.s32.totalorder %s12, 1
    %p72 = scmp.ne.s32.totalorder %s67, %s69
    %p73 = scmp.eq.s32.totalorder %s12, 0
    %p74 = por %p72, %p73
    %p75 = scmp.ne.s32.totalorder %s67, %s69
    %p76 = scmp.eq.s32.totalorder %s17, 1
    %p77 = por %p75, %p76
    %p78 = scmp.ne.s32.totalorder %s69, %s70
    %p79 = scmp.eq.s32.totalorder %s17, 0
    %p80 = por %p78, %p79
    %p81 = scmp.ne.s32.totalorder %s69, %s70
    %p82 = scmp.eq.s32.totalorder %s18, 1
    %p83 = por %p81, %p82
    %p85 = scmp.ne.s32.totalorder %s70, %s84
    %p86 = scmp.eq.s32.totalorder %s18, 0
    %p87 = por %p85, %p86
    %s89 = sadd.s32 %s88, 1
    %p92 = scmp.eq.s32.totalorder %s12, 1
    %p93 = scmp.ne.s32.totalorder %s88, %s90
    %p94 = scmp.eq.s32.totalorder %s12, 0
    %p95 = por %p93, %p94
    %p96 = scmp.ne.s32.totalorder %s88, %s90
    %p97 = scmp.eq.s32.totalorder %s17, 1
    %p98 = por %p96, %p97
    %p99 = scmp.ne.s32.totalorder %s90, %s91
    %p100 = scmp.eq.s32.totalorder %s17, 0
    %p101 = por %p99, %p100
    %p102 = scmp.ne.s32.totalorder %s90, %s91
    %p103 = scmp.eq.s32.totalorder %s18, 1
    %p104 = por %p102, %p103
    %p106 = scmp.ne.s32.totalorder %s91, %s105
    %p107 = scmp.eq.s32.totalorder %s18, 0
    %p108 = por %p106, %p107
    %s110 = sadd.s32 %s109, 1
    %p113 = scmp.eq.s32.totalorder %s12, 1
    %p114 = scmp.ne.s32.totalorder %s109, %s111
    %p115 = scmp.eq.s32.totalorder %s12, 0
    %p116 = por %p114, %p115
    %p117 = scmp.ne.s32.totalorder %s109, %s111
    %p118 = scmp.eq.s32.totalorder %s17, 1
    %p119 = por %p117, %p118
    %p120 = scmp.ne.s32.totalorder %s111, %s112
    %p121 = scmp.eq.s32.totalorder %s17, 0
    %p122 = por %p120, %p121
    %p123 = scmp.ne.s32.totalorder %s111, %s112
    %p124 = scmp.eq.s32.totalorder %s18, 1
    %p125 = por %p123, %p124
    %p127 = scmp.ne.s32.totalorder %s112, %s126
    %p128 = scmp.eq.s32.totalorder %s18, 0
    %p129 = por %p127, %p128
    %s131 = sadd.s32 %s130, 1
    %p134 = scmp.eq.s32.totalorder %s12, 1
    %p135 = scmp.ne.s32.totalorder %s130, %s132
    %p136 = scmp.eq.s32.totalorder %s12, 0
    %p137 = por %p135, %p136
    %p138 = scmp.ne.s32.totalorder %s130, %s132
    %p139 = scmp.eq.s32.totalorder %s17, 1
    %p140 = por %p138, %p139
    %p141 = scmp.ne.s32.totalorder %s132, %s133
    %p142 = scmp.eq.s32.totalorder %s17, 0
    %p143 = por %p141, %p142
    %p144 = scmp.ne.s32.totalorder %s132, %s133
    %p145 = scmp.eq.s32.totalorder %s18, 1
    %p146 = por %p144, %p145
    %p148 = scmp.ne.s32.totalorder %s133, %s147
    %p149 = scmp.eq.s32.totalorder %s18, 0
    %p150 = por %p148, %p149
    %s151 = ssub.s32 %s12, %s19
    %p152 = scmp.eq.s32.totalorder %s151, 0
    %s154 = sadd.s32 %s153, 1
    %s155 = scalar_select %p152, %s153, %s154
    %p158 = pneg %p152
    %p159 = scmp.eq.s32.totalorder %s12, 1
    %p160 = por %p158, %p159
    %p161 = scmp.ne.s32.totalorder %s153, %s156
    %p162 = scmp.eq.s32.totalorder %s12, 0
    %p163 = por %p161, %p162
    %p164 = scmp.ne.s32.totalorder %s153, %s156
    %p165 = scmp.eq.s32.totalorder %s17, 1
    %p166 = por %p164, %p165
    %p167 = scmp.ne.s32.totalorder %s156, %s157
    %p168 = scmp.eq.s32.totalorder %s17, 0
    %p169 = por %p167, %p168
    %p170 = scmp.ne.s32.totalorder %s156, %s157
    %p171 = scmp.eq.s32.totalorder %s18, 1
    %p172 = por %p170, %p171
    %p174 = scmp.ne.s32.totalorder %s157, %s173
    %p175 = scmp.eq.s32.totalorder %s18, 0
    %p176 = por %p174, %p175
    %p177 = scmp.le.s32.totalorder 1, %s12
    %p178 = scmp.lt.s32.totalorder %s12, 3
    %p179 = pnand %p177, %p178
    %p180 = pneg %p179
    // Predicated region
    $region9: #{voice_cond_clip_forward.7} parent=5 // pred_check
      _
    $region10: #{voice_cond_clip_forward.7} parent=5 // pred_check_branch
      %182 = sbr.rel (%p179) target = $region12
    $region11: #{voice_cond_clip_forward.7} parent=5 // pred_region
      %s183 = ssub.s32 %s12, 1
      // Predicated region
      $region13: #{voice_cond_clip_forward.7} parent=11 // pred_check
        %p184 = pneg %p59
      $region14: #{voice_cond_clip_forward.7} parent=11 // pred_check_branch
        %186 = sbr.rel (%p184) target = $region16
      $region15: #{voice_cond_clip_forward.7} parent=11 // pred_region
        _
      $region16: #{voice_cond_clip_forward.7} parent=11 // pred_fallthru
        _
      // Predicated region
      $region17: #{voice_cond_clip_forward.7} parent=11 // pred_check
        %p187 = pneg %p80
      $region18: #{voice_cond_clip_forward.7} parent=11 // pred_check_branch
        %189 = sbr.rel (%p187) target = $region20
      $region19: #{voice_cond_clip_forward.7} parent=11 // pred_region
        _
      $region20: #{voice_cond_clip_forward.7} parent=11 // pred_fallthru
        _
      // Predicated region
      $region21: #{voice_cond_clip_forward.7} parent=11 // pred_check
        %p190 = pneg %p101
      $region22: #{voice_cond_clip_forward.7} parent=11 // pred_check_branch
        %192 = sbr.rel (%p190) target = $region24
      $region23: #{voice_cond_clip_forward.7} parent=11 // pred_region
        _
      $region24: #{voice_cond_clip_forward.7} parent=11 // pred_fallthru
        _
      // Predicated region
      $region25: #{voice_cond_clip_forward.7} parent=11 // pred_check
        %p193 = pneg %p122
      $region26: #{voice_cond_clip_forward.7} parent=11 // pred_check_branch
        %195 = sbr.rel (%p193) target = $region28
      $region27: #{voice_cond_clip_forward.7} parent=11 // pred_region
        _
      $region28: #{voice_cond_clip_forward.7} parent=11 // pred_fallthru
        _
      // Predicated region
      $region29: #{voice_cond_clip_forward.7} parent=11 // pred_check
        %p196 = pneg %p143
      $region30: #{voice_cond_clip_forward.7} parent=11 // pred_check_branch
        %198 = sbr.rel (%p196) target = $region32
      $region31: #{voice_cond_clip_forward.7} parent=11 // pred_region
        _
      $region32: #{voice_cond_clip_forward.7} parent=11 // pred_fallthru
        _
    $region12: #{voice_cond_clip_forward.7} parent=5 // pred_fallthru
      _
    %p199 = scmp.lt.s32.totalorder %s12, 2
    // Predicated region
    $region33: #{voice_cond_clip_forward.7} parent=5 // pred_check
      %p200 = pneg %p199
    $region34: #{voice_cond_clip_forward.7} parent=5 // pred_check_branch
      %202 = sbr.rel (%p200) target = $region36
    $region35: #{voice_cond_clip_forward.7} parent=5 // pred_region
      // Predicated region
      $region37: #{voice_cond_clip_forward.7} parent=35 // pred_check
        %p203 = pneg %p32
      $region38: #{voice_cond_clip_forward.7} parent=35 // pred_check_branch
        %205 = sbr.rel (%p203) target = $region40
      $region39: #{voice_cond_clip_forward.7} parent=35 // pred_region
        %p206 = scmp.lt.s32.totalorder %s12, 1
        %s207 = scalar_select %p206, %s12, 1
        %s208 = smul.addr %s207, 2
        %s209 = smul.addr %s208, 8
        %s210 = scalar_lea.vmem %s0, %s209
      $region40: #{voice_cond_clip_forward.7} parent=35 // pred_fallthru
        _
    $region36: #{voice_cond_clip_forward.7} parent=5 // pred_fallthru
      _
    %p211 = scmp.le.s32.totalorder 1, %s12
    %p212 = scmp.lt.s32.totalorder %s12, 3
    %p213 = pnand %p211, %p212
    %p214 = pneg %p213
    // Predicated region
    $region41: #{voice_cond_clip_forward.7} parent=5 // pred_check
      _
    $region42: #{voice_cond_clip_forward.7} parent=5 // pred_check_branch
      %216 = sbr.rel (%p213) target = $region44
    $region43: #{voice_cond_clip_forward.7} parent=5 // pred_region
      %s217 = ssub.s32 %s12, 1
      %p218 = scmp.lt.s32.totalorder %s17, 1
      %s219 = scalar_select %p218, %s17, 1
      %s220 = smul.addr %s219, 2
      %s221 = smul.addr %s220, 8
      %s222 = scalar_lea.vmem %s0, %s221
      %p223 = pneg %p38
      %p224 = pneg %p35
      %p225 = pneg %p59
      %p226 = pneg %p56
      %p227 = pneg %p80
      %p228 = pneg %p77
      %p229 = pneg %p101
      %p230 = pneg %p98
      %p231 = pneg %p122
      %p232 = pneg %p119
      %p233 = pneg %p143
      %p234 = pneg %p140
      %p235 = pneg %p169
      %p236 = pneg %p166
      %p237 = scmp.lt.s32.totalorder %s17, 1
      %s238 = scalar_select %p237, %s17, 1
      %s239 = smul.addr %s238, 2
      %s240 = smul.addr %s239, 8
      %s241 = scalar_lea.vmem %s6, %s240
      %p242 = scmp.lt.s32.totalorder %s17, 1
      %s243 = scalar_select %p242, %s17, 1
      %s244 = smul.addr %s243, 2
      %s245 = smul.addr %s244, 8
      %s246 = scalar_lea.vmem %s0, %s245
      %p247 = scmp.lt.s32.totalorder %s17, 1
      %s248 = scalar_select %p247, %s17, 1
      %s249 = smul.addr %s248, 2
      %s250 = smul.addr %s249, 8
      %s251 = scalar_lea.vmem %s6, %s250
      %v253 = vld [vmem:[%s246] sm:$0xff]
      %v254 = vld [vmem:[%s246 + $0x8] sm:$0xff]
      %v255 = vld [vmem:[%s1] sm:$0x1]
      %v256 = vld [vmem:[%s2] sm:$0x1]
      %v257 = vld [vmem:[%s3] sm:$0xff]
      %v258 = vld [vmem:[%s3 + $0x8] sm:$0xff]
      %v259 = vld [vmem:[%s3 + $0x10] sm:$0xff]
      %v260 = vld [vmem:[%s3 + $0x18] sm:$0xff]
      %v261 = vld [vmem:[%s3 + $0x20] sm:$0xff]
      %v262 = vld [vmem:[%s3 + $0x28] sm:$0xff]
      %v263 = vld [vmem:[%s3 + $0x30] sm:$0xff]
      %v264 = vld [vmem:[%s3 + $0x38] sm:$0xff]
      %v265 = vld [vmem:[%s4] sm:$0xf]
      %v266 = vld [vmem:[%s4 + $0x4] sm:$0xf]
      %v267 = vld [vmem:[%s4 + $0x8] sm:$0xf]
      %v268 = vld [vmem:[%s4 + $0xc] sm:$0xf]
      %v269 = vld [vmem:[%s4 + $0x10] sm:$0xf]
      %v270 = vld [vmem:[%s4 + $0x14] sm:$0xf]
      %v271 = vld [vmem:[%s4 + $0x18] sm:$0xf]
      %v272 = vld [vmem:[%s4 + $0x1c] sm:$0xf]
      %v273 = vld [vmem:[%s5] sm:$0x1]
      %vm274 = vcmask 523264
      %v275 = vsel %vm274, %v253, 0.0
      %276 = vadd.xlane.f32.xlu0 %v275
      %v277 = vpop.xlane.xlu0 %276
      %v278 = vsel %vm274, %v254, 0.0
      %279 = vadd.xlane.f32.xlu0 %v278
      %v280 = vpop.xlane.xlu0 %279
      %v281 = vrcp.pop 64.0
      %v282 = vmul.f32 64.0, %v281
      %v283 = vsub.f32 1.0, %v282
      %v284 = vmul.f32 %v281, %v283
      %v285 = vadd.f32 %v281, %v284
      %vm286 = vweird.f32 %v281
      %v287 = vsel %vm286, %v281, %v285
      %v288 = vmul.f32 %v277, %v287
      %v289 = vmul.f32 %v280, %v287
      %v290 = vsub.f32 %v253, %v288
      %v291 = vsub.f32 %v254, %v289
      %v292 = vmul.f32 %v290, %v290
      %v293 = vmul.f32 %v291, %v291
      %v294 = vsel %vm274, %v292, 0.0
      %295 = vadd.xlane.f32.xlu0 %v294
      %v296 = vpop.xlane.xlu0 %295
      %v297 = vsel %vm274, %v293, 0.0
      %298 = vadd.xlane.f32.xlu0 %v297
      %v299 = vpop.xlane.xlu0 %298
      %v300 = vmul.f32 %v296, %v287
      %v301 = vmul.f32 %v299, %v287
      %v302 = vadd.f32 %v300, 1e-05
      %v303 = vadd.f32 %v301, 1e-05
      %v304 = vrsqrt.pop %v302
      %v305 = vmul.f32 %v304, %v302
      %v306 = vmul.f32 %v305, %v304
      %v307 = vmul.f32 0.5, %v306
      %v308 = vsub.f32 1.5, %v307
      %v309 = vmul.f32 %v304, %v308
      %vm310 = vweird.f32 %v302
      %vm311 = vweird.f32 %v304
      %vm312 = vmor %vm310, %vm311
      %v313 = vsel %vm312, %v304, %v309
      %v314 = vrsqrt.pop %v303
      %v315 = vmul.f32 %v314, %v303
      %v316 = vmul.f32 %v315, %v314
      %v317 = vmul.f32 0.5, %v316
      %v318 = vsub.f32 1.5, %v317
      %v319 = vmul.f32 %v314, %v318
      %vm320 = vweird.f32 %v303
      %vm321 = vweird.f32 %v314
      %vm322 = vmor %vm320, %vm321
      %v323 = vsel %vm322, %v314, %v319
      %v324 = vmul.f32 %v290, %v313
      %v325 = vmul.f32 %v291, %v323
      %v327 = vperm.slane %v255, 0
      %v329 = vmul.f32 %v324, %v327
      %v330 = vmul.f32 %v325, %v327
      %v332 = vperm.slane %v256, 0
      %v334 = vadd.f32 %v329, %v332
      %v335 = vadd.f32 %v330, %v332
      %v336 = vpack.c.bf16 %v335, %v334
      %v345 = vunpack.c.l.b16 %v257
      %v346 = vunpack.c.h.b16 %v257
      %v347 = vunpack.c.l.b16 %v258
      %v348 = vunpack.c.h.b16 %v258
      %v349 = vunpack.c.l.b16 %v259
      %v350 = vunpack.c.h.b16 %v259
      %v351 = vunpack.c.l.b16 %v260
      %v352 = vunpack.c.h.b16 %v260
      %v353 = vunpack.c.l.b16 %v261
      %v354 = vunpack.c.h.b16 %v261
      %v355 = vunpack.c.l.b16 %v262
      %v356 = vunpack.c.h.b16 %v262
      %v357 = vunpack.c.l.b16 %v263
      %v358 = vunpack.c.h.b16 %v263
      %v359 = vunpack.c.l.b16 %v264
      %v360 = vunpack.c.h.b16 %v264
      %v361 = vpack.c.b16 %v347, %v345
      %v362 = vpack.c.b16 %v348, %v346
      %v363 = vpack.c.b16 %v351, %v349
      %v364 = vpack.c.b16 %v352, %v350
      %v365 = vpack.c.b16 %v355, %v353
      %v366 = vpack.c.b16 %v356, %v354
      %v367 = vpack.c.b16 %v359, %v357
      %v368 = vpack.c.b16 %v360, %v358
      %v378 = vsel %vm274, %v336, 0
      %380 = vmatpush.bf16.msra.mxu0 0
      %381 = vmatpush.bf16.msra.mxu0 0
      %382 = vmatpush.bf16.msra.mxu0 0
      %383 = vmatpush.bf16.msra.mxu0 0
      %384 = vmatpush.bf16.msra.mxu0 %v367
      %385 = vmatpush.bf16.msra.mxu0 %v365
      %386 = vmatpush.bf16.msra.mxu0 %v363
      %387 = vmatpush.bf16.msra.mxu0 %v361
      %388 = vmatmul.bf16.gmra.mxu0 %v378
      %v389 = vpop.f32.mrf.mxu0
      %v390 = vadd.f32 0.0, %v389
      %v391 = vpop.f32.mrf.mxu0
      %v392 = vadd.f32 0.0, %v391
      %393 = vdwg.mxu0
      %394 = vmatpush.bf16.msra.mxu0 0
      %395 = vmatpush.bf16.msra.mxu0 0
      %396 = vmatpush.bf16.msra.mxu0 0
      %397 = vmatpush.bf16.msra.mxu0 0
      %398 = vmatpush.bf16.msra.mxu0 %v368
      %399 = vmatpush.bf16.msra.mxu0 %v366
      %400 = vmatpush.bf16.msra.mxu0 %v364
      %401 = vmatpush.bf16.msra.mxu0 %v362
      %402 = vmatmul.bf16.gmra.mxu0 %v378
      %v403 = vpop.f32.mrf.mxu0
      %v404 = vadd.f32 0.0, %v403
      %v405 = vpop.f32.mrf.mxu0
      %v406 = vadd.f32 0.0, %v405
      %407 = vdwg.mxu0
      %v408 = vmul.f32 %v390, 0.25
      %v409 = vmul.f32 %v392, 0.25
      %v410 = vpack.c.bf16 %v408, %v408
      %v411 = vpack.c.bf16 %v409, %v409
      %v412 = vpack.c.bf16 %v390, %v390
      %v413 = vpack.c.bf16 %v392, %v392
      %v414 = vpack.c.bf16 %v404, %v404
      %v415 = vpack.c.bf16 %v406, %v406
      %v418 = vunpack.c.l.b16 %v410
      %v419 = vunpack.c.l.b16 %v411
      %v420 = vpack.c.b16 %v419, %v418
      %v423 = vunpack.c.l.b16 %v412
      %v424 = vunpack.c.l.b16 %v413
      %v425 = vpack.c.b16 %v424, %v423
      %426 = vrot.lane.b32.xlu0 %v425, 64
      %v427 = vpop.permute.xlu0 %426
      %vm428 = vcmask 130048
      %v430 = vsel %vm428, %v420, 0
      %v433 = vsel %vm428, %v427, 0
      %435 = vmatpush.bf16.xpose.msra.mxu0 0
      %436 = vmatpush.bf16.xpose.msra.mxu0 0
      %437 = vmatpush.bf16.xpose.msra.mxu0 0
      %438 = vmatpush.bf16.xpose.msra.mxu0 0
      %439 = vmatpush.bf16.xpose.msra.mxu0 0
      %440 = vmatpush.bf16.xpose.msra.mxu0 0
      %441 = vmatpush.bf16.xpose.msra.mxu0 0
      %442 = vmatpush.bf16.xpose.msra.mxu0 %v433
      %443 = vmatmul.bf16.gmra.mxu0 %v430
      %v444 = vpop.f32.mrf.mxu0
      %v445 = vadd.f32 0.0, %v444
      %v446 = vpop.f32.mrf.mxu0
      %v447 = vadd.f32 0.0, %v446
      %448 = vdwg.mxu0
      %v449 = vsel %vm428, %v445, -inf
      %450 = vmax.xlane.f32.xlu0 %v449
      %v451 = vpop.xlane.xlu0 %450
      %v452 = vsel %vm428, %v447, -inf
      %453 = vmax.xlane.f32.xlu0 %v452
      %v454 = vpop.xlane.xlu0 %453
      %v455 = vsub.f32 %v445, %v451
      %v456 = vsub.f32 %v447, %v454
      %v457 = vmul.f32 %v455, 1.442695
      %v458 = vpow.pop %v457
      %v459 = vmul.f32 %v456, 1.442695
      %v460 = vpow.pop %v459
      %v461 = vsel %vm428, %v458, 0.0
      %462 = vadd.xlane.f32.xlu0 %v461
      %v463 = vpop.xlane.xlu0 %462
      %v464 = vsel %vm428, %v460, 0.0
      %465 = vadd.xlane.f32.xlu0 %v464
      %v466 = vpop.xlane.xlu0 %465
      %v467 = vrcp.pop %v463
      %v468 = vrcp.pop %v466
      %v469 = vmul.f32 %v458, %v467
      %v470 = vmul.f32 %v460, %v468
      %v471 = vpack.c.bf16 %v470, %v469
      %v474 = vunpack.c.l.b16 %v414
      %v475 = vunpack.c.l.b16 %v415
      %v476 = vpack.c.b16 %v475, %v474
      %v479 = vsel %vm428, %v471, 0
      %481 = vmatpush.bf16.msra.mxu0 0
      %482 = vmatpush.bf16.msra.mxu0 0
      %483 = vmatpush.bf16.msra.mxu0 0
      %484 = vmatpush.bf16.msra.mxu0 0
      %485 = vmatpush.bf16.msra.mxu0 0
      %486 = vmatpush.bf16.msra.mxu0 0
      %487 = vmatpush.bf16.msra.mxu0 0
      %488 = vmatpush.bf16.msra.mxu0 %v476
      %489 = vmatmul.bf16.gmra.mxu0 %v479
      %v490 = vpop.f32.mrf.mxu0
      %v491 = vadd.f32 0.0, %v490
      %v492 = vpop.f32.mrf.mxu0
      %v493 = vadd.f32 0.0, %v492
      %494 = vdwg.mxu0
      %v495 = vpack.c.bf16 %v493, %v491
      %496 = vrot.lane.b32.xlu0 %v420, 112
      %v497 = vpop.permute.xlu0 %496
      %498 = vrot.lane.b32.xlu0 %v425, 48
      %v499 = vpop.permute.xlu0 %498
      %v501 = vsel %vm428, %v497, 0
      %v504 = vsel %vm428, %v499, 0
      %506 = vmatpush.bf16.xpose.msra.mxu0 0
      %507 = vmatpush.bf16.xpose.msra.mxu0 0
      %508 = vmatpush.bf16.xpose.msra.mxu0 0
      %509 = vmatpush.bf16.xpose.msra.mxu0 0
      %510 = vmatpush.bf16.xpose.msra.mxu0 0
      %511 = vmatpush.bf16.xpose.msra.mxu0 0
      %512 = vmatpush.bf16.xpose.msra.mxu0 0
      %513 = vmatpush.bf16.xpose.msra.mxu0 %v504
      %514 = vmatmul.bf16.gmra.mxu0 %v501
      %v515 = vpop.f32.mrf.mxu0
      %v516 = vadd.f32 0.0, %v515
      %v517 = vpop.f32.mrf.mxu0
      %v518 = vadd.f32 0.0, %v517
      %519 = vdwg.mxu0
      %v520 = vsel %vm428, %v516, -inf
      %521 = vmax.xlane.f32.xlu0 %v520
      %v522 = vpop.xlane.xlu0 %521
      %v523 = vsel %vm428, %v518, -inf
      %524 = vmax.xlane.f32.xlu0 %v523
      %v525 = vpop.xlane.xlu0 %524
      %v526 = vsub.f32 %v516, %v522
      %v527 = vsub.f32 %v518, %v525
      %v528 = vmul.f32 %v526, 1.442695
      %v529 = vpow.pop %v528
      %v530 = vmul.f32 %v527, 1.442695
      %v531 = vpow.pop %v530
      %v532 = vsel %vm428, %v529, 0.0
      %533 = vadd.xlane.f32.xlu0 %v532
      %v534 = vpop.xlane.xlu0 %533
      %v535 = vsel %vm428, %v531, 0.0
      %536 = vadd.xlane.f32.xlu0 %v535
      %v537 = vpop.xlane.xlu0 %536
      %v538 = vrcp.pop %v534
      %v539 = vrcp.pop %v537
      %v540 = vmul.f32 %v529, %v538
      %v541 = vmul.f32 %v531, %v539
      %v542 = vpack.c.bf16 %v541, %v540
      %543 = vrot.lane.b32.xlu0 %v476, 112
      %v544 = vpop.permute.xlu0 %543
      %v547 = vsel %vm428, %v542, 0
      %549 = vmatpush.bf16.msra.mxu0 0
      %550 = vmatpush.bf16.msra.mxu0 0
      %551 = vmatpush.bf16.msra.mxu0 0
      %552 = vmatpush.bf16.msra.mxu0 0
      %553 = vmatpush.bf16.msra.mxu0 0
      %554 = vmatpush.bf16.msra.mxu0 0
      %555 = vmatpush.bf16.msra.mxu0 0
      %556 = vmatpush.bf16.msra.mxu0 %v544
      %557 = vmatmul.bf16.gmra.mxu0 %v547
      %v558 = vpop.f32.mrf.mxu0
      %v559 = vadd.f32 0.0, %v558
      %v560 = vpop.f32.mrf.mxu0
      %v561 = vadd.f32 0.0, %v560
      %562 = vdwg.mxu0
      %v563 = vpack.c.bf16 %v561, %v559
      %v566 = vunpack.c.l.b16 %v267
      %v567 = vunpack.c.l.b16 %v268
      %v568 = vpack.c.b16 %v567, %v566
      %v571 = vsel %vm428, %v563, 0
      %573 = vmatpush.bf16.msra.mxu0 0
      %574 = vmatpush.bf16.msra.mxu0 0
      %575 = vmatpush.bf16.msra.mxu0 0
      %576 = vmatpush.bf16.msra.mxu0 0
      %577 = vmatpush.bf16.msra.mxu0 0
      %578 = vmatpush.bf16.msra.mxu0 0
      %579 = vmatpush.bf16.msra.mxu0 0
      %580 = vmatpush.bf16.msra.mxu0 %v568
      %581 = vmatmul.bf16.gmra.mxu0 %v571
      %v582 = vpop.f32.mrf.mxu0
      %v583 = vadd.f32 0.0, %v582
      %v584 = vpop.f32.mrf.mxu0
      %v585 = vadd.f32 0.0, %v584
      %586 = vdwg.mxu0
      %v589 = vunpack.c.l.b16 %v265
      %v590 = vunpack.c.l.b16 %v266
      %v591 = vpack.c.b16 %v590, %v589
      %v594 = vsel %vm428, %v495, 0
      %596 = vmatpush.bf16.msra.mxu0 0
      %597 = vmatpush.bf16.msra.mxu0 0
      %598 = vmatpush.bf16.msra.mxu0 0
      %599 = vmatpush.bf16.msra.mxu0 0
      %600 = vmatpush.bf16.msra.mxu0 0
      %601 = vmatpush.bf16.msra.mxu0 0
      %602 = vmatpush.bf16.msra.mxu0 0
      %603 = vmatpush.bf16.msra.mxu0 %v591
      %604 = vmatmul.bf16.gmra.mxu0 %v594
      %v605 = vpop.f32.mrf.mxu0
      %v606 = vadd.f32 %v583, %v605
      %v607 = vpop.f32.mrf.mxu0
      %v608 = vadd.f32 %v585, %v607
      %609 = vdwg.mxu0
      %610 = vrot.lane.b32.xlu0 %v420, 96
      %v611 = vpop.permute.xlu0 %610
      %612 = vrot.lane.b32.xlu0 %v425, 32
      %v613 = vpop.permute.xlu0 %612
      %v615 = vsel %vm428, %v611, 0
      %v618 = vsel %vm428, %v613, 0
      %620 = vmatpush.bf16.xpose.msra.mxu0 0
      %621 = vmatpush.bf16.xpose.msra.mxu0 0
      %622 = vmatpush.bf16.xpose.msra.mxu0 0
      %623 = vmatpush.bf16.xpose.msra.mxu0 0
      %624 = vmatpush.bf16.xpose.msra.mxu0 0
      %625 = vmatpush.bf16.xpose.msra.mxu0 0
      %626 = vmatpush.bf16.xpose.msra.mxu0 0
      %627 = vmatpush.bf16.xpose.msra.mxu0 %v618
      %628 = vmatmul.bf16.gmra.mxu0 %v615
      %v629 = vpop.f32.mrf.mxu0
      %v630 = vadd.f32 0.0, %v629
      %v631 = vpop.f32.mrf.mxu0
      %v632 = vadd.f32 0.0, %v631
      %633 = vdwg.mxu0
      %v634 = vsel %vm428, %v630, -inf
      %635 = vmax.xlane.f32.xlu0 %v634
      %v636 = vpop.xlane.xlu0 %635
      %v637 = vsel %vm428, %v632, -inf
      %638 = vmax.xlane.f32.xlu0 %v637
      %v639 = vpop.xlane.xlu0 %638
      %v640 = vsub.f32 %v630, %v636
      %v641 = vsub.f32 %v632, %v639
      %v642 = vmul.f32 %v640, 1.442695
      %v643 = vpow.pop %v642
      %v644 = vmul.f32 %v641, 1.442695
      %v645 = vpow.pop %v644
      %v646 = vsel %vm428, %v643, 0.0
      %647 = vadd.xlane.f32.xlu0 %v646
      %v648 = vpop.xlane.xlu0 %647
      %v649 = vsel %vm428, %v645, 0.0
      %650 = vadd.xlane.f32.xlu0 %v649
      %v651 = vpop.xlane.xlu0 %650
      %v652 = vrcp.pop %v648
      %v653 = vrcp.pop %v651
      %v654 = vmul.f32 %v643, %v652
      %v655 = vmul.f32 %v645, %v653
      %v656 = vpack.c.bf16 %v655, %v654
      %657 = vrot.lane.b32.xlu0 %v476, 96
      %v658 = vpop.permute.xlu0 %657
      %v661 = vsel %vm428, %v656, 0
      %663 = vmatpush.bf16.msra.mxu0 0
      %664 = vmatpush.bf16.msra.mxu0 0
      %665 = vmatpush.bf16.msra.mxu0 0
      %666 = vmatpush.bf16.msra.mxu0 0
      %667 = vmatpush.bf16.msra.mxu0 0
      %668 = vmatpush.bf16.msra.mxu0 0
      %669 = vmatpush.bf16.msra.mxu0 0
      %670 = vmatpush.bf16.msra.mxu0 %v658
      %671 = vmatmul.bf16.gmra.mxu0 %v661
      %v672 = vpop.f32.mrf.mxu0
      %v673 = vadd.f32 0.0, %v672
      %v674 = vpop.f32.mrf.mxu0
      %v675 = vadd.f32 0.0, %v674
      %676 = vdwg.mxu0
      %v677 = vpack.c.bf16 %v675, %v673
      %v680 = vunpack.c.l.b16 %v269
      %v681 = vunpack.c.l.b16 %v270
      %v682 = vpack.c.b16 %v681, %v680
      %v685 = vsel %vm428, %v677, 0
      %687 = vmatpush.bf16.msra.mxu0 0
      %688 = vmatpush.bf16.msra.mxu0 0
      %689 = vmatpush.bf16.msra.mxu0 0
      %690 = vmatpush.bf16.msra.mxu0 0
      %691 = vmatpush.bf16.msra.mxu0 0
      %692 = vmatpush.bf16.msra.mxu0 0
      %693 = vmatpush.bf16.msra.mxu0 0
      %694 = vmatpush.bf16.msra.mxu0 %v682
      %695 = vmatmul.bf16.gmra.mxu0 %v685
      %v696 = vpop.f32.mrf.mxu0
      %v697 = vadd.f32 0.0, %v696
      %v698 = vpop.f32.mrf.mxu0
      %v699 = vadd.f32 0.0, %v698
      %700 = vdwg.mxu0
      %v701 = vadd.f32 %v606, %v697
      %v702 = vadd.f32 %v608, %v699
      %703 = vrot.lane.b32.xlu0 %v420, 80
      %v704 = vpop.permute.xlu0 %703
      %705 = vrot.lane.b32.xlu0 %v425, 16
      %v706 = vpop.permute.xlu0 %705
      %v708 = vsel %vm428, %v704, 0
      %v711 = vsel %vm428, %v706, 0
      %713 = vmatpush.bf16.xpose.msra.mxu0 0
      %714 = vmatpush.bf16.xpose.msra.mxu0 0
      %715 = vmatpush.bf16.xpose.msra.mxu0 0
      %716 = vmatpush.bf16.xpose.msra.mxu0 0
      %717 = vmatpush.bf16.xpose.msra.mxu0 0
      %718 = vmatpush.bf16.xpose.msra.mxu0 0
      %719 = vmatpush.bf16.xpose.msra.mxu0 0
      %720 = vmatpush.bf16.xpose.msra.mxu0 %v711
      %721 = vmatmul.bf16.gmra.mxu0 %v708
      %v722 = vpop.f32.mrf.mxu0
      %v723 = vadd.f32 0.0, %v722
      %v724 = vpop.f32.mrf.mxu0
      %v725 = vadd.f32 0.0, %v724
      %726 = vdwg.mxu0
      %v727 = vsel %vm428, %v723, -inf
      %728 = vmax.xlane.f32.xlu0 %v727
      %v729 = vpop.xlane.xlu0 %728
      %v730 = vsel %vm428, %v725, -inf
      %731 = vmax.xlane.f32.xlu0 %v730
      %v732 = vpop.xlane.xlu0 %731
      %v733 = vsub.f32 %v723, %v729
      %v734 = vsub.f32 %v725, %v732
      %v735 = vmul.f32 %v733, 1.442695
      %v736 = vpow.pop %v735
      %v737 = vmul.f32 %v734, 1.442695
      %v738 = vpow.pop %v737
      %v739 = vsel %vm428, %v736, 0.0
      %740 = vadd.xlane.f32.xlu0 %v739
      %v741 = vpop.xlane.xlu0 %740
      %v742 = vsel %vm428, %v738, 0.0
      %743 = vadd.xlane.f32.xlu0 %v742
      %v744 = vpop.xlane.xlu0 %743
      %v745 = vrcp.pop %v741
      %v746 = vrcp.pop %v744
      %v747 = vmul.f32 %v736, %v745
      %v748 = vmul.f32 %v738, %v746
      %v749 = vpack.c.bf16 %v748, %v747
      %750 = vrot.lane.b32.xlu0 %v476, 80
      %v751 = vpop.permute.xlu0 %750
      %v754 = vsel %vm428, %v749, 0
      %756 = vmatpush.bf16.msra.mxu0 0
      %757 = vmatpush.bf16.msra.mxu0 0
      %758 = vmatpush.bf16.msra.mxu0 0
      %759 = vmatpush.bf16.msra.mxu0 0
      %760 = vmatpush.bf16.msra.mxu0 0
      %761 = vmatpush.bf16.msra.mxu0 0
      %762 = vmatpush.bf16.msra.mxu0 0
      %763 = vmatpush.bf16.msra.mxu0 %v751
      %764 = vmatmul.bf16.gmra.mxu0 %v754
      %v765 = vpop.f32.mrf.mxu0
      %v766 = vadd.f32 0.0, %v765
      %v767 = vpop.f32.mrf.mxu0
      %v768 = vadd.f32 0.0, %v767
      %769 = vdwg.mxu0
      %v770 = vpack.c.bf16 %v768, %v766
      %v773 = vunpack.c.l.b16 %v271
      %v774 = vunpack.c.l.b16 %v272
      %v775 = vpack.c.b16 %v774, %v773
      %v778 = vsel %vm428, %v770, 0
      %780 = vmatpush.bf16.msra.mxu0 0
      %781 = vmatpush.bf16.msra.mxu0 0
      %782 = vmatpush.bf16.msra.mxu0 0
      %783 = vmatpush.bf16.msra.mxu0 0
      %784 = vmatpush.bf16.msra.mxu0 0
      %785 = vmatpush.bf16.msra.mxu0 0
      %786 = vmatpush.bf16.msra.mxu0 0
      %787 = vmatpush.bf16.msra.mxu0 %v775
      %788 = vmatmul.bf16.gmra.mxu0 %v778
      %v789 = vpop.f32.mrf.mxu0
      %v790 = vadd.f32 0.0, %v789
      %v791 = vpop.f32.mrf.mxu0
      %v792 = vadd.f32 0.0, %v791
      %793 = vdwg.mxu0
      %v794 = vadd.f32 %v701, %v790
      %v795 = vadd.f32 %v702, %v792
      %v797 = vperm.slane %v273, 0
      %v799 = vadd.f32 %v794, %v797
      %v800 = vadd.f32 %v795, %v797
      %v801 = vadd.f32 %v253, %v799
      %v802 = vadd.f32 %v254, %v800
      %803 = vst.msk [vmem:[%s251] sm:$0xff] %vm274, %v801
      %804 = vst.msk [vmem:[%s251 + $0x8] sm:$0xff] %vm274, %v802
      %p805 = scmp.lt.s32.totalorder %s17, 1
      %s806 = scalar_select %p805, %s17, 1
      %s807 = smul.addr %s806, 2
      %s808 = smul.addr %s807, 8
      %s809 = scalar_lea.vmem %s6, %s808
      // Predicated region
      $region45: #{voice_cond_clip_forward.7} parent=43 // pred_check
        %p810 = pneg %p166
      $region46: #{voice_cond_clip_forward.7} parent=43 // pred_check_branch
        %812 = sbr.rel (%p810) target = $region48
      $region47: #{voice_cond_clip_forward.7} parent=43 // pred_region
        _
      $region48: #{voice_cond_clip_forward.7} parent=43 // pred_fallthru
        _
    $region44: #{voice_cond_clip_forward.7} parent=5 // pred_fallthru
      _
    %p813 = scmp.le.s32.totalorder 2, %s12
    // Predicated region
    $region49: #{voice_cond_clip_forward.7} parent=5 // pred_check
      %p814 = pneg %p813
    $region50: #{voice_cond_clip_forward.7} parent=5 // pred_check_branch
      %816 = sbr.rel (%p814) target = $region52
    $region51: #{voice_cond_clip_forward.7} parent=5 // pred_region
      %s817 = ssub.s32 %s12, 2
      // Predicated region
      $region53: #{voice_cond_clip_forward.7} parent=51 // pred_check
        %p818 = pneg %p172
      $region54: #{voice_cond_clip_forward.7} parent=51 // pred_check_branch
        %820 = sbr.rel (%p818) target = $region56
      $region55: #{voice_cond_clip_forward.7} parent=51 // pred_region
        %p821 = scmp.lt.s32.totalorder %s18, 1
        %s822 = scalar_select %p821, %s18, 1
        %s823 = smul.addr %s822, 2
        %s824 = smul.addr %s823, 8
        %s825 = scalar_lea.vmem %s6, %s824
      $region56: #{voice_cond_clip_forward.7} parent=51 // pred_fallthru
        _
    $region52: #{voice_cond_clip_forward.7} parent=5 // pred_fallthru
      _
  $region6: #{voice_cond_clip_forward.7} parent=0 // loop_footer
    %s16 = sadd.s32 1, %s12
  $region7: #{voice_cond_clip_forward.7} parent=0 // loop_footer_branch
    %11 = sbr.rel target = $region3
  $region8: #{voice_cond_clip_forward.7} parent=0 // loop_exit
    _

// kernel: voice_cond_clip_forward.9
$region0: #{voice_cond_clip_forward.9}
  #allocation0 [shape = 'u32[]', space=smem, size = 0x4, offset = 0x4, fixed_abs, tag = 'smem constant byte address 0x4 - core index']
  #allocation1 [shape = 'u32[72,128]{1,0:T(1,128)}', space=vmem, size = 0x9000, scoped, tag = 'internal scratch']
  %s0 = inlined_call_operand.vmem [shape: f32[2,10,64], index: 0, kind: input, shape index: {}]
  %s1 = inlined_call_operand.vmem [shape: f32[2,1,10], index: 1, kind: input, shape index: {}]
  %s2 = inlined_call_operand.vmem [shape: f32[1,64], index: 2, kind: input, shape index: {}]
  %s3 = inlined_call_operand.vmem [shape: f32[1,64], index: 3, kind: input, shape index: {}]
  %s4 = inlined_call_operand.vmem [shape: bf16[64,192], index: 4, kind: input, shape index: {}]
  %s5 = inlined_call_operand.vmem [shape: bf16[64,64], index: 5, kind: input, shape index: {}]
  %s6 = inlined_call_operand.vmem [shape: f32[1,64], index: 6, kind: input, shape index: {}]
  %s7 = inlined_call_operand.vmem [shape: f32[1,64], index: 7, kind: input, shape index: {}]
  %s8 = inlined_call_operand.vmem [shape: f32[1,64], index: 8, kind: input, shape index: {}]
  %s9 = inlined_call_operand.vmem [shape: bf16[64,256], index: 9, kind: input, shape index: {}]
  %s10 = inlined_call_operand.vmem [shape: f32[1,256], index: 10, kind: input, shape index: {}]
  %s11 = inlined_call_operand.vmem [shape: bf16[256,64], index: 11, kind: input, shape index: {}]
  %s12 = inlined_call_operand.vmem [shape: f32[1,64], index: 12, kind: input, shape index: {}]
  %s13 = inlined_call_operand.vmem [shape: f32[2,10,64], index: 13, kind: output, shape index: {}]
  %s14 = sld [smem:[#allocation0]]
  $region85: #{voice_cond_clip_forward.9} parent=0
    _
  %s16 = ssub.s32 1, %s14
  %s17 = scalar_select 0, %s16, %s14
  loop: start=0, step=1, limit=4
  $region2: #{voice_cond_clip_forward.9} parent=0 // loop_pre_header
    _
  $region3: #{voice_cond_clip_forward.9} parent=0 // loop_header
    %s19 = sphi 0, %s23
    %p20 = scmp.ge.s32.totalorder %s19, 4
    %s29 = sphi 0, %s31
    %s32 = sphi 0, %s29
    %s33 = sphi 0, %s32
    %s49 = sphi 0, %s33
    %s55 = sphi 0, %s57
    %s58 = sphi 0, %s55
    %s59 = sphi 0, %s58
    %s75 = sphi 0, %s59
    %s79 = sphi 0, %s79
    %s81 = sphi 0, %s79
    %s82 = sphi 0, %s81
    %s96 = sphi 0, %s82
    %s100 = sphi 0, %s100
    %s102 = sphi 0, %s100
    %s103 = sphi 0, %s102
    %s117 = sphi 0, %s103
    %s121 = sphi 0, %s121
    %s123 = sphi 0, %s121
    %s124 = sphi 0, %s123
    %s138 = sphi 0, %s124
    %s142 = sphi 0, %s142
    %s144 = sphi 0, %s142
    %s145 = sphi 0, %s144
    %s159 = sphi 0, %s145
    %s163 = sphi 0, %s163
    %s165 = sphi 0, %s163
    %s166 = sphi 0, %s165
    %s180 = sphi 0, %s166
    %s184 = sphi 0, %s184
    %s186 = sphi 0, %s184
    %s187 = sphi 0, %s186
    %s201 = sphi 0, %s187
    %s205 = sphi 0, %s205
    %s207 = sphi 0, %s205
    %s208 = sphi 0, %s207
    %s222 = sphi 0, %s208
    %s226 = sphi 0, %s226
    %s228 = sphi 0, %s226
    %s229 = sphi 0, %s228
    %s243 = sphi 0, %s229
    %s247 = sphi 0, %s247
    %s249 = sphi 0, %s247
    %s250 = sphi 0, %s249
    %s264 = sphi 0, %s250
    %s268 = sphi 0, %s268
    %s270 = sphi 0, %s268
    %s271 = sphi 0, %s270
    %s285 = sphi 0, %s271
    %s289 = sphi 0, %s289
    %s291 = sphi 0, %s289
    %s292 = sphi 0, %s291
    %s306 = sphi 0, %s292
    %s312 = sphi 0, %s314
    %s315 = sphi 0, %s312
    %s316 = sphi 0, %s315
    %s332 = sphi 0, %s316
  $region4: #{voice_cond_clip_forward.9} parent=0 // loop_header_branch
    %22 = sbr.rel (%p20) target = $region8
  $region5: #{voice_cond_clip_forward.9} parent=0 // loop_body
    %s24 = ssub.s32 %s19, 1
    %s25 = ssub.s32 %s19, 2
    %s26 = sadd.s32 %s19, 1
    %s27 = ssub.s32 %s19, %s26
    %p28 = scmp.eq.s32.totalorder %s27, 0
    %s30 = sadd.s32 %s29, 1
    %s31 = scalar_select %p28, %s29, %s30
    %p34 = pneg %p28
    %p35 = scmp.eq.s32.totalorder %s19, 1
    %p36 = por %p34, %p35
    %p37 = scmp.ne.s32.totalorder %s29, %s32
    %p38 = scmp.eq.s32.totalorder %s19, 0
    %p39 = por %p37, %p38
    %p40 = scmp.ne.s32.totalorder %s29, %s32
    %p41 = scmp.eq.s32.totalorder %s24, 1
    %p42 = por %p40, %p41
    %p43 = scmp.ne.s32.totalorder %s32, %s33
    %p44 = scmp.eq.s32.totalorder %s24, 0
    %p45 = por %p43, %p44
    %p46 = scmp.ne.s32.totalorder %s32, %s33
    %p47 = scmp.eq.s32.totalorder %s25, 1
    %p48 = por %p46, %p47
    %p50 = scmp.ne.s32.totalorder %s33, %s49
    %p51 = scmp.eq.s32.totalorder %s25, 0
    %p52 = por %p50, %p51
    %s53 = ssub.s32 %s19, %s26
    %p54 = scmp.eq.s32.totalorder %s53, 0
    %s56 = sadd.s32 %s55, 1
    %s57 = scalar_select %p54, %s55, %s56
    %p60 = pneg %p54
    %p61 = scmp.eq.s32.totalorder %s19, 1
    %p62 = por %p60, %p61
    %p63 = scmp.ne.s32.totalorder %s55, %s58
    %p64 = scmp.eq.s32.totalorder %s19, 0
    %p65 = por %p63, %p64
    %p66 = scmp.ne.s32.totalorder %s55, %s58
    %p67 = scmp.eq.s32.totalorder %s24, 1
    %p68 = por %p66, %p67
    %p69 = scmp.ne.s32.totalorder %s58, %s59
    %p70 = scmp.eq.s32.totalorder %s24, 0
    %p71 = por %p69, %p70
    %p72 = scmp.ne.s32.totalorder %s58, %s59
    %p73 = scmp.eq.s32.totalorder %s25, 1
    %p74 = por %p72, %p73
    %p76 = scmp.ne.s32.totalorder %s59, %s75
    %p77 = scmp.eq.s32.totalorder %s25, 0
    %p78 = por %p76, %p77
    %s80 = sadd.s32 %s79, 1
    %p83 = scmp.eq.s32.totalorder %s19, 1
    %p84 = scmp.ne.s32.totalorder %s79, %s81
    %p85 = scmp.eq.s32.totalorder %s19, 0
    %p86 = por %p84, %p85
    %p87 = scmp.ne.s32.totalorder %s79, %s81
    %p88 = scmp.eq.s32.totalorder %s24, 1
    %p89 = por %p87, %p88
    %p90 = scmp.ne.s32.totalorder %s81, %s82
    %p91 = scmp.eq.s32.totalorder %s24, 0
    %p92 = por %p90, %p91
    %p93 = scmp.ne.s32.totalorder %s81, %s82
    %p94 = scmp.eq.s32.totalorder %s25, 1
    %p95 = por %p93, %p94
    %p97 = scmp.ne.s32.totalorder %s82, %s96
    %p98 = scmp.eq.s32.totalorder %s25, 0
    %p99 = por %p97, %p98
    %s101 = sadd.s32 %s100, 1
    %p104 = scmp.eq.s32.totalorder %s19, 1
    %p105 = scmp.ne.s32.totalorder %s100, %s102
    %p106 = scmp.eq.s32.totalorder %s19, 0
    %p107 = por %p105, %p106
    %p108 = scmp.ne.s32.totalorder %s100, %s102
    %p109 = scmp.eq.s32.totalorder %s24, 1
    %p110 = por %p108, %p109
    %p111 = scmp.ne.s32.totalorder %s102, %s103
    %p112 = scmp.eq.s32.totalorder %s24, 0
    %p113 = por %p111, %p112
    %p114 = scmp.ne.s32.totalorder %s102, %s103
    %p115 = scmp.eq.s32.totalorder %s25, 1
    %p116 = por %p114, %p115
    %p118 = scmp.ne.s32.totalorder %s103, %s117
    %p119 = scmp.eq.s32.totalorder %s25, 0
    %p120 = por %p118, %p119
    %s122 = sadd.s32 %s121, 1
    %p125 = scmp.eq.s32.totalorder %s19, 1
    %p126 = scmp.ne.s32.totalorder %s121, %s123
    %p127 = scmp.eq.s32.totalorder %s19, 0
    %p128 = por %p126, %p127
    %p129 = scmp.ne.s32.totalorder %s121, %s123
    %p130 = scmp.eq.s32.totalorder %s24, 1
    %p131 = por %p129, %p130
    %p132 = scmp.ne.s32.totalorder %s123, %s124
    %p133 = scmp.eq.s32.totalorder %s24, 0
    %p134 = por %p132, %p133
    %p135 = scmp.ne.s32.totalorder %s123, %s124
    %p136 = scmp.eq.s32.totalorder %s25, 1
    %p137 = por %p135, %p136
    %p139 = scmp.ne.s32.totalorder %s124, %s138
    %p140 = scmp.eq.s32.totalorder %s25, 0
    %p141 = por %p139, %p140
    %s143 = sadd.s32 %s142, 1
    %p146 = scmp.eq.s32.totalorder %s19, 1
    %p147 = scmp.ne.s32.totalorder %s142, %s144
    %p148 = scmp.eq.s32.totalorder %s19, 0
    %p149 = por %p147, %p148
    %p150 = scmp.ne.s32.totalorder %s142, %s144
    %p151 = scmp.eq.s32.totalorder %s24, 1
    %p152 = por %p150, %p151
    %p153 = scmp.ne.s32.totalorder %s144, %s145
    %p154 = scmp.eq.s32.totalorder %s24, 0
    %p155 = por %p153, %p154
    %p156 = scmp.ne.s32.totalorder %s144, %s145
    %p157 = scmp.eq.s32.totalorder %s25, 1
    %p158 = por %p156, %p157
    %p160 = scmp.ne.s32.totalorder %s145, %s159
    %p161 = scmp.eq.s32.totalorder %s25, 0
    %p162 = por %p160, %p161
    %s164 = sadd.s32 %s163, 1
    %p167 = scmp.eq.s32.totalorder %s19, 1
    %p168 = scmp.ne.s32.totalorder %s163, %s165
    %p169 = scmp.eq.s32.totalorder %s19, 0
    %p170 = por %p168, %p169
    %p171 = scmp.ne.s32.totalorder %s163, %s165
    %p172 = scmp.eq.s32.totalorder %s24, 1
    %p173 = por %p171, %p172
    %p174 = scmp.ne.s32.totalorder %s165, %s166
    %p175 = scmp.eq.s32.totalorder %s24, 0
    %p176 = por %p174, %p175
    %p177 = scmp.ne.s32.totalorder %s165, %s166
    %p178 = scmp.eq.s32.totalorder %s25, 1
    %p179 = por %p177, %p178
    %p181 = scmp.ne.s32.totalorder %s166, %s180
    %p182 = scmp.eq.s32.totalorder %s25, 0
    %p183 = por %p181, %p182
    %s185 = sadd.s32 %s184, 1
    %p188 = scmp.eq.s32.totalorder %s19, 1
    %p189 = scmp.ne.s32.totalorder %s184, %s186
    %p190 = scmp.eq.s32.totalorder %s19, 0
    %p191 = por %p189, %p190
    %p192 = scmp.ne.s32.totalorder %s184, %s186
    %p193 = scmp.eq.s32.totalorder %s24, 1
    %p194 = por %p192, %p193
    %p195 = scmp.ne.s32.totalorder %s186, %s187
    %p196 = scmp.eq.s32.totalorder %s24, 0
    %p197 = por %p195, %p196
    %p198 = scmp.ne.s32.totalorder %s186, %s187
    %p199 = scmp.eq.s32.totalorder %s25, 1
    %p200 = por %p198, %p199
    %p202 = scmp.ne.s32.totalorder %s187, %s201
    %p203 = scmp.eq.s32.totalorder %s25, 0
    %p204 = por %p202, %p203
    %s206 = sadd.s32 %s205, 1
    %p209 = scmp.eq.s32.totalorder %s19, 1
    %p210 = scmp.ne.s32.totalorder %s205, %s207
    %p211 = scmp.eq.s32.totalorder %s19, 0
    %p212 = por %p210, %p211
    %p213 = scmp.ne.s32.totalorder %s205, %s207
    %p214 = scmp.eq.s32.totalorder %s24, 1
    %p215 = por %p213, %p214
    %p216 = scmp.ne.s32.totalorder %s207, %s208
    %p217 = scmp.eq.s32.totalorder %s24, 0
    %p218 = por %p216, %p217
    %p219 = scmp.ne.s32.totalorder %s207, %s208
    %p220 = scmp.eq.s32.totalorder %s25, 1
    %p221 = por %p219, %p220
    %p223 = scmp.ne.s32.totalorder %s208, %s222
    %p224 = scmp.eq.s32.totalorder %s25, 0
    %p225 = por %p223, %p224
    %s227 = sadd.s32 %s226, 1
    %p230 = scmp.eq.s32.totalorder %s19, 1
    %p231 = scmp.ne.s32.totalorder %s226, %s228
    %p232 = scmp.eq.s32.totalorder %s19, 0
    %p233 = por %p231, %p232
    %p234 = scmp.ne.s32.totalorder %s226, %s228
    %p235 = scmp.eq.s32.totalorder %s24, 1
    %p236 = por %p234, %p235
    %p237 = scmp.ne.s32.totalorder %s228, %s229
    %p238 = scmp.eq.s32.totalorder %s24, 0
    %p239 = por %p237, %p238
    %p240 = scmp.ne.s32.totalorder %s228, %s229
    %p241 = scmp.eq.s32.totalorder %s25, 1
    %p242 = por %p240, %p241
    %p244 = scmp.ne.s32.totalorder %s229, %s243
    %p245 = scmp.eq.s32.totalorder %s25, 0
    %p246 = por %p244, %p245
    %s248 = sadd.s32 %s247, 1
    %p251 = scmp.eq.s32.totalorder %s19, 1
    %p252 = scmp.ne.s32.totalorder %s247, %s249
    %p253 = scmp.eq.s32.totalorder %s19, 0
    %p254 = por %p252, %p253
    %p255 = scmp.ne.s32.totalorder %s247, %s249
    %p256 = scmp.eq.s32.totalorder %s24, 1
    %p257 = por %p255, %p256
    %p258 = scmp.ne.s32.totalorder %s249, %s250
    %p259 = scmp.eq.s32.totalorder %s24, 0
    %p260 = por %p258, %p259
    %p261 = scmp.ne.s32.totalorder %s249, %s250
    %p262 = scmp.eq.s32.totalorder %s25, 1
    %p263 = por %p261, %p262
    %p265 = scmp.ne.s32.totalorder %s250, %s264
    %p266 = scmp.eq.s32.totalorder %s25, 0
    %p267 = por %p265, %p266
    %s269 = sadd.s32 %s268, 1
    %p272 = scmp.eq.s32.totalorder %s19, 1
    %p273 = scmp.ne.s32.totalorder %s268, %s270
    %p274 = scmp.eq.s32.totalorder %s19, 0
    %p275 = por %p273, %p274
    %p276 = scmp.ne.s32.totalorder %s268, %s270
    %p277 = scmp.eq.s32.totalorder %s24, 1
    %p278 = por %p276, %p277
    %p279 = scmp.ne.s32.totalorder %s270, %s271
    %p280 = scmp.eq.s32.totalorder %s24, 0
    %p281 = por %p279, %p280
    %p282 = scmp.ne.s32.totalorder %s270, %s271
    %p283 = scmp.eq.s32.totalorder %s25, 1
    %p284 = por %p282, %p283
    %p286 = scmp.ne.s32.totalorder %s271, %s285
    %p287 = scmp.eq.s32.totalorder %s25, 0
    %p288 = por %p286, %p287
    %s290 = sadd.s32 %s289, 1
    %p293 = scmp.eq.s32.totalorder %s19, 1
    %p294 = scmp.ne.s32.totalorder %s289, %s291
    %p295 = scmp.eq.s32.totalorder %s19, 0
    %p296 = por %p294, %p295
    %p297 = scmp.ne.s32.totalorder %s289, %s291
    %p298 = scmp.eq.s32.totalorder %s24, 1
    %p299 = por %p297, %p298
    %p300 = scmp.ne.s32.totalorder %s291, %s292
    %p301 = scmp.eq.s32.totalorder %s24, 0
    %p302 = por %p300, %p301
    %p303 = scmp.ne.s32.totalorder %s291, %s292
    %p304 = scmp.eq.s32.totalorder %s25, 1
    %p305 = por %p303, %p304
    %p307 = scmp.ne.s32.totalorder %s292, %s306
    %p308 = scmp.eq.s32.totalorder %s25, 0
    %p309 = por %p307, %p308
    %s310 = ssub.s32 %s19, %s26
    %p311 = scmp.eq.s32.totalorder %s310, 0
    %s313 = sadd.s32 %s312, 1
    %s314 = scalar_select %p311, %s312, %s313
    %p317 = pneg %p311
    %p318 = scmp.eq.s32.totalorder %s19, 1
    %p319 = por %p317, %p318
    %p320 = scmp.ne.s32.totalorder %s312, %s315
    %p321 = scmp.eq.s32.totalorder %s19, 0
    %p322 = por %p320, %p321
    %p323 = scmp.ne.s32.totalorder %s312, %s315
    %p324 = scmp.eq.s32.totalorder %s24, 1
    %p325 = por %p323, %p324
    %p326 = scmp.ne.s32.totalorder %s315, %s316
    %p327 = scmp.eq.s32.totalorder %s24, 0
    %p328 = por %p326, %p327
    %p329 = scmp.ne.s32.totalorder %s315, %s316
    %p330 = scmp.eq.s32.totalorder %s25, 1
    %p331 = por %p329, %p330
    %p333 = scmp.ne.s32.totalorder %s316, %s332
    %p334 = scmp.eq.s32.totalorder %s25, 0
    %p335 = por %p333, %p334
    %p336 = scmp.le.s32.totalorder 1, %s19
    %p337 = scmp.lt.s32.totalorder %s19, 3
    %p338 = pnand %p336, %p337
    %p339 = pneg %p338
    // Predicated region
    $region9: #{voice_cond_clip_forward.9} parent=5 // pred_check
      _
    $region10: #{voice_cond_clip_forward.9} parent=5 // pred_check_branch
      %341 = sbr.rel (%p338) target = $region12
    $region11: #{voice_cond_clip_forward.9} parent=5 // pred_region
      %s342 = ssub.s32 %s19, 1
      // Predicated region
      $region13: #{voice_cond_clip_forward.9} parent=11 // pred_check
        %p343 = pneg %p92
      $region14: #{voice_cond_clip_forward.9} parent=11 // pred_check_branch
        %345 = sbr.rel (%p343) target = $region16
      $region15: #{voice_cond_clip_forward.9} parent=11 // pred_region
        _
      $region16: #{voice_cond_clip_forward.9} parent=11 // pred_fallthru
        _
      // Predicated region
      $region17: #{voice_cond_clip_forward.9} parent=11 // pred_check
        %p346 = pneg %p113
      $region18: #{voice_cond_clip_forward.9} parent=11 // pred_check_branch
        %348 = sbr.rel (%p346) target = $region20
      $region19: #{voice_cond_clip_forward.9} parent=11 // pred_region
        _
      $region20: #{voice_cond_clip_forward.9} parent=11 // pred_fallthru
        _
      // Predicated region
      $region21: #{voice_cond_clip_forward.9} parent=11 // pred_check
        %p349 = pneg %p134
      $region22: #{voice_cond_clip_forward.9} parent=11 // pred_check_branch
        %351 = sbr.rel (%p349) target = $region24
      $region23: #{voice_cond_clip_forward.9} parent=11 // pred_region
        _
      $region24: #{voice_cond_clip_forward.9} parent=11 // pred_fallthru
        _
      // Predicated region
      $region25: #{voice_cond_clip_forward.9} parent=11 // pred_check
        %p352 = pneg %p155
      $region26: #{voice_cond_clip_forward.9} parent=11 // pred_check_branch
        %354 = sbr.rel (%p352) target = $region28
      $region27: #{voice_cond_clip_forward.9} parent=11 // pred_region
        _
      $region28: #{voice_cond_clip_forward.9} parent=11 // pred_fallthru
        _
      // Predicated region
      $region29: #{voice_cond_clip_forward.9} parent=11 // pred_check
        %p355 = pneg %p176
      $region30: #{voice_cond_clip_forward.9} parent=11 // pred_check_branch
        %357 = sbr.rel (%p355) target = $region32
      $region31: #{voice_cond_clip_forward.9} parent=11 // pred_region
        _
      $region32: #{voice_cond_clip_forward.9} parent=11 // pred_fallthru
        _
      // Predicated region
      $region33: #{voice_cond_clip_forward.9} parent=11 // pred_check
        %p358 = pneg %p197
      $region34: #{voice_cond_clip_forward.9} parent=11 // pred_check_branch
        %360 = sbr.rel (%p358) target = $region36
      $region35: #{voice_cond_clip_forward.9} parent=11 // pred_region
        _
      $region36: #{voice_cond_clip_forward.9} parent=11 // pred_fallthru
        _
      // Predicated region
      $region37: #{voice_cond_clip_forward.9} parent=11 // pred_check
        %p361 = pneg %p218
      $region38: #{voice_cond_clip_forward.9} parent=11 // pred_check_branch
        %363 = sbr.rel (%p361) target = $region40
      $region39: #{voice_cond_clip_forward.9} parent=11 // pred_region
        _
      $region40: #{voice_cond_clip_forward.9} parent=11 // pred_fallthru
        _
      // Predicated region
      $region41: #{voice_cond_clip_forward.9} parent=11 // pred_check
        %p364 = pneg %p239
      $region42: #{voice_cond_clip_forward.9} parent=11 // pred_check_branch
        %366 = sbr.rel (%p364) target = $region44
      $region43: #{voice_cond_clip_forward.9} parent=11 // pred_region
        _
      $region44: #{voice_cond_clip_forward.9} parent=11 // pred_fallthru
        _
      // Predicated region
      $region45: #{voice_cond_clip_forward.9} parent=11 // pred_check
        %p367 = pneg %p260
      $region46: #{voice_cond_clip_forward.9} parent=11 // pred_check_branch
        %369 = sbr.rel (%p367) target = $region48
      $region47: #{voice_cond_clip_forward.9} parent=11 // pred_region
        _
      $region48: #{voice_cond_clip_forward.9} parent=11 // pred_fallthru
        _
      // Predicated region
      $region49: #{voice_cond_clip_forward.9} parent=11 // pred_check
        %p370 = pneg %p281
      $region50: #{voice_cond_clip_forward.9} parent=11 // pred_check_branch
        %372 = sbr.rel (%p370) target = $region52
      $region51: #{voice_cond_clip_forward.9} parent=11 // pred_region
        _
      $region52: #{voice_cond_clip_forward.9} parent=11 // pred_fallthru
        _
      // Predicated region
      $region53: #{voice_cond_clip_forward.9} parent=11 // pred_check
        %p373 = pneg %p302
      $region54: #{voice_cond_clip_forward.9} parent=11 // pred_check_branch
        %375 = sbr.rel (%p373) target = $region56
      $region55: #{voice_cond_clip_forward.9} parent=11 // pred_region
        _
      $region56: #{voice_cond_clip_forward.9} parent=11 // pred_fallthru
        _
    $region12: #{voice_cond_clip_forward.9} parent=5 // pred_fallthru
      _
    %p376 = scmp.lt.s32.totalorder %s19, 2
    // Predicated region
    $region57: #{voice_cond_clip_forward.9} parent=5 // pred_check
      %p377 = pneg %p376
    $region58: #{voice_cond_clip_forward.9} parent=5 // pred_check_branch
      %379 = sbr.rel (%p377) target = $region60
    $region59: #{voice_cond_clip_forward.9} parent=5 // pred_region
      // Predicated region
      $region61: #{voice_cond_clip_forward.9} parent=59 // pred_check
        %p380 = pneg %p39
      $region62: #{voice_cond_clip_forward.9} parent=59 // pred_check_branch
        %382 = sbr.rel (%p380) target = $region64
      $region63: #{voice_cond_clip_forward.9} parent=59 // pred_region
        %p383 = scmp.lt.s32.totalorder %s19, 1
        %s384 = scalar_select %p383, %s19, 1
        %s385 = smul.addr %s384, 2
        %s386 = smul.addr %s385, 8
        %s387 = scalar_lea.vmem %s0, %s386
      $region64: #{voice_cond_clip_forward.9} parent=59 // pred_fallthru
        _
      // Predicated region
      $region65: #{voice_cond_clip_forward.9} parent=59 // pred_check
        %p388 = pneg %p65
      $region66: #{voice_cond_clip_forward.9} parent=59 // pred_check_branch
        %390 = sbr.rel (%p388) target = $region68
      $region67: #{voice_cond_clip_forward.9} parent=59 // pred_region
        %p391 = scmp.lt.s32.totalorder %s19, 1
        %s392 = scalar_select %p391, %s19, 1
        %s393 = scalar_lea.vmem %s1, %s392
      $region68: #{voice_cond_clip_forward.9} parent=59 // pred_fallthru
        _
    $region60: #{voice_cond_clip_forward.9} parent=5 // pred_fallthru
      _
    %p394 = scmp.le.s32.totalorder 1, %s19
    %p395 = scmp.lt.s32.totalorder %s19, 3
    %p396 = pnand %p394, %p395
    %p397 = pneg %p396
    // Predicated region
    $region69: #{voice_cond_clip_forward.9} parent=5 // pred_check
      _
    $region70: #{voice_cond_clip_forward.9} parent=5 // pred_check_branch
      %399 = sbr.rel (%p396) target = $region72
    $region71: #{voice_cond_clip_forward.9} parent=5 // pred_region
      %s400 = ssub.s32 %s19, 1
      %p401 = scmp.lt.s32.totalorder %s24, 1
      %s402 = scalar_select %p401, %s24, 1
      %s403 = smul.addr %s402, 2
      %s404 = smul.addr %s403, 8
      %s405 = scalar_lea.vmem %s0, %s404
      %p406 = pneg %p45
      %p407 = pneg %p42
      %p408 = scmp.lt.s32.totalorder %s24, 1
      %s409 = scalar_select %p408, %s24, 1
      %s410 = scalar_lea.vmem %s1, %s409
      %p411 = pneg %p71
      %p412 = pneg %p68
      %p413 = pneg %p92
      %p414 = pneg %p89
      %p415 = pneg %p113
      %p416 = pneg %p110
      %p417 = pneg %p134
      %p418 = pneg %p131
      %p419 = pneg %p155
      %p420 = pneg %p152
      %p421 = pneg %p176
      %p422 = pneg %p173
      %p423 = pneg %p197
      %p424 = pneg %p194
      %p425 = pneg %p218
      %p426 = pneg %p215
      %p427 = pneg %p239
      %p428 = pneg %p236
      %p429 = pneg %p260
      %p430 = pneg %p257
      %p431 = pneg %p281
      %p432 = pneg %p278
      %p433 = pneg %p302
      %p434 = pneg %p299
      %p435 = pneg %p328
      %p436 = pneg %p325
      %p437 = scmp.lt.s32.totalorder %s24, 1
      %s438 = scalar_select %p437, %s24, 1
      %s439 = smul.addr %s438, 2
      %s440 = smul.addr %s439, 8
      %s441 = scalar_lea.vmem %s13, %s440
      %p442 = scmp.lt.s32.totalorder %s24, 1
      %s443 = scalar_select %p442, %s24, 1
      %s444 = smul.addr %s443, 2
      %s445 = smul.addr %s444, 8
      %s446 = scalar_lea.vmem %s0, %s445
      %p447 = scmp.lt.s32.totalorder %s24, 1
      %s448 = scalar_select %p447, %s24, 1
      %s449 = scalar_lea.vmem %s1, %s448
      %p450 = scmp.lt.s32.totalorder %s24, 1
      %s451 = scalar_select %p450, %s24, 1
      %s452 = smul.addr %s451, 2
      %s453 = smul.addr %s452, 8
      %s454 = scalar_lea.vmem %s13, %s453
      %v456 = vld [vmem:[%s446] sm:$0xff]
      %v457 = vld [vmem:[%s446 + $0x8] sm:$0x3]
      %v458 = vld [vmem:[%s449] sm:$0x1]
      %v459 = vsub.f32 %v458, 1.0
      %v460 = vmul.f32 %v459, 1e+09
      %v461 = vld [vmem:[%s2] sm:$0x1]
      %v462 = vld [vmem:[%s3] sm:$0x1]
      %v463 = vld [vmem:[%s4] sm:$0xff]
      %v464 = vld [vmem:[%s4 + $0x8] sm:$0xff]
      %v465 = vld [vmem:[%s4 + $0x10] sm:$0xff]
      %v466 = vld [vmem:[%s4 + $0x18] sm:$0xff]
      %v467 = vld [vmem:[%s4 + $0x20] sm:$0xff]
      %v468 = vld [vmem:[%s4 + $0x28] sm:$0xff]
      %v469 = vld [vmem:[%s4 + $0x30] sm:$0xff]
      %v470 = vld [vmem:[%s4 + $0x38] sm:$0xff]
      %v471 = vld [vmem:[%s5] sm:$0xf]
      %v472 = vld [vmem:[%s5 + $0x4] sm:$0xf]
      %v473 = vld [vmem:[%s5 + $0x8] sm:$0xf]
      %v474 = vld [vmem:[%s5 + $0xc] sm:$0xf]
      %v475 = vld [vmem:[%s5 + $0x10] sm:$0xf]
      %v476 = vld [vmem:[%s5 + $0x14] sm:$0xf]
      %v477 = vld [vmem:[%s5 + $0x18] sm:$0xf]
      %v478 = vld [vmem:[%s5 + $0x1c] sm:$0xf]
      %v479 = vld [vmem:[%s6] sm:$0x1]
      %vm480 = vcmask 523264
      %v481 = vsel %vm480, %v456, 0.0
      %482 = vadd.xlane.f32.xlu0 %v481
      %v483 = vpop.xlane.xlu0 %482
      %vm484 = vcmask 517120
      %v485 = vsel %vm484, %v457, 0.0
      %486 = vadd.xlane.f32.xlu0 %v485
      %v487 = vpop.xlane.xlu0 %486
      %v488 = vrcp.pop 64.0
      %v489 = vmul.f32 64.0, %v488
      %v490 = vsub.f32 1.0, %v489
      %v491 = vmul.f32 %v488, %v490
      %v492 = vadd.f32 %v488, %v491
      %vm493 = vweird.f32 %v488
      %v494 = vsel %vm493, %v488, %v492
      %v495 = vmul.f32 %v483, %v494
      %v496 = vmul.f32 %v487, %v494
      %v497 = vsub.f32 %v456, %v495
      %v498 = vsub.f32 %v457, %v496
      %v499 = vmul.f32 %v497, %v497
      %v500 = vmul.f32 %v498, %v498
      %v501 = vsel %vm480, %v499, 0.0
      %502 = vadd.xlane.f32.xlu0 %v501
      %v503 = vpop.xlane.xlu0 %502
      %v504 = vsel %vm484, %v500, 0.0
      %505 = vadd.xlane.f32.xlu0 %v504
      %v506 = vpop.xlane.xlu0 %505
      %v507 = vmul.f32 %v503, %v494
      %v508 = vmul.f32 %v506, %v494
      %v509 = vadd.f32 %v507, 1e-05
      %v510 = vadd.f32 %v508, 1e-05
      %v511 = vrsqrt.pop %v509
      %v512 = vmul.f32 %v511, %v509
      %v513 = vmul.f32 %v512, %v511
      %v514 = vmul.f32 0.5, %v513
      %v515 = vsub.f32 1.5, %v514
      %v516 = vmul.f32 %v511, %v515
      %vm517 = vweird.f32 %v509
      %vm518 = vweird.f32 %v511
      %vm519 = vmor %vm517, %vm518
      %v520 = vsel %vm519, %v511, %v516
      %v521 = vrsqrt.pop %v510
      %v522 = vmul.f32 %v521, %v510
      %v523 = vmul.f32 %v522, %v521
      %v524 = vmul.f32 0.5, %v523
      %v525 = vsub.f32 1.5, %v524
      %v526 = vmul.f32 %v521, %v525
      %vm527 = vweird.f32 %v510
      %vm528 = vweird.f32 %v521
      %vm529 = vmor %vm527, %vm528
      %v530 = vsel %vm529, %v521, %v526
      %v531 = vmul.f32 %v497, %v520
      %v532 = vmul.f32 %v498, %v530
      %v534 = vperm.slane %v461, 0
      %v536 = vmul.f32 %v531, %v534
      %v537 = vmul.f32 %v532, %v534
      %v539 = vperm.slane %v462, 0
      %v541 = vadd.f32 %v536, %v539
      %v542 = vadd.f32 %v537, %v539
      %v543 = vpack.c.bf16 %v542, %v541
      %v552 = vunpack.c.l.b16 %v463
      %v553 = vunpack.c.h.b16 %v463
      %v554 = vunpack.c.l.b16 %v464
      %v555 = vunpack.c.h.b16 %v464
      %v556 = vunpack.c.l.b16 %v465
      %v557 = vunpack.c.h.b16 %v465
      %v558 = vunpack.c.l.b16 %v466
      %v559 = vunpack.c.h.b16 %v466
      %v560 = vunpack.c.l.b16 %v467
      %v561 = vunpack.c.h.b16 %v467
      %v562 = vunpack.c.l.b16 %v468
      %v563 = vunpack.c.h.b16 %v468
      %v564 = vunpack.c.l.b16 %v469
      %v565 = vunpack.c.h.b16 %v469
      %v566 = vunpack.c.l.b16 %v470
      %v567 = vunpack.c.h.b16 %v470
      %v568 = vpack.c.b16 %v554, %v552
      %v569 = vpack.c.b16 %v555, %v553
      %v570 = vpack.c.b16 %v558, %v556
      %v571 = vpack.c.b16 %v559, %v557
      %v572 = vpack.c.b16 %v562, %v560
      %v573 = vpack.c.b16 %v563, %v561
      %v574 = vpack.c.b16 %v566, %v564
      %v575 = vpack.c.b16 %v567, %v565
      %v585 = vsel %vm480, %v543, 0
      %587 = vmatpush.bf16.msra.mxu0 0
      %588 = vmatpush.bf16.msra.mxu0 0
      %589 = vmatpush.bf16.msra.mxu0 0
      %590 = vmatpush.bf16.msra.mxu0 0
      %591 = vmatpush.bf16.msra.mxu0 %v574
      %592 = vmatpush.bf16.msra.mxu0 %v572
      %593 = vmatpush.bf16.msra.mxu0 %v570
      %594 = vmatpush.bf16.msra.mxu0 %v568
      %595 = vmatmul.bf16.gmra.mxu0 %v585
      %v596 = vpop.f32.mrf.mxu0
      %v597 = vadd.f32 0.0, %v596
      %v598 = vpop.f32.mrf.mxu0
      %v599 = vadd.f32 0.0, %v598
      %600 = vdwg.mxu0
      %601 = vmatpush.bf16.msra.mxu0 0
      %602 = vmatpush.bf16.msra.mxu0 0
      %603 = vmatpush.bf16.msra.mxu0 0
      %604 = vmatpush.bf16.msra.mxu0 0
      %605 = vmatpush.bf16.msra.mxu0 %v575
      %606 = vmatpush.bf16.msra.mxu0 %v573
      %607 = vmatpush.bf16.msra.mxu0 %v571
      %608 = vmatpush.bf16.msra.mxu0 %v569
      %609 = vmatmul.bf16.gmra.mxu0 %v585
      %v610 = vpop.f32.mrf.mxu0
      %v611 = vadd.f32 0.0, %v610
      %v612 = vpop.f32.mrf.mxu0
      %v613 = vadd.f32 0.0, %v612
      %614 = vdwg.mxu0
      %v615 = vmul.f32 %v597, 0.25
      %v616 = vmul.f32 %v599, 0.25
      %v617 = vpack.c.bf16 %v615, %v615
      %v618 = vpack.c.bf16 %v616, %v616
      %v619 = vpack.c.bf16 %v597, %v597
      %v620 = vpack.c.bf16 %v599, %v599
      %v621 = vpack.c.bf16 %v611, %v611
      %v622 = vpack.c.bf16 %v613, %v613
      %v624 = vperm.slane %v460, 0
      %v628 = vunpack.c.l.b16 %v617
      %v629 = vunpack.c.l.b16 %v618
      %v630 = vpack.c.b16 %v629, %v628
      %v633 = vunpack.c.l.b16 %v619
      %v634 = vunpack.c.l.b16 %v620
      %v635 = vpack.c.b16 %v634, %v633
      %636 = vrot.lane.b32.xlu0 %v635, 64
      %v637 = vpop.permute.xlu0 %636
      %vm638 = vcmask 130048
      %v640 = vsel %vm638, %v630, 0
      %v643 = vsel %vm638, %v637, 0
      %645 = vmatpush.bf16.xpose.msra.mxu0 0
      %646 = vmatpush.bf16.xpose.msra.mxu0 0
      %647 = vmatpush.bf16.xpose.msra.mxu0 0
      %648 = vmatpush.bf16.xpose.msra.mxu0 0
      %649 = vmatpush.bf16.xpose.msra.mxu0 0
      %650 = vmatpush.bf16.xpose.msra.mxu0 0
      %651 = vmatpush.bf16.xpose.msra.mxu0 0
      %652 = vmatpush.bf16.xpose.msra.mxu0 %v643
      %653 = vmatmul.bf16.gmra.mxu0 %v640
      %v654 = vpop.f32.mrf.mxu0
      %v655 = vadd.f32 %v624, %v654
      %v656 = vpop.f32.mrf.mxu0
      %v657 = vadd.f32 %v624, %v656
      %658 = vdwg.mxu0
      %vm659 = vcmask 80896
      %v660 = vsel %vm659, %v655, -inf
      %661 = vmax.xlane.f32.xlu0 %v660
      %v662 = vpop.xlane.xlu0 %661
      %vm663 = vcmask 74752
      %v664 = vsel %vm663, %v657, -inf
      %665 = vmax.xlane.f32.xlu0 %v664
      %v666 = vpop.xlane.xlu0 %665
      %v667 = vsub.f32 %v655, %v662
      %v668 = vsub.f32 %v657, %v666
      %v669 = vmul.f32 %v667, 1.442695
      %v670 = vpow.pop %v669
      %v671 = vmul.f32 %v668, 1.442695
      %v672 = vpow.pop %v671
      %v673 = vsel %vm659, %v670, 0.0
      %674 = vadd.xlane.f32.xlu0 %v673
      %v675 = vpop.xlane.xlu0 %674
      %v676 = vsel %vm663, %v672, 0.0
      %677 = vadd.xlane.f32.xlu0 %v676
      %v678 = vpop.xlane.xlu0 %677
      %v679 = vrcp.pop %v675
      %v680 = vrcp.pop %v678
      %v681 = vmul.f32 %v670, %v679
      %v682 = vmul.f32 %v672, %v680
      %v683 = vpack.c.bf16 %v682, %v681
      %v686 = vunpack.c.l.b16 %v621
      %v687 = vunpack.c.l.b16 %v622
      %v688 = vpack.c.b16 %v687, %v686
      %v690 = vsel %vm659, %v683, 0
      %vm692 = vcmask 1044480
      %v694 = vsel %vm692, %v688, 0
      %696 = vmatpush.bf16.msra.mxu0 0
      %697 = vmatpush.bf16.msra.mxu0 0
      %698 = vmatpush.bf16.msra.mxu0 0
      %699 = vmatpush.bf16.msra.mxu0 0
      %700 = vmatpush.bf16.msra.mxu0 0
      %701 = vmatpush.bf16.msra.mxu0 0
      %702 = vmatpush.bf16.msra.mxu0 0
      %703 = vmatpush.bf16.msra.mxu0 %v694
      %704 = vmatmul.bf16.gmra.mxu0 %v690
      %v705 = vpop.f32.mrf.mxu0
      %v706 = vadd.f32 0.0, %v705
      %v707 = vpop.f32.mrf.mxu0
      %v708 = vadd.f32 0.0, %v707
      %709 = vdwg.mxu0
      %v710 = vpack.c.bf16 %v708, %v706
      %711 = vrot.lane.b32.xlu0 %v630, 112
      %v712 = vpop.permute.xlu0 %711
      %713 = vrot.lane.b32.xlu0 %v635, 48
      %v714 = vpop.permute.xlu0 %713
      %v716 = vsel %vm638, %v712, 0
      %v719 = vsel %vm638, %v714, 0
      %721 = vmatpush.bf16.xpose.msra.mxu0 0
      %722 = vmatpush.bf16.xpose.msra.mxu0 0
      %723 = vmatpush.bf16.xpose.msra.mxu0 0
      %724 = vmatpush.bf16.xpose.msra.mxu0 0
      %725 = vmatpush.bf16.xpose.msra.mxu0 0
      %726 = vmatpush.bf16.xpose.msra.mxu0 0
      %727 = vmatpush.bf16.xpose.msra.mxu0 0
      %728 = vmatpush.bf16.xpose.msra.mxu0 %v719
      %729 = vmatmul.bf16.gmra.mxu0 %v716
      %v730 = vpop.f32.mrf.mxu0
      %v731 = vadd.f32 %v624, %v730
      %v732 = vpop.f32.mrf.mxu0
      %v733 = vadd.f32 %v624, %v732
      %734 = vdwg.mxu0
      %v735 = vsel %vm659, %v731, -inf
      %736 = vmax.xlane.f32.xlu0 %v735
      %v737 = vpop.xlane.xlu0 %736
      %v738 = vsel %vm663, %v733, -inf
      %739 = vmax.xlane.f32.xlu0 %v738
      %v740 = vpop.xlane.xlu0 %739
      %v741 = vsub.f32 %v731, %v737
      %v742 = vsub.f32 %v733, %v740
      %v743 = vmul.f32 %v741, 1.442695
      %v744 = vpow.pop %v743
      %v745 = vmul.f32 %v742, 1.442695
      %v746 = vpow.pop %v745
      %v747 = vsel %vm659, %v744, 0.0
      %748 = vadd.xlane.f32.xlu0 %v747
      %v749 = vpop.xlane.xlu0 %748
      %v750 = vsel %vm663, %v746, 0.0
      %751 = vadd.xlane.f32.xlu0 %v750
      %v752 = vpop.xlane.xlu0 %751
      %v753 = vrcp.pop %v749
      %v754 = vrcp.pop %v752
      %v755 = vmul.f32 %v744, %v753
      %v756 = vmul.f32 %v746, %v754
      %v757 = vpack.c.bf16 %v756, %v755
      %758 = vrot.lane.b32.xlu0 %v688, 112
      %v759 = vpop.permute.xlu0 %758
      %v761 = vsel %vm659, %v757, 0
      %v764 = vsel %vm692, %v759, 0
      %766 = vmatpush.bf16.msra.mxu0 0
      %767 = vmatpush.bf16.msra.mxu0 0
      %768 = vmatpush.bf16.msra.mxu0 0
      %769 = vmatpush.bf16.msra.mxu0 0
      %770 = vmatpush.bf16.msra.mxu0 0
      %771 = vmatpush.bf16.msra.mxu0 0
      %772 = vmatpush.bf16.msra.mxu0 0
      %773 = vmatpush.bf16.msra.mxu0 %v764
      %774 = vmatmul.bf16.gmra.mxu0 %v761
      %v775 = vpop.f32.mrf.mxu0
      %v776 = vadd.f32 0.0, %v775
      %v777 = vpop.f32.mrf.mxu0
      %v778 = vadd.f32 0.0, %v777
      %779 = vdwg.mxu0
      %v780 = vpack.c.bf16 %v778, %v776
      %v783 = vunpack.c.l.b16 %v473
      %v784 = vunpack.c.l.b16 %v474
      %v785 = vpack.c.b16 %v784, %v783
      %v788 = vsel %vm638, %v780, 0
      %790 = vmatpush.bf16.msra.mxu0 0
      %791 = vmatpush.bf16.msra.mxu0 0
      %792 = vmatpush.bf16.msra.mxu0 0
      %793 = vmatpush.bf16.msra.mxu0 0
      %794 = vmatpush.bf16.msra.mxu0 0
      %795 = vmatpush.bf16.msra.mxu0 0
      %796 = vmatpush.bf16.msra.mxu0 0
      %797 = vmatpush.bf16.msra.mxu0 %v785
      %798 = vmatmul.bf16.gmra.mxu0 %v788
      %v799 = vpop.f32.mrf.mxu0
      %v800 = vadd.f32 0.0, %v799
      %v801 = vpop.f32.mrf.mxu0
      %v802 = vadd.f32 0.0, %v801
      %803 = vdwg.mxu0
      %v806 = vunpack.c.l.b16 %v471
      %v807 = vunpack.c.l.b16 %v472
      %v808 = vpack.c.b16 %v807, %v806
      %v811 = vsel %vm638, %v710, 0
      %813 = vmatpush.bf16.msra.mxu0 0
      %814 = vmatpush.bf16.msra.mxu0 0
      %815 = vmatpush.bf16.msra.mxu0 0
      %816 = vmatpush.bf16.msra.mxu0 0
      %817 = vmatpush.bf16.msra.mxu0 0
      %818 = vmatpush.bf16.msra.mxu0 0
      %819 = vmatpush.bf16.msra.mxu0 0
      %820 = vmatpush.bf16.msra.mxu0 %v808
      %821 = vmatmul.bf16.gmra.mxu0 %v811
      %v822 = vpop.f32.mrf.mxu0
      %v823 = vadd.f32 %v800, %v822
      %v824 = vpop.f32.mrf.mxu0
      %v825 = vadd.f32 %v802, %v824
      %826 = vdwg.mxu0
      %827 = vrot.lane.b32.xlu0 %v630, 96
      %v828 = vpop.permute.xlu0 %827
      %829 = vrot.lane.b32.xlu0 %v635, 32
      %v830 = vpop.permute.xlu0 %829
      %v832 = vsel %vm638, %v828, 0
      %v835 = vsel %vm638, %v830, 0
      %837 = vmatpush.bf16.xpose.msra.mxu0 0
      %838 = vmatpush.bf16.xpose.msra.mxu0 0
      %839 = vmatpush.bf16.xpose.msra.mxu0 0
      %840 = vmatpush.bf16.xpose.msra.mxu0 0
      %841 = vmatpush.bf16.xpose.msra.mxu0 0
      %842 = vmatpush.bf16.xpose.msra.mxu0 0
      %843 = vmatpush.bf16.xpose.msra.mxu0 0
      %844 = vmatpush.bf16.xpose.msra.mxu0 %v835
      %845 = vmatmul.bf16.gmra.mxu0 %v832
      %v846 = vpop.f32.mrf.mxu0
      %v847 = vadd.f32 %v624, %v846
      %v848 = vpop.f32.mrf.mxu0
      %v849 = vadd.f32 %v624, %v848
      %850 = vdwg.mxu0
      %v851 = vsel %vm659, %v847, -inf
      %852 = vmax.xlane.f32.xlu0 %v851
      %v853 = vpop.xlane.xlu0 %852
      %v854 = vsel %vm663, %v849, -inf
      %855 = vmax.xlane.f32.xlu0 %v854
      %v856 = vpop.xlane.xlu0 %855
      %v857 = vsub.f32 %v847, %v853
      %v858 = vsub.f32 %v849, %v856
      %v859 = vmul.f32 %v857, 1.442695
      %v860 = vpow.pop %v859
      %v861 = vmul.f32 %v858, 1.442695
      %v862 = vpow.pop %v861
      %v863 = vsel %vm659, %v860, 0.0
      %864 = vadd.xlane.f32.xlu0 %v863
      %v865 = vpop.xlane.xlu0 %864
      %v866 = vsel %vm663, %v862, 0.0
      %867 = vadd.xlane.f32.xlu0 %v866
      %v868 = vpop.xlane.xlu0 %867
      %v869 = vrcp.pop %v865
      %v870 = vrcp.pop %v868
      %v871 = vmul.f32 %v860, %v869
      %v872 = vmul.f32 %v862, %v870
      %v873 = vpack.c.bf16 %v872, %v871
      %874 = vrot.lane.b32.xlu0 %v688, 96
      %v875 = vpop.permute.xlu0 %874
      %v877 = vsel %vm659, %v873, 0
      %v880 = vsel %vm692, %v875, 0
      %882 = vmatpush.bf16.msra.mxu0 0
      %883 = vmatpush.bf16.msra.mxu0 0
      %884 = vmatpush.bf16.msra.mxu0 0
      %885 = vmatpush.bf16.msra.mxu0 0
      %886 = vmatpush.bf16.msra.mxu0 0
      %887 = vmatpush.bf16.msra.mxu0 0
      %888 = vmatpush.bf16.msra.mxu0 0
      %889 = vmatpush.bf16.msra.mxu0 %v880
      %890 = vmatmul.bf16.gmra.mxu0 %v877
      %v891 = vpop.f32.mrf.mxu0
      %v892 = vadd.f32 0.0, %v891
      %v893 = vpop.f32.mrf.mxu0
      %v894 = vadd.f32 0.0, %v893
      %895 = vdwg.mxu0
      %v896 = vpack.c.bf16 %v894, %v892
      %v899 = vunpack.c.l.b16 %v475
      %v900 = vunpack.c.l.b16 %v476
      %v901 = vpack.c.b16 %v900, %v899
      %v904 = vsel %vm638, %v896, 0
      %906 = vmatpush.bf16.msra.mxu0 0
      %907 = vmatpush.bf16.msra.mxu0 0
      %908 = vmatpush.bf16.msra.mxu0 0
      %909 = vmatpush.bf16.msra.mxu0 0
      %910 = vmatpush.bf16.msra.mxu0 0
      %911 = vmatpush.bf16.msra.mxu0 0
      %912 = vmatpush.bf16.msra.mxu0 0
      %913 = vmatpush.bf16.msra.mxu0 %v901
      %914 = vmatmul.bf16.gmra.mxu0 %v904
      %v915 = vpop.f32.mrf.mxu0
      %v916 = vadd.f32 0.0, %v915
      %v917 = vpop.f32.mrf.mxu0
      %v918 = vadd.f32 0.0, %v917
      %919 = vdwg.mxu0
      %v920 = vadd.f32 %v823, %v916
      %v921 = vadd.f32 %v825, %v918
      %922 = vrot.lane.b32.xlu0 %v630, 80
      %v923 = vpop.permute.xlu0 %922
      %924 = vrot.lane.b32.xlu0 %v635, 16
      %v925 = vpop.permute.xlu0 %924
      %v927 = vsel %vm638, %v923, 0
      %v930 = vsel %vm638, %v925, 0
      %932 = vmatpush.bf16.xpose.msra.mxu0 0
      %933 = vmatpush.bf16.xpose.msra.mxu0 0
      %934 = vmatpush.bf16.xpose.msra.mxu0 0
      %935 = vmatpush.bf16.xpose.msra.mxu0 0
      %936 = vmatpush.bf16.xpose.msra.mxu0 0
      %937 = vmatpush.bf16.xpose.msra.mxu0 0
      %938 = vmatpush.bf16.xpose.msra.mxu0 0
      %939 = vmatpush.bf16.xpose.msra.mxu0 %v930
      %940 = vmatmul.bf16.gmra.mxu0 %v927
      %v941 = vpop.f32.mrf.mxu0
      %v942 = vadd.f32 %v624, %v941
      %v943 = vpop.f32.mrf.mxu0
      %v944 = vadd.f32 %v624, %v943
      %945 = vdwg.mxu0
      %v946 = vsel %vm659, %v942, -inf
      %947 = vmax.xlane.f32.xlu0 %v946
      %v948 = vpop.xlane.xlu0 %947
      %v949 = vsel %vm663, %v944, -inf
      %950 = vmax.xlane.f32.xlu0 %v949
      %v951 = vpop.xlane.xlu0 %950
      %v952 = vsub.f32 %v942, %v948
      %v953 = vsub.f32 %v944, %v951
      %v954 = vmul.f32 %v952, 1.442695
      %v955 = vpow.pop %v954
      %v956 = vmul.f32 %v953, 1.442695
      %v957 = vpow.pop %v956
      %v958 = vsel %vm659, %v955, 0.0
      %959 = vadd.xlane.f32.xlu0 %v958
      %v960 = vpop.xlane.xlu0 %959
      %v961 = vsel %vm663, %v957, 0.0
      %962 = vadd.xlane.f32.xlu0 %v961
      %v963 = vpop.xlane.xlu0 %962
      %v964 = vrcp.pop %v960
      %v965 = vrcp.pop %v963
      %v966 = vmul.f32 %v955, %v964
      %v967 = vmul.f32 %v957, %v965
      %v968 = vpack.c.bf16 %v967, %v966
      %969 = vrot.lane.b32.xlu0 %v688, 80
      %v970 = vpop.permute.xlu0 %969
      %v972 = vsel %vm659, %v968, 0
      %v975 = vsel %vm692, %v970, 0
      %977 = vmatpush.bf16.msra.mxu0 0
      %978 = vmatpush.bf16.msra.mxu0 0
      %979 = vmatpush.bf16.msra.mxu0 0
      %980 = vmatpush.bf16.msra.mxu0 0
      %981 = vmatpush.bf16.msra.mxu0 0
      %982 = vmatpush.bf16.msra.mxu0 0
      %983 = vmatpush.bf16.msra.mxu0 0
      %984 = vmatpush.bf16.msra.mxu0 %v975
      %985 = vmatmul.bf16.gmra.mxu0 %v972
      %v986 = vpop.f32.mrf.mxu0
      %v987 = vadd.f32 0.0, %v986
      %v988 = vpop.f32.mrf.mxu0
      %v989 = vadd.f32 0.0, %v988
      %990 = vdwg.mxu0
      %v991 = vpack.c.bf16 %v989, %v987
      %v994 = vunpack.c.l.b16 %v477
      %v995 = vunpack.c.l.b16 %v478
      %v996 = vpack.c.b16 %v995, %v994
      %v999 = vsel %vm638, %v991, 0
      %1001 = vmatpush.bf16.msra.mxu0 0
      %1002 = vmatpush.bf16.msra.mxu0 0
      %1003 = vmatpush.bf16.msra.mxu0 0
      %1004 = vmatpush.bf16.msra.mxu0 0
      %1005 = vmatpush.bf16.msra.mxu0 0
      %1006 = vmatpush.bf16.msra.mxu0 0
      %1007 = vmatpush.bf16.msra.mxu0 0
      %1008 = vmatpush.bf16.msra.mxu0 %v996
      %1009 = vmatmul.bf16.gmra.mxu0 %v999
      %v1010 = vpop.f32.mrf.mxu0
      %v1011 = vadd.f32 0.0, %v1010
      %v1012 = vpop.f32.mrf.mxu0
      %v1013 = vadd.f32 0.0, %v1012
      %1014 = vdwg.mxu0
      %v1015 = vadd.f32 %v920, %v1011
      %v1016 = vadd.f32 %v921, %v1013
      %v1018 = vperm.slane %v479, 0
      %v1020 = vadd.f32 %v1015, %v1018
      %v1021 = vadd.f32 %v1016, %v1018
      %v1022 = vadd.f32 %v456, %v1020
      %v1023 = vadd.f32 %v457, %v1021
      %v1024 = vld [vmem:[%s7] sm:$0x1]
      %v1025 = vld [vmem:[%s8] sm:$0x1]
      %v1026 = vsel %vm480, %v1022, 0.0
      %1027 = vadd.xlane.f32.xlu0 %v1026
      %v1028 = vpop.xlane.xlu0 %1027
      %v1029 = vsel %vm484, %v1023, 0.0
      %1030 = vadd.xlane.f32.xlu0 %v1029
      %v1031 = vpop.xlane.xlu0 %1030
      %v1032 = vmul.f32 %v1028, %v494
      %v1033 = vmul.f32 %v1031, %v494
      %v1034 = vsub.f32 %v1022, %v1032
      %v1035 = vsub.f32 %v1023, %v1033
      %v1036 = vmul.f32 %v1034, %v1034
      %v1037 = vmul.f32 %v1035, %v1035
      %v1038 = vsel %vm480, %v1036, 0.0
      %1039 = vadd.xlane.f32.xlu0 %v1038
      %v1040 = vpop.xlane.xlu0 %1039
      %v1041 = vsel %vm484, %v1037, 0.0
      %1042 = vadd.xlane.f32.xlu0 %v1041
      %v1043 = vpop.xlane.xlu0 %1042
      %v1044 = vmul.f32 %v1040, %v494
      %v1045 = vmul.f32 %v1043, %v494
      %v1046 = vadd.f32 %v1044, 1e-05
      %v1047 = vadd.f32 %v1045, 1e-05
      %v1048 = vrsqrt.pop %v1046
      %v1049 = vmul.f32 %v1048, %v1046
      %v1050 = vmul.f32 %v1049, %v1048
      %v1051 = vmul.f32 0.5, %v1050
      %v1052 = vsub.f32 1.5, %v1051
      %v1053 = vmul.f32 %v1048, %v1052
      %vm1054 = vweird.f32 %v1046
      %vm1055 = vweird.f32 %v1048
      %vm1056 = vmor %vm1054, %vm1055
      %v1057 = vsel %vm1056, %v1048, %v1053
      %v1058 = vrsqrt.pop %v1047
      %v1059 = vmul.f32 %v1058, %v1047
      %v1060 = vmul.f32 %v1059, %v1058
      %v1061 = vmul.f32 0.5, %v1060
      %v1062 = vsub.f32 1.5, %v1061
      %v1063 = vmul.f32 %v1058, %v1062
      %vm1064 = vweird.f32 %v1047
      %vm1065 = vweird.f32 %v1058
      %vm1066 = vmor %vm1064, %vm1065
      %v1067 = vsel %vm1066, %v1058, %v1063
      %v1068 = vmul.f32 %v1034, %v1057
      %v1069 = vmul.f32 %v1035, %v1067
      %v1071 = vperm.slane %v1024, 0
      %v1073 = vmul.f32 %v1068, %v1071
      %v1074 = vmul.f32 %v1069, %v1071
      %v1076 = vperm.slane %v1025, 0
      %v1078 = vadd.f32 %v1073, %v1076
      %v1079 = vadd.f32 %v1074, %v1076
      %v1080 = vpack.c.bf16 %v1079, %v1078
      %v1081 = vld [vmem:[%s9] sm:$0xff]
      %v1082 = vld [vmem:[%s9 + $0x8] sm:$0xff]
      %v1083 = vld [vmem:[%s9 + $0x10] sm:$0xff]
      %v1084 = vld [vmem:[%s9 + $0x18] sm:$0xff]
      %v1085 = vld [vmem:[%s9 + $0x20] sm:$0xff]
      %v1086 = vld [vmem:[%s9 + $0x28] sm:$0xff]
      %v1087 = vld [vmem:[%s9 + $0x30] sm:$0xff]
      %v1088 = vld [vmem:[%s9 + $0x38] sm:$0xff]
      %v1089 = vld [vmem:[%s10] sm:$0x3]
      %v1091 = vperm.slane %v1089, 0
      %v1092 = vperm.slane %v1089, 1
      %v1103 = vunpack.c.l.b16 %v1081
      %v1104 = vunpack.c.h.b16 %v1081
      %v1105 = vunpack.c.l.b16 %v1082
      %v1106 = vunpack.c.h.b16 %v1082
      %v1107 = vunpack.c.l.b16 %v1083
      %v1108 = vunpack.c.h.b16 %v1083
      %v1109 = vunpack.c.l.b16 %v1084
      %v1110 = vunpack.c.h.b16 %v1084
      %v1111 = vunpack.c.l.b16 %v1085
      %v1112 = vunpack.c.h.b16 %v1085
      %v1113 = vunpack.c.l.b16 %v1086
      %v1114 = vunpack.c.h.b16 %v1086
      %v1115 = vunpack.c.l.b16 %v1087
      %v1116 = vunpack.c.h.b16 %v1087
      %v1117 = vunpack.c.l.b16 %v1088
      %v1118 = vunpack.c.h.b16 %v1088
      %v1119 = vpack.c.b16 %v1105, %v1103
      %v1120 = vpack.c.b16 %v1106, %v1104
      %v1121 = vpack.c.b16 %v1109, %v1107
      %v1122 = vpack.c.b16 %v1110, %v1108
      %v1123 = vpack.c.b16 %v1113, %v1111
      %v1124 = vpack.c.b16 %v1114, %v1112
      %v1125 = vpack.c.b16 %v1117, %v1115
      %v1126 = vpack.c.b16 %v1118, %v1116
      %v1136 = vsel %vm480, %v1080, 0
      %1138 = vmatpush.bf16.msra.mxu0 0
      %1139 = vmatpush.bf16.msra.mxu0 0
      %1140 = vmatpush.bf16.msra.mxu0 0
      %1141 = vmatpush.bf16.msra.mxu0 0
      %1142 = vmatpush.bf16.msra.mxu0 %v1125
      %1143 = vmatpush.bf16.msra.mxu0 %v1123
      %1144 = vmatpush.bf16.msra.mxu0 %v1121
      %1145 = vmatpush.bf16.msra.mxu0 %v1119
      %1146 = vmatmul.bf16.gmra.mxu0 %v1136
      %v1147 = vpop.f32.mrf.mxu0
      %v1148 = vadd.f32 %v1091, %v1147
      %v1149 = vpop.f32.mrf.mxu0
      %v1150 = vadd.f32 %v1091, %v1149
      %1151 = vdwg.mxu0
      %1152 = vmatpush.bf16.msra.mxu0 0
      %1153 = vmatpush.bf16.msra.mxu0 0
      %1154 = vmatpush.bf16.msra.mxu0 0
      %1155 = vmatpush.bf16.msra.mxu0 0
      %1156 = vmatpush.bf16.msra.mxu0 %v1126
      %1157 = vmatpush.bf16.msra.mxu0 %v1124
      %1158 = vmatpush.bf16.msra.mxu0 %v1122
      %1159 = vmatpush.bf16.msra.mxu0 %v1120
      %1160 = vmatmul.bf16.gmra.mxu0 %v1136
      %v1161 = vpop.f32.mrf.mxu0
      %v1162 = vadd.f32 %v1092, %v1161
      %v1163 = vpop.f32.mrf.mxu0
      %v1164 = vadd.f32 %v1092, %v1163
      %1165 = vdwg.mxu0
      %v1166 = vmul.f32 %v1148, %v1148
      %v1167 = vmul.f32 %v1162, %v1162
      %v1168 = vmul.f32 %v1150, %v1150
      %v1169 = vmul.f32 %v1164, %v1164
      %v1170 = vmul.f32 %v1148, %v1166
      %v1171 = vmul.f32 %v1162, %v1167
      %v1172 = vmul.f32 %v1150, %v1168
      %v1173 = vmul.f32 %v1164, %v1169
      %v1174 = vmul.f32 %v1170, 0.044715
      %v1175 = vmul.f32 %v1171, 0.044715
      %v1176 = vmul.f32 %v1172, 0.044715
      %v1177 = vmul.f32 %v1173, 0.044715
      %v1178 = vadd.f32 %v1148, %v1174
      %v1179 = vadd.f32 %v1162, %v1175
      %v1180 = vadd.f32 %v1150, %v1176
      %v1181 = vadd.f32 %v1164, %v1177
      %v1182 = vmul.f32 %v1178, 0.7978846
      %v1183 = vmul.f32 %v1179, 0.7978846
      %v1184 = vmul.f32 %v1180, 0.7978846
      %v1185 = vmul.f32 %v1181, 0.7978846
      %v1186 = vtanh.pop %v1182
      %v1187 = vtanh.pop %v1183
      %v1188 = vtanh.pop %v1184
      %v1189 = vtanh.pop %v1185
      %v1190 = vadd.f32 %v1186, 1.0
      %v1191 = vadd.f32 %v1187, 1.0
      %v1192 = vadd.f32 %v1188, 1.0
      %v1193 = vadd.f32 %v1189, 1.0
      %v1194 = vmul.f32 %v1190, 0.5
      %v1195 = vmul.f32 %v1191, 0.5
      %v1196 = vmul.f32 %v1192, 0.5
      %v1197 = vmul.f32 %v1193, 0.5
      %v1198 = vmul.f32 %v1148, %v1194
      %v1199 = vmul.f32 %v1162, %v1195
      %v1200 = vmul.f32 %v1150, %v1196
      %v1201 = vmul.f32 %v1164, %v1197
      %v1202 = vpack.c.bf16 %v1200, %v1198
      %v1203 = vpack.c.bf16 %v1201, %v1199
      %v1204 = vld [vmem:[%s11] sm:$0xf]
      %v1205 = vld [vmem:[%s11 + $0x4] sm:$0xf]
      %v1206 = vld [vmem:[%s11 + $0x8] sm:$0xf]
      %v1207 = vld [vmem:[%s11 + $0xc] sm:$0xf]
      %v1208 = vld [vmem:[%s11 + $0x10] sm:$0xf]
      %v1209 = vld [vmem:[%s11 + $0x14] sm:$0xf]
      %v1210 = vld [vmem:[%s11 + $0x18] sm:$0xf]
      %v1211 = vld [vmem:[%s11 + $0x1c] sm:$0xf]
      %v1212 = vld [vmem:[%s11 + $0x20] sm:$0xf]
      %v1213 = vld [vmem:[%s11 + $0x24] sm:$0xf]
      %v1214 = vld [vmem:[%s11 + $0x28] sm:$0xf]
      %v1215 = vld [vmem:[%s11 + $0x2c] sm:$0xf]
      %v1216 = vld [vmem:[%s11 + $0x30] sm:$0xf]
      %v1217 = vld [vmem:[%s11 + $0x34] sm:$0xf]
      %v1218 = vld [vmem:[%s11 + $0x38] sm:$0xf]
      %v1219 = vld [vmem:[%s11 + $0x3c] sm:$0xf]
      %v1220 = vld [vmem:[%s11 + $0x40] sm:$0xf]
      %v1221 = vld [vmem:[%s11 + $0x44] sm:$0xf]
      %v1222 = vld [vmem:[%s11 + $0x48] sm:$0xf]
      %v1223 = vld [vmem:[%s11 + $0x4c] sm:$0xf]
      %v1224 = vld [vmem:[%s11 + $0x50] sm:$0xf]
      %v1225 = vld [vmem:[%s11 + $0x54] sm:$0xf]
      %v1226 = vld [vmem:[%s11 + $0x58] sm:$0xf]
      %v1227 = vld [vmem:[%s11 + $0x5c] sm:$0xf]
      %v1228 = vld [vmem:[%s11 + $0x60] sm:$0xf]
      %v1229 = vld [vmem:[%s11 + $0x64] sm:$0xf]
      %v1230 = vld [vmem:[%s11 + $0x68] sm:$0xf]
      %v1231 = vld [vmem:[%s11 + $0x6c] sm:$0xf]
      %v1232 = vld [vmem:[%s11 + $0x70] sm:$0xf]
      %v1233 = vld [vmem:[%s11 + $0x74] sm:$0xf]
      %v1234 = vld [vmem:[%s11 + $0x78] sm:$0xf]
      %v1235 = vld [vmem:[%s11 + $0x7c] sm:$0xf]
      %v1236 = vld [vmem:[%s12] sm:$0x1]
      %v1238 = vperm.slane %v1236, 0
      %v1272 = vunpack.c.l.b16 %v1204
      %v1273 = vunpack.c.l.b16 %v1205
      %v1274 = vunpack.c.l.b16 %v1206
      %v1275 = vunpack.c.l.b16 %v1207
      %v1276 = vunpack.c.l.b16 %v1208
      %v1277 = vunpack.c.l.b16 %v1209
      %v1278 = vunpack.c.l.b16 %v1210
      %v1279 = vunpack.c.l.b16 %v1211
      %v1280 = vunpack.c.l.b16 %v1212
      %v1281 = vunpack.c.l.b16 %v1213
      %v1282 = vunpack.c.l.b16 %v1214
      %v1283 = vunpack.c.l.b16 %v1215
      %v1284 = vunpack.c.l.b16 %v1216
      %v1285 = vunpack.c.l.b16 %v1217
      %v1286 = vunpack.c.l.b16 %v1218
      %v1287 = vunpack.c.l.b16 %v1219
      %v1288 = vunpack.c.l.b16 %v1220
      %v1289 = vunpack.c.l.b16 %v1221
      %v1290 = vunpack.c.l.b16 %v1222
      %v1291 = vunpack.c.l.b16 %v1223
      %v1292 = vunpack.c.l.b16 %v1224
      %v1293 = vunpack.c.l.b16 %v1225
      %v1294 = vunpack.c.l.b16 %v1226
      %v1295 = vunpack.c.l.b16 %v1227
      %v1296 = vunpack.c.l.b16 %v1228
      %v1297 = vunpack.c.l.b16 %v1229
      %v1298 = vunpack.c.l.b16 %v1230
      %v1299 = vunpack.c.l.b16 %v1231
      %v1300 = vunpack.c.l.b16 %v1232
      %v1301 = vunpack.c.l.b16 %v1233
      %v1302 = vunpack.c.l.b16 %v1234
      %v1303 = vunpack.c.l.b16 %v1235
      %v1304 = vpack.c.b16 %v1273, %v1272
      %v1305 = vpack.c.b16 %v1275, %v1274
      %v1306 = vpack.c.b16 %v1277, %v1276
      %v1307 = vpack.c.b16 %v1279, %v1278
      %v1308 = vpack.c.b16 %v1281, %v1280
      %v1309 = vpack.c.b16 %v1283, %v1282
      %v1310 = vpack.c.b16 %v1285, %v1284
      %v1311 = vpack.c.b16 %v1287, %v1286
      %v1312 = vpack.c.b16 %v1289, %v1288
      %v1313 = vpack.c.b16 %v1291, %v1290
      %v1314 = vpack.c.b16 %v1293, %v1292
      %v1315 = vpack.c.b16 %v1295, %v1294
      %v1316 = vpack.c.b16 %v1297, %v1296
      %v1317 = vpack.c.b16 %v1299, %v1298
      %v1318 = vpack.c.b16 %v1301, %v1300
      %v1319 = vpack.c.b16 %v1303, %v1302
      %1336 = vmatpush.bf16.msra.mxu0 %v1311
      %1337 = vmatpush.bf16.msra.mxu0 %v1310
      %1338 = vmatpush.bf16.msra.mxu0 %v1309
      %1339 = vmatpush.bf16.msra.mxu0 %v1308
      %1340 = vmatpush.bf16.msra.mxu0 %v1307
      %1341 = vmatpush.bf16.msra.mxu0 %v1306
      %1342 = vmatpush.bf16.msra.mxu0 %v1305
      %1343 = vmatpush.bf16.msra.mxu0 %v1304
      %1344 = vmatmul.bf16.gmra.mxu0 %v1202
      %v1345 = vpop.f32.mrf.mxu0
      %v1346 = vadd.f32 %v1238, %v1345
      %v1347 = vpop.f32.mrf.mxu0
      %v1348 = vadd.f32 %v1238, %v1347
      %1349 = vdwg.mxu0
      %1350 = vmatpush.bf16.msra.mxu0 %v1319
      %1351 = vmatpush.bf16.msra.mxu0 %v1318
      %1352 = vmatpush.bf16.msra.mxu0 %v1317
      %1353 = vmatpush.bf16.msra.mxu0 %v1316
      %1354 = vmatpush.bf16.msra.mxu0 %v1315
      %1355 = vmatpush.bf16.msra.mxu0 %v1314
      %1356 = vmatpush.bf16.msra.mxu0 %v1313
      %1357 = vmatpush.bf16.msra.mxu0 %v1312
      %1358 = vmatmul.bf16.gmra.mxu0 %v1203
      %v1359 = vpop.f32.mrf.mxu0
      %v1360 = vadd.f32 %v1346, %v1359
      %v1361 = vpop.f32.mrf.mxu0
      %v1362 = vadd.f32 %v1348, %v1361
      %1363 = vdwg.mxu0
      %v1364 = vadd.f32 %v1022, %v1360
      %v1365 = vadd.f32 %v1023, %v1362
      %1366 = vst.msk [vmem:[%s454] sm:$0xff] %vm480, %v1364
      %1367 = vst.msk [vmem:[%s454 + $0x8] sm:$0x3] %vm484, %v1365
      %p1368 = scmp.lt.s32.totalorder %s24, 1
      %s1369 = scalar_select %p1368, %s24, 1
      %s1370 = smul.addr %s1369, 2
      %s1371 = smul.addr %s1370, 8
      %s1372 = scalar_lea.vmem %s13, %s1371
      // Predicated region
      $region73: #{voice_cond_clip_forward.9} parent=71 // pred_check
        %p1373 = pneg %p325
      $region74: #{voice_cond_clip_forward.9} parent=71 // pred_check_branch
        %1375 = sbr.rel (%p1373) target = $region76
      $region75: #{voice_cond_clip_forward.9} parent=71 // pred_region
        _
      $region76: #{voice_cond_clip_forward.9} parent=71 // pred_fallthru
        _
    $region72: #{voice_cond_clip_forward.9} parent=5 // pred_fallthru
      _
    %p1376 = scmp.le.s32.totalorder 2, %s19
    // Predicated region
    $region77: #{voice_cond_clip_forward.9} parent=5 // pred_check
      %p1377 = pneg %p1376
    $region78: #{voice_cond_clip_forward.9} parent=5 // pred_check_branch
      %1379 = sbr.rel (%p1377) target = $region80
    $region79: #{voice_cond_clip_forward.9} parent=5 // pred_region
      %s1380 = ssub.s32 %s19, 2
      // Predicated region
      $region81: #{voice_cond_clip_forward.9} parent=79 // pred_check
        %p1381 = pneg %p331
      $region82: #{voice_cond_clip_forward.9} parent=79 // pred_check_branch
        %1383 = sbr.rel (%p1381) target = $region84
      $region83: #{voice_cond_clip_forward.9} parent=79 // pred_region
        %p1384 = scmp.lt.s32.totalorder %s25, 1
        %s1385 = scalar_select %p1384, %s25, 1
        %s1386 = smul.addr %s1385, 2
        %s1387 = smul.addr %s1386, 8
        %s1388 = scalar_lea.vmem %s13, %s1387
      $region84: #{voice_cond_clip_forward.9} parent=79 // pred_fallthru
        _
    $region80: #{voice_cond_clip_forward.9} parent=5 // pred_fallthru
      _
  $region6: #{voice_cond_clip_forward.9} parent=0 // loop_footer
    %s23 = sadd.s32 1, %s19
  $region7: #{voice_cond_clip_forward.9} parent=0 // loop_footer_branch
    %18 = sbr.rel target = $region3
  $region8: #{voice_cond_clip_forward.9} parent=0 // loop_exit
    _

</llo_original>
